<compile_context>
chip_gen: v5e
topology: v5e:2x2
jax: 0.10.0
libtpu: 0.0.40
codegen_flags: <defaults>
</compile_context>

<pallas_src>
import math

import jax
import jax.numpy as jnp
from jax.experimental import pallas as pl
from jax.experimental.pallas import tpu as pltpu

# ----------------------- scaled-down config ---------------------------------
IMG = 32            # image side
PATCH = 16          # patch size
IN_CH = 3
HIDDEN = 64         # backbone width
HEADS = 4
HEAD_DIM = HIDDEN // HEADS
LAYERS = 2
MLP_DIM = 128
CLS_HIDDEN = 128    # classifier hidden width (stands in for 512)
NUM_CLASSES = 2
PAD_OUT = 128       # logits padded to a full 128-lane register
EPS_ENC = 1e-6      # encoder LayerNorm eps
EPS_HEAD = 1e-5     # nn.LayerNorm default eps (classifier head)

N_PATCH = (IMG // PATCH) ** 2
SEQ = N_PATCH + 1                      # +1 class token
PATCH_DIM = IN_CH * PATCH * PATCH      # 768

PARAM_ORDER = (
    "conv_w", "embed_bias",
    "ln1_g", "ln1_b", "w_q", "b_q", "w_k", "b_k", "w_v", "b_v",
    "w_out", "b_out", "ln2_g", "ln2_b",
    "w_mlp1", "b_mlp1", "w_mlp2", "b_mlp2",
    "ln_f_g", "ln_f_b",
    "head_ln1_g", "head_ln1_b", "head_w1", "head_b1",
    "head_ln2_g", "head_ln2_b", "head_w2", "head_b2",
)


# --------------------------- in-kernel helpers -------------------------------
def _layernorm(x, g, b, eps):
    x = x.astype(jnp.float32)
    mean = jnp.mean(x, axis=-1, keepdims=True)
    var = jnp.mean(jnp.square(x - mean), axis=-1, keepdims=True)
    return (x - mean) * jax.lax.rsqrt(var + eps) * g + b


def _gelu(x):
    # exact GELU (torch nn.GELU default, approximate='none')
    return 0.5 * x * (1.0 + jax.lax.erf(x * (1.0 / math.sqrt(2.0))))


# ------------------------------ fused kernel ---------------------------------
def fused_forward_kernel(x_ref,
                         conv_w, embed_bias,
                         ln1_g, ln1_b, w_q, b_q, w_k, b_k, w_v, b_v,
                         w_out, b_out, ln2_g, ln2_b,
                         w_mlp1, b_mlp1, w_mlp2, b_mlp2,
                         ln_f_g, ln_f_b,
                         h_ln1_g, h_ln1_b, h_w1, h_b1,
                         h_ln2_g, h_ln2_b, h_w2, h_b2,
                         o_ref):
    """One grid step == the full forward pass for ONE image."""
    f32 = jnp.float32
    bf16 = jnp.bfloat16

    # --- patch embedding: Conv2d(k=16, s=16) == matmul over flattened patches.
    # Row 0 of x_ref is all-zero (class-token slot); embed_bias already holds
    # cls_token + pos_emb on row 0 and conv_bias + pos_emb on the patch rows.
    xp = x_ref[0].astype(bf16)                                    # (SEQ, PATCH_DIM)
    xf = jnp.dot(xp, conv_w[...], preferred_element_type=f32) + embed_bias[...]

    scale = 1.0 / math.sqrt(HEAD_DIM)
    lane = jax.lax.broadcasted_iota(jnp.int32, (SEQ, HIDDEN), 1)  # head-lane ids

    for l in range(LAYERS):                                       # static unroll
        # ----------------- multi-head self-attention ------------------------
        y = _layernorm(xf, ln1_g[l], ln1_b[l], EPS_ENC)
        yb = y.astype(bf16)
        q = jnp.dot(yb, w_q[l], preferred_element_type=f32) + b_q[l]
        k = jnp.dot(yb, w_k[l], preferred_element_type=f32) + b_k[l]
        v = jnp.dot(yb, w_v[l], preferred_element_type=f32) + b_v[l]

        attn = jnp.zeros((SEQ, HIDDEN), f32)
        for hd in range(HEADS):                                    # static unroll
            m = (lane >= hd * HEAD_DIM) & (lane < (hd + 1) * HEAD_DIM)
            qh = jnp.where(m, q, 0.0).astype(bf16)
            kh = jnp.where(m, k, 0.0).astype(bf16)
            vh = jnp.where(m, v, 0.0).astype(bf16)
            # masked full-width contraction == q_h @ k_h^T (no lane slices,
            # no transposes, no (B*H, S, 16) relayouts)
            s = jnp.einsum("qd,kd->qk", qh, kh,
                           preferred_element_type=f32) * scale     # (SEQ, SEQ)
            s = s - jnp.max(s, axis=-1, keepdims=True)
            p = jnp.exp(s)
            p = p * pl.reciprocal(jnp.sum(p, axis=-1, keepdims=True), approx=True)
            # P @ V_masked is nonzero only in head hd's lanes -> sum == concat.
            attn = attn + jnp.dot(p.astype(bf16), vh, preferred_element_type=f32)

        proj = jnp.dot(attn.astype(bf16), w_out[l],
                       preferred_element_type=f32) + b_out[l]
        xf = xf + proj                                             # fused residual

        # ----------------------------- MLP -----------------------------------
        z = _layernorm(xf, ln2_g[l], ln2_b[l], EPS_ENC)
        h1 = jnp.dot(z.astype(bf16), w_mlp1[l],
                     preferred_element_type=f32) + b_mlp1[l]
        h1 = _gelu(h1)
        h2 = jnp.dot(h1.astype(bf16), w_mlp2[l],
                     preferred_element_type=f32) + b_mlp2[l]
        xf = xf + h2                                               # fused residual

    # --- final encoder LayerNorm, class token, classifier head ---------------
    xf = _layernorm(xf, ln_f_g[...], ln_f_b[...], EPS_ENC)
    cls = xf[0:1, :]                                               # (1, HIDDEN)

    hh = _layernorm(cls, h_ln1_g[...], h_ln1_b[...], EPS_HEAD)     # Dropout = id
    hh = jnp.dot(hh.astype(bf16), h_w1[...], preferred_element_type=f32) + h_b1[...]
    hh = _gelu(hh)
    hh = _layernorm(hh, h_ln2_g[...], h_ln2_b[...], EPS_HEAD)      # Dropout = id
    logits = jnp.dot(hh.astype(bf16), h_w2[...],
                     preferred_element_type=f32) + h_b2[...]        # (1, PAD_OUT)
    o_ref[0, :, :] = logits                                        # lane-dense store


# ------------------------------ wrapper ---------------------------------------
def _patchify(x):
    """NCHW image -> zero-prefixed flattened patches: (B, SEQ, PATCH_DIM)."""
    B = x.shape[0]
    nh = nw = IMG // PATCH
    xp = x.reshape(B, IN_CH, nh, PATCH, nw, PATCH)
    xp = xp.transpose(0, 2, 4, 1, 3, 5).reshape(B, nh * nw, PATCH_DIM)
    return jnp.pad(xp, ((0, 0), (1, 0), (0, 0)))   # row 0 = class-token slot


def model_forward(x, params):
    """x: (B, C, H, W) float32 NCHW (same as the PyTorch module)."""
    B = x.shape[0]
    xp = _patchify(x)
    flat = [params[name] for name in PARAM_ORDER]

    in_specs = [pl.BlockSpec((1, SEQ, PATCH_DIM), lambda b: (b, 0, 0))]
    for arr in flat:  # full-array blocks, constant index map -> VMEM resident
        in_specs.append(pl.BlockSpec(arr.shape, lambda b, _n=arr.ndim: (0,) * _n))

    out = pl.pallas_call(
        fused_forward_kernel,
        grid=(B,),
        in_specs=in_specs,
        out_specs=pl.BlockSpec((1, 1, PAD_OUT), lambda b: (b, 0, 0)),
        out_shape=jax.ShapeDtypeStruct((B, 1, PAD_OUT), jnp.float32),
        compiler_params=pltpu.CompilerParams(
            dimension_semantics=("parallel",)),     # 2nd TensorCore on v7x
    )(xp, *flat)
    return out[:, 0, :NUM_CLASSES]                  # (B, NUM_CLASSES)


# ----------------------------- parameters -------------------------------------
def init_params(key):
    f32, bf16 = jnp.float32, jnp.bfloat16

    def nrm(k, shape, scale=0.02):
        return (scale * jax.random.normal(k, shape)).astype(f32)

    keys = iter(jax.random.split(key, 32))

    # patch embedding Conv2d(IN_CH, HIDDEN, k=16, s=16) -> (in, out) matmul layout
    conv_w = nrm(next(keys), (HIDDEN, IN_CH, PATCH, PATCH))
    conv_w = conv_w.reshape(HIDDEN, PATCH_DIM).T               # (PATCH_DIM, HIDDEN)
    conv_b = jnp.zeros((HIDDEN,), f32)
    cls_tok = nrm(next(keys), (1, HIDDEN))
    pos_emb = nrm(next(keys), (SEQ, HIDDEN))
    # fold conv bias + class token + positional embedding into one additive term
    embed_bias = pos_emb + jnp.concatenate(
        [cls_tok, jnp.tile(conv_b[None, :], (N_PATCH, 1))], axis=0)

    head_w2 = jnp.zeros((CLS_HIDDEN, PAD_OUT), f32).at[:, :NUM_CLASSES].set(
        nrm(next(keys), (CLS_HIDDEN, NUM_CLASSES)))

    p = {
        "conv_w": conv_w.astype(bf16),
        "embed_bias": embed_bias.astype(f32),
        # encoder layers, stacked on a leading LAYERS axis; weights (in, out), bf16
        "ln1_g": jnp.ones((LAYERS, 1, HIDDEN), f32),
        "ln1_b": jnp.zeros((LAYERS, 1, HIDDEN), f32),
        "w_q": nrm(next(keys), (LAYERS, HIDDEN, HIDDEN)).astype(bf16),
        "b_q": jnp.zeros((LAYERS, 1, HIDDEN), f32),
        "w_k": nrm(next(keys), (LAYERS, HIDDEN, HIDDEN)).astype(bf16),
        "b_k": jnp.zeros((LAYERS, 1, HIDDEN), f32),
        "w_v": nrm(next(keys), (LAYERS, HIDDEN, HIDDEN)).astype(bf16),
        "b_v": jnp.zeros((LAYERS, 1, HIDDEN), f32),
        "w_out": nrm(next(keys), (LAYERS, HIDDEN, HIDDEN)).astype(bf16),
        "b_out": jnp.zeros((LAYERS, 1, HIDDEN), f32),
        "ln2_g": jnp.ones((LAYERS, 1, HIDDEN), f32),
        "ln2_b": jnp.zeros((LAYERS, 1, HIDDEN), f32),
        "w_mlp1": nrm(next(keys), (LAYERS, HIDDEN, MLP_DIM)).astype(bf16),
        "b_mlp1": jnp.zeros((LAYERS, 1, MLP_DIM), f32),
        "w_mlp2": nrm(next(keys), (LAYERS, MLP_DIM, HIDDEN)).astype(bf16),
        "b_mlp2": jnp.zeros((LAYERS, 1, HIDDEN), f32),
        "ln_f_g": jnp.ones((1, HIDDEN), f32),
        "ln_f_b": jnp.zeros((1, HIDDEN), f32),
        # classifier head: LN -> Dropout -> Linear -> GELU -> LN -> Dropout -> Linear
        "head_ln1_g": jnp.ones((1, HIDDEN), f32),
        "head_ln1_b": jnp.zeros((1, HIDDEN), f32),
        "head_w1": nrm(next(keys), (HIDDEN, CLS_HIDDEN)).astype(bf16),
        "head_b1": jnp.zeros((1, CLS_HIDDEN), f32),
        "head_ln2_g": jnp.ones((1, CLS_HIDDEN), f32),
        "head_ln2_b": jnp.zeros((1, CLS_HIDDEN), f32),
        "head_w2": head_w2.astype(bf16),            # zero-padded to 128 lanes
        "head_b2": jnp.zeros((1, PAD_OUT), f32),
    }
    return p


# -------------------------------- main ------------------------------------------
if __name__ == "__main__":
    key = jax.random.PRNGKey(0)
    k_params, k_x = jax.random.split(key)
    params = init_params(k_params)
    x = jax.random.normal(k_x, (2, IN_CH, IMG, IMG), dtype=jnp.float32)  # NCHW

    fwd = jax.jit(model_forward)
    out = jax.block_until_ready(fwd(x, params))
    assert out.shape == (2, NUM_CLASSES), out.shape
    assert bool(jnp.all(jnp.isfinite(out)))
    print("KERNEL_OK")
</pallas_src>

<mosaic_0001>
module attributes {stable_mosaic.version = 11 : i64} {
  func.func @fused_forward_kernel(%arg0: i32, %arg1: memref<1x5x768xf32, #tpu.memory_space<vmem>>, %arg2: memref<768x64xbf16, #tpu.memory_space<vmem>>, %arg3: memref<5x64xf32, #tpu.memory_space<vmem>>, %arg4: memref<2x1x64xf32, #tpu.memory_space<vmem>>, %arg5: memref<2x1x64xf32, #tpu.memory_space<vmem>>, %arg6: memref<2x64x64xbf16, #tpu.memory_space<vmem>>, %arg7: memref<2x1x64xf32, #tpu.memory_space<vmem>>, %arg8: memref<2x64x64xbf16, #tpu.memory_space<vmem>>, %arg9: memref<2x1x64xf32, #tpu.memory_space<vmem>>, %arg10: memref<2x64x64xbf16, #tpu.memory_space<vmem>>, %arg11: memref<2x1x64xf32, #tpu.memory_space<vmem>>, %arg12: memref<2x64x64xbf16, #tpu.memory_space<vmem>>, %arg13: memref<2x1x64xf32, #tpu.memory_space<vmem>>, %arg14: memref<2x1x64xf32, #tpu.memory_space<vmem>>, %arg15: memref<2x1x64xf32, #tpu.memory_space<vmem>>, %arg16: memref<2x64x128xbf16, #tpu.memory_space<vmem>>, %arg17: memref<2x1x128xf32, #tpu.memory_space<vmem>>, %arg18: memref<2x128x64xbf16, #tpu.memory_space<vmem>>, %arg19: memref<2x1x64xf32, #tpu.memory_space<vmem>>, %arg20: memref<1x64xf32, #tpu.memory_space<vmem>>, %arg21: memref<1x64xf32, #tpu.memory_space<vmem>>, %arg22: memref<1x64xf32, #tpu.memory_space<vmem>>, %arg23: memref<1x64xf32, #tpu.memory_space<vmem>>, %arg24: memref<64x128xbf16, #tpu.memory_space<vmem>>, %arg25: memref<1x128xf32, #tpu.memory_space<vmem>>, %arg26: memref<1x128xf32, #tpu.memory_space<vmem>>, %arg27: memref<1x128xf32, #tpu.memory_space<vmem>>, %arg28: memref<128x128xbf16, #tpu.memory_space<vmem>>, %arg29: memref<1x128xf32, #tpu.memory_space<vmem>>, %arg30: memref<1x1x128xf32, #tpu.memory_space<vmem>>) attributes {dimension_semantics = [#tpu.dimension_semantics<parallel>], iteration_bounds = array<i64: 2>, scalar_prefetch = 0 : i64, scratch_operands = 0 : i64, tpu.core_type = #tpu.core_type<tc>, window_params = [{transform_indices = @transform_0, window_bounds = array<i64: 1, 5, 768>}, {pipeline_mode = #tpu.pipeline_mode<synchronous>, transform_indices = @transform_1, window_bounds = array<i64: 768, 64>}, {pipeline_mode = #tpu.pipeline_mode<synchronous>, transform_indices = @transform_2, window_bounds = array<i64: 5, 64>}, {pipeline_mode = #tpu.pipeline_mode<synchronous>, transform_indices = @transform_3, window_bounds = array<i64: 2, 1, 64>}, {pipeline_mode = #tpu.pipeline_mode<synchronous>, transform_indices = @transform_4, window_bounds = array<i64: 2, 1, 64>}, {pipeline_mode = #tpu.pipeline_mode<synchronous>, transform_indices = @transform_5, window_bounds = array<i64: 2, 64, 64>}, {pipeline_mode = #tpu.pipeline_mode<synchronous>, transform_indices = @transform_6, window_bounds = array<i64: 2, 1, 64>}, {pipeline_mode = #tpu.pipeline_mode<synchronous>, transform_indices = @transform_7, window_bounds = array<i64: 2, 64, 64>}, {pipeline_mode = #tpu.pipeline_mode<synchronous>, transform_indices = @transform_8, window_bounds = array<i64: 2, 1, 64>}, {pipeline_mode = #tpu.pipeline_mode<synchronous>, transform_indices = @transform_9, window_bounds = array<i64: 2, 64, 64>}, {pipeline_mode = #tpu.pipeline_mode<synchronous>, transform_indices = @transform_10, window_bounds = array<i64: 2, 1, 64>}, {pipeline_mode = #tpu.pipeline_mode<synchronous>, transform_indices = @transform_11, window_bounds = array<i64: 2, 64, 64>}, {pipeline_mode = #tpu.pipeline_mode<synchronous>, transform_indices = @transform_12, window_bounds = array<i64: 2, 1, 64>}, {pipeline_mode = #tpu.pipeline_mode<synchronous>, transform_indices = @transform_13, window_bounds = array<i64: 2, 1, 64>}, {pipeline_mode = #tpu.pipeline_mode<synchronous>, transform_indices = @transform_14, window_bounds = array<i64: 2, 1, 64>}, {pipeline_mode = #tpu.pipeline_mode<synchronous>, transform_indices = @transform_15, window_bounds = array<i64: 2, 64, 128>}, {pipeline_mode = #tpu.pipeline_mode<synchronous>, transform_indices = @transform_16, window_bounds = array<i64: 2, 1, 128>}, {pipeline_mode = #tpu.pipeline_mode<synchronous>, transform_indices = @transform_17, window_bounds = array<i64: 2, 128, 64>}, {pipeline_mode = #tpu.pipeline_mode<synchronous>, transform_indices = @transform_18, window_bounds = array<i64: 2, 1, 64>}, {pipeline_mode = #tpu.pipeline_mode<synchronous>, transform_indices = @transform_19, window_bounds = array<i64: 1, 64>}, {pipeline_mode = #tpu.pipeline_mode<synchronous>, transform_indices = @transform_20, window_bounds = array<i64: 1, 64>}, {pipeline_mode = #tpu.pipeline_mode<synchronous>, transform_indices = @transform_21, window_bounds = array<i64: 1, 64>}, {pipeline_mode = #tpu.pipeline_mode<synchronous>, transform_indices = @transform_22, window_bounds = array<i64: 1, 64>}, {pipeline_mode = #tpu.pipeline_mode<synchronous>, transform_indices = @transform_23, window_bounds = array<i64: 64, 128>}, {pipeline_mode = #tpu.pipeline_mode<synchronous>, transform_indices = @transform_24, window_bounds = array<i64: 1, 128>}, {pipeline_mode = #tpu.pipeline_mode<synchronous>, transform_indices = @transform_25, window_bounds = array<i64: 1, 128>}, {pipeline_mode = #tpu.pipeline_mode<synchronous>, transform_indices = @transform_26, window_bounds = array<i64: 1, 128>}, {pipeline_mode = #tpu.pipeline_mode<synchronous>, transform_indices = @transform_27, window_bounds = array<i64: 128, 128>}, {pipeline_mode = #tpu.pipeline_mode<synchronous>, transform_indices = @transform_28, window_bounds = array<i64: 1, 128>}, {transform_indices = @transform_29, window_bounds = array<i64: 1, 1, 128>}]} {
    %c0 = arith.constant 0 : index
    %c0_0 = arith.constant 0 : index
    %c0_1 = arith.constant 0 : index
    %0 = vector.load %arg1[%c0, %c0_0, %c0_1] : memref<1x5x768xf32, #tpu.memory_space<vmem>>, vector<1x5x768xf32>
    %1 = vector.shape_cast %0 : vector<1x5x768xf32> to vector<5x768xf32>
    %2 = arith.truncf %1 : vector<5x768xf32> to vector<5x768xbf16>
    %c0_2 = arith.constant 0 : index
    %c0_3 = arith.constant 0 : index
    %3 = vector.load %arg2[%c0_2, %c0_3] : memref<768x64xbf16, #tpu.memory_space<vmem>>, vector<768x64xbf16>
    %cst = arith.constant dense<0.000000e+00> : vector<5x64xf32>
    %4 = tpu.matmul %2, %3, %cst {dimension_numbers = #tpu.dot_dimension_numbers<[1], [0], [0], [1], [0, 0, 1, 1], [], []>} : vector<5x768xbf16>, vector<768x64xbf16>, vector<5x64xf32> -> vector<5x64xf32>
    %c0_4 = arith.constant 0 : index
    %c0_5 = arith.constant 0 : index
    %5 = vector.load %arg3[%c0_4, %c0_5] : memref<5x64xf32, #tpu.memory_space<vmem>>, vector<5x64xf32>
    %6 = arith.addf %4, %5 : vector<5x64xf32>
    %7 = tpu.iota {dimensions = array<i32: 1>} : vector<5x64xi32>
    %c0_6 = arith.constant 0 : index
    %c0_7 = arith.constant 0 : index
    %c0_8 = arith.constant 0 : index
    %8 = vector.load %arg4[%c0_6, %c0_7, %c0_8] : memref<2x1x64xf32, #tpu.memory_space<vmem>>, vector<1x1x64xf32>
    %9 = vector.shape_cast %8 : vector<1x1x64xf32> to vector<1x64xf32>
    %c0_9 = arith.constant 0 : index
    %c0_10 = arith.constant 0 : index
    %c0_11 = arith.constant 0 : index
    %10 = vector.load %arg5[%c0_9, %c0_10, %c0_11] : memref<2x1x64xf32, #tpu.memory_space<vmem>>, vector<1x1x64xf32>
    %11 = vector.shape_cast %10 : vector<1x1x64xf32> to vector<1x64xf32>
    %cst_12 = arith.constant dense<0.000000e+00> : vector<5xf32>
    %12 = vector.multi_reduction <add>, %6, %cst_12 [1] : vector<5x64xf32> to vector<5xf32>
    %13 = vector.shape_cast %12 : vector<5xf32> to vector<5x1xf32>
    %cst_13 = arith.constant 6.400000e+01 : f32
    %14 = vector.broadcast %cst_13 : f32 to vector<5x1xf32>
    %15 = arith.divf %13, %14 : vector<5x1xf32>
    %16 = vector.broadcast %15 : vector<5x1xf32> to vector<5x64xf32>
    %17 = arith.subf %6, %16 : vector<5x64xf32>
    %18 = arith.mulf %17, %17 : vector<5x64xf32>
    %cst_14 = arith.constant dense<0.000000e+00> : vector<5xf32>
    %19 = vector.multi_reduction <add>, %18, %cst_14 [1] : vector<5x64xf32> to vector<5xf32>
    %20 = vector.shape_cast %19 : vector<5xf32> to vector<5x1xf32>
    %cst_15 = arith.constant 6.400000e+01 : f32
    %21 = vector.broadcast %cst_15 : f32 to vector<5x1xf32>
    %22 = arith.divf %20, %21 : vector<5x1xf32>
    %23 = vector.broadcast %15 : vector<5x1xf32> to vector<5x64xf32>
    %24 = arith.subf %6, %23 : vector<5x64xf32>
    %cst_16 = arith.constant 9.99999997E-7 : f32
    %25 = vector.broadcast %cst_16 : f32 to vector<5x1xf32>
    %26 = arith.addf %22, %25 : vector<5x1xf32>
    %27 = math.rsqrt %26 : vector<5x1xf32>
    %28 = vector.broadcast %27 : vector<5x1xf32> to vector<5x64xf32>
    %29 = arith.mulf %24, %28 : vector<5x64xf32>
    %30 = vector.broadcast %9 : vector<1x64xf32> to vector<5x64xf32>
    %31 = arith.mulf %29, %30 : vector<5x64xf32>
    %32 = vector.broadcast %11 : vector<1x64xf32> to vector<5x64xf32>
    %33 = arith.addf %31, %32 : vector<5x64xf32>
    %34 = arith.truncf %33 : vector<5x64xf32> to vector<5x64xbf16>
    %c0_17 = arith.constant 0 : index
    %c0_18 = arith.constant 0 : index
    %c0_19 = arith.constant 0 : index
    %35 = vector.load %arg6[%c0_17, %c0_18, %c0_19] : memref<2x64x64xbf16, #tpu.memory_space<vmem>>, vector<1x64x64xbf16>
    %36 = vector.shape_cast %35 : vector<1x64x64xbf16> to vector<64x64xbf16>
    %cst_20 = arith.constant dense<0.000000e+00> : vector<5x64xf32>
    %37 = tpu.matmul %34, %36, %cst_20 {dimension_numbers = #tpu.dot_dimension_numbers<[1], [0], [0], [1], [0, 0, 1, 1], [], []>} : vector<5x64xbf16>, vector<64x64xbf16>, vector<5x64xf32> -> vector<5x64xf32>
    %c0_21 = arith.constant 0 : index
    %c0_22 = arith.constant 0 : index
    %c0_23 = arith.constant 0 : index
    %38 = vector.load %arg7[%c0_21, %c0_22, %c0_23] : memref<2x1x64xf32, #tpu.memory_space<vmem>>, vector<1x1x64xf32>
    %39 = vector.shape_cast %38 : vector<1x1x64xf32> to vector<1x64xf32>
    %40 = vector.broadcast %39 : vector<1x64xf32> to vector<5x64xf32>
    %41 = arith.addf %37, %40 : vector<5x64xf32>
    %c0_24 = arith.constant 0 : index
    %c0_25 = arith.constant 0 : index
    %c0_26 = arith.constant 0 : index
    %42 = vector.load %arg8[%c0_24, %c0_25, %c0_26] : memref<2x64x64xbf16, #tpu.memory_space<vmem>>, vector<1x64x64xbf16>
    %43 = vector.shape_cast %42 : vector<1x64x64xbf16> to vector<64x64xbf16>
    %cst_27 = arith.constant dense<0.000000e+00> : vector<5x64xf32>
    %44 = tpu.matmul %34, %43, %cst_27 {dimension_numbers = #tpu.dot_dimension_numbers<[1], [0], [0], [1], [0, 0, 1, 1], [], []>} : vector<5x64xbf16>, vector<64x64xbf16>, vector<5x64xf32> -> vector<5x64xf32>
    %c0_28 = arith.constant 0 : index
    %c0_29 = arith.constant 0 : index
    %c0_30 = arith.constant 0 : index
    %45 = vector.load %arg9[%c0_28, %c0_29, %c0_30] : memref<2x1x64xf32, #tpu.memory_space<vmem>>, vector<1x1x64xf32>
    %46 = vector.shape_cast %45 : vector<1x1x64xf32> to vector<1x64xf32>
    %47 = vector.broadcast %46 : vector<1x64xf32> to vector<5x64xf32>
    %48 = arith.addf %44, %47 : vector<5x64xf32>
    %c0_31 = arith.constant 0 : index
    %c0_32 = arith.constant 0 : index
    %c0_33 = arith.constant 0 : index
    %49 = vector.load %arg10[%c0_31, %c0_32, %c0_33] : memref<2x64x64xbf16, #tpu.memory_space<vmem>>, vector<1x64x64xbf16>
    %50 = vector.shape_cast %49 : vector<1x64x64xbf16> to vector<64x64xbf16>
    %cst_34 = arith.constant dense<0.000000e+00> : vector<5x64xf32>
    %51 = tpu.matmul %34, %50, %cst_34 {dimension_numbers = #tpu.dot_dimension_numbers<[1], [0], [0], [1], [0, 0, 1, 1], [], []>} : vector<5x64xbf16>, vector<64x64xbf16>, vector<5x64xf32> -> vector<5x64xf32>
    %c0_35 = arith.constant 0 : index
    %c0_36 = arith.constant 0 : index
    %c0_37 = arith.constant 0 : index
    %52 = vector.load %arg11[%c0_35, %c0_36, %c0_37] : memref<2x1x64xf32, #tpu.memory_space<vmem>>, vector<1x1x64xf32>
    %53 = vector.shape_cast %52 : vector<1x1x64xf32> to vector<1x64xf32>
    %54 = vector.broadcast %53 : vector<1x64xf32> to vector<5x64xf32>
    %55 = arith.addf %51, %54 : vector<5x64xf32>
    %cst_38 = arith.constant 0.000000e+00 : f32
    %56 = vector.broadcast %cst_38 : f32 to vector<5x64xf32>
    %c0_i32 = arith.constant 0 : i32
    %57 = vector.broadcast %c0_i32 : i32 to vector<5x64xi32>
    %58 = arith.cmpi sge, %7, %57 : vector<5x64xi32>
    %c16_i32 = arith.constant 16 : i32
    %59 = vector.broadcast %c16_i32 : i32 to vector<5x64xi32>
    %60 = arith.cmpi slt, %7, %59 : vector<5x64xi32>
    %61 = arith.andi %58, %60 : vector<5x64xi1>
    %cst_39 = arith.constant 0.000000e+00 : f32
    %62 = vector.broadcast %cst_39 : f32 to vector<5x64xf32>
    %63 = arith.select %61, %41, %62 : vector<5x64xi1>, vector<5x64xf32>
    %64 = arith.truncf %63 : vector<5x64xf32> to vector<5x64xbf16>
    %cst_40 = arith.constant 0.000000e+00 : f32
    %65 = vector.broadcast %cst_40 : f32 to vector<5x64xf32>
    %66 = arith.select %61, %48, %65 : vector<5x64xi1>, vector<5x64xf32>
    %67 = arith.truncf %66 : vector<5x64xf32> to vector<5x64xbf16>
    %cst_41 = arith.constant 0.000000e+00 : f32
    %68 = vector.broadcast %cst_41 : f32 to vector<5x64xf32>
    %69 = arith.select %61, %55, %68 : vector<5x64xi1>, vector<5x64xf32>
    %70 = arith.truncf %69 : vector<5x64xf32> to vector<5x64xbf16>
    "tpu.trace_start"() <{level = 10 : i32, message = "qd,kd->qk"}> : () -> ()
    %cst_42 = arith.constant dense<0.000000e+00> : vector<5x5xf32>
    %71 = tpu.matmul %64, %67, %cst_42 {dimension_numbers = #tpu.dot_dimension_numbers<[1], [1], [0], [0], [0, 0, 1, 0], [], []>} : vector<5x64xbf16>, vector<5x64xbf16>, vector<5x5xf32> -> vector<5x5xf32>
    "tpu.trace_stop"() : () -> ()
    %cst_43 = arith.constant 2.500000e-01 : f32
    %72 = vector.broadcast %cst_43 : f32 to vector<5x5xf32>
    %73 = arith.mulf %71, %72 : vector<5x5xf32>
    %cst_44 = arith.constant dense<0xFF800000> : vector<5xf32>
    %74 = vector.multi_reduction <maximumf>, %73, %cst_44 [1] : vector<5x5xf32> to vector<5xf32>
    %75 = vector.shape_cast %74 : vector<5xf32> to vector<5x1xf32>
    %76 = vector.broadcast %75 : vector<5x1xf32> to vector<5x5xf32>
    %77 = arith.subf %73, %76 : vector<5x5xf32>
    %78 = math.exp %77 : vector<5x5xf32>
    %cst_45 = arith.constant dense<0.000000e+00> : vector<5xf32>
    %79 = vector.multi_reduction <add>, %78, %cst_45 [1] : vector<5x5xf32> to vector<5xf32>
    %80 = vector.shape_cast %79 : vector<5xf32> to vector<5x1xf32>
    %81 = tpu.reciprocal %80 {approx = true} : vector<5x1xf32> -> vector<5x1xf32>
    %82 = vector.broadcast %81 : vector<5x1xf32> to vector<5x5xf32>
    %83 = arith.mulf %78, %82 : vector<5x5xf32>
    %84 = arith.truncf %83 : vector<5x5xf32> to vector<5x5xbf16>
    %cst_46 = arith.constant dense<0.000000e+00> : vector<5x64xf32>
    %85 = tpu.matmul %84, %70, %cst_46 {dimension_numbers = #tpu.dot_dimension_numbers<[1], [0], [0], [1], [0, 0, 1, 1], [], []>} : vector<5x5xbf16>, vector<5x64xbf16>, vector<5x64xf32> -> vector<5x64xf32>
    %86 = arith.addf %56, %85 : vector<5x64xf32>
    %c16_i32_47 = arith.constant 16 : i32
    %87 = vector.broadcast %c16_i32_47 : i32 to vector<5x64xi32>
    %88 = arith.cmpi sge, %7, %87 : vector<5x64xi32>
    %c32_i32 = arith.constant 32 : i32
    %89 = vector.broadcast %c32_i32 : i32 to vector<5x64xi32>
    %90 = arith.cmpi slt, %7, %89 : vector<5x64xi32>
    %91 = arith.andi %88, %90 : vector<5x64xi1>
    %cst_48 = arith.constant 0.000000e+00 : f32
    %92 = vector.broadcast %cst_48 : f32 to vector<5x64xf32>
    %93 = arith.select %91, %41, %92 : vector<5x64xi1>, vector<5x64xf32>
    %94 = arith.truncf %93 : vector<5x64xf32> to vector<5x64xbf16>
    %cst_49 = arith.constant 0.000000e+00 : f32
    %95 = vector.broadcast %cst_49 : f32 to vector<5x64xf32>
    %96 = arith.select %91, %48, %95 : vector<5x64xi1>, vector<5x64xf32>
    %97 = arith.truncf %96 : vector<5x64xf32> to vector<5x64xbf16>
    %cst_50 = arith.constant 0.000000e+00 : f32
    %98 = vector.broadcast %cst_50 : f32 to vector<5x64xf32>
    %99 = arith.select %91, %55, %98 : vector<5x64xi1>, vector<5x64xf32>
    %100 = arith.truncf %99 : vector<5x64xf32> to vector<5x64xbf16>
    "tpu.trace_start"() <{level = 10 : i32, message = "qd,kd->qk"}> : () -> ()
    %cst_51 = arith.constant dense<0.000000e+00> : vector<5x5xf32>
    %101 = tpu.matmul %94, %97, %cst_51 {dimension_numbers = #tpu.dot_dimension_numbers<[1], [1], [0], [0], [0, 0, 1, 0], [], []>} : vector<5x64xbf16>, vector<5x64xbf16>, vector<5x5xf32> -> vector<5x5xf32>
    "tpu.trace_stop"() : () -> ()
    %cst_52 = arith.constant 2.500000e-01 : f32
    %102 = vector.broadcast %cst_52 : f32 to vector<5x5xf32>
    %103 = arith.mulf %101, %102 : vector<5x5xf32>
    %cst_53 = arith.constant dense<0xFF800000> : vector<5xf32>
    %104 = vector.multi_reduction <maximumf>, %103, %cst_53 [1] : vector<5x5xf32> to vector<5xf32>
    %105 = vector.shape_cast %104 : vector<5xf32> to vector<5x1xf32>
    %106 = vector.broadcast %105 : vector<5x1xf32> to vector<5x5xf32>
    %107 = arith.subf %103, %106 : vector<5x5xf32>
    %108 = math.exp %107 : vector<5x5xf32>
    %cst_54 = arith.constant dense<0.000000e+00> : vector<5xf32>
    %109 = vector.multi_reduction <add>, %108, %cst_54 [1] : vector<5x5xf32> to vector<5xf32>
    %110 = vector.shape_cast %109 : vector<5xf32> to vector<5x1xf32>
    %111 = tpu.reciprocal %110 {approx = true} : vector<5x1xf32> -> vector<5x1xf32>
    %112 = vector.broadcast %111 : vector<5x1xf32> to vector<5x5xf32>
    %113 = arith.mulf %108, %112 : vector<5x5xf32>
    %114 = arith.truncf %113 : vector<5x5xf32> to vector<5x5xbf16>
    %cst_55 = arith.constant dense<0.000000e+00> : vector<5x64xf32>
    %115 = tpu.matmul %114, %100, %cst_55 {dimension_numbers = #tpu.dot_dimension_numbers<[1], [0], [0], [1], [0, 0, 1, 1], [], []>} : vector<5x5xbf16>, vector<5x64xbf16>, vector<5x64xf32> -> vector<5x64xf32>
    %116 = arith.addf %86, %115 : vector<5x64xf32>
    %c32_i32_56 = arith.constant 32 : i32
    %117 = vector.broadcast %c32_i32_56 : i32 to vector<5x64xi32>
    %118 = arith.cmpi sge, %7, %117 : vector<5x64xi32>
    %c48_i32 = arith.constant 48 : i32
    %119 = vector.broadcast %c48_i32 : i32 to vector<5x64xi32>
    %120 = arith.cmpi slt, %7, %119 : vector<5x64xi32>
    %121 = arith.andi %118, %120 : vector<5x64xi1>
    %cst_57 = arith.constant 0.000000e+00 : f32
    %122 = vector.broadcast %cst_57 : f32 to vector<5x64xf32>
    %123 = arith.select %121, %41, %122 : vector<5x64xi1>, vector<5x64xf32>
    %124 = arith.truncf %123 : vector<5x64xf32> to vector<5x64xbf16>
    %cst_58 = arith.constant 0.000000e+00 : f32
    %125 = vector.broadcast %cst_58 : f32 to vector<5x64xf32>
    %126 = arith.select %121, %48, %125 : vector<5x64xi1>, vector<5x64xf32>
    %127 = arith.truncf %126 : vector<5x64xf32> to vector<5x64xbf16>
    %cst_59 = arith.constant 0.000000e+00 : f32
    %128 = vector.broadcast %cst_59 : f32 to vector<5x64xf32>
    %129 = arith.select %121, %55, %128 : vector<5x64xi1>, vector<5x64xf32>
    %130 = arith.truncf %129 : vector<5x64xf32> to vector<5x64xbf16>
    "tpu.trace_start"() <{level = 10 : i32, message = "qd,kd->qk"}> : () -> ()
    %cst_60 = arith.constant dense<0.000000e+00> : vector<5x5xf32>
    %131 = tpu.matmul %124, %127, %cst_60 {dimension_numbers = #tpu.dot_dimension_numbers<[1], [1], [0], [0], [0, 0, 1, 0], [], []>} : vector<5x64xbf16>, vector<5x64xbf16>, vector<5x5xf32> -> vector<5x5xf32>
    "tpu.trace_stop"() : () -> ()
    %cst_61 = arith.constant 2.500000e-01 : f32
    %132 = vector.broadcast %cst_61 : f32 to vector<5x5xf32>
    %133 = arith.mulf %131, %132 : vector<5x5xf32>
    %cst_62 = arith.constant dense<0xFF800000> : vector<5xf32>
    %134 = vector.multi_reduction <maximumf>, %133, %cst_62 [1] : vector<5x5xf32> to vector<5xf32>
    %135 = vector.shape_cast %134 : vector<5xf32> to vector<5x1xf32>
    %136 = vector.broadcast %135 : vector<5x1xf32> to vector<5x5xf32>
    %137 = arith.subf %133, %136 : vector<5x5xf32>
    %138 = math.exp %137 : vector<5x5xf32>
    %cst_63 = arith.constant dense<0.000000e+00> : vector<5xf32>
    %139 = vector.multi_reduction <add>, %138, %cst_63 [1] : vector<5x5xf32> to vector<5xf32>
    %140 = vector.shape_cast %139 : vector<5xf32> to vector<5x1xf32>
    %141 = tpu.reciprocal %140 {approx = true} : vector<5x1xf32> -> vector<5x1xf32>
    %142 = vector.broadcast %141 : vector<5x1xf32> to vector<5x5xf32>
    %143 = arith.mulf %138, %142 : vector<5x5xf32>
    %144 = arith.truncf %143 : vector<5x5xf32> to vector<5x5xbf16>
    %cst_64 = arith.constant dense<0.000000e+00> : vector<5x64xf32>
    %145 = tpu.matmul %144, %130, %cst_64 {dimension_numbers = #tpu.dot_dimension_numbers<[1], [0], [0], [1], [0, 0, 1, 1], [], []>} : vector<5x5xbf16>, vector<5x64xbf16>, vector<5x64xf32> -> vector<5x64xf32>
    %146 = arith.addf %116, %145 : vector<5x64xf32>
    %c48_i32_65 = arith.constant 48 : i32
    %147 = vector.broadcast %c48_i32_65 : i32 to vector<5x64xi32>
    %148 = arith.cmpi sge, %7, %147 : vector<5x64xi32>
    %c64_i32 = arith.constant 64 : i32
    %149 = vector.broadcast %c64_i32 : i32 to vector<5x64xi32>
    %150 = arith.cmpi slt, %7, %149 : vector<5x64xi32>
    %151 = arith.andi %148, %150 : vector<5x64xi1>
    %cst_66 = arith.constant 0.000000e+00 : f32
    %152 = vector.broadcast %cst_66 : f32 to vector<5x64xf32>
    %153 = arith.select %151, %41, %152 : vector<5x64xi1>, vector<5x64xf32>
    %154 = arith.truncf %153 : vector<5x64xf32> to vector<5x64xbf16>
    %cst_67 = arith.constant 0.000000e+00 : f32
    %155 = vector.broadcast %cst_67 : f32 to vector<5x64xf32>
    %156 = arith.select %151, %48, %155 : vector<5x64xi1>, vector<5x64xf32>
    %157 = arith.truncf %156 : vector<5x64xf32> to vector<5x64xbf16>
    %cst_68 = arith.constant 0.000000e+00 : f32
    %158 = vector.broadcast %cst_68 : f32 to vector<5x64xf32>
    %159 = arith.select %151, %55, %158 : vector<5x64xi1>, vector<5x64xf32>
    %160 = arith.truncf %159 : vector<5x64xf32> to vector<5x64xbf16>
    "tpu.trace_start"() <{level = 10 : i32, message = "qd,kd->qk"}> : () -> ()
    %cst_69 = arith.constant dense<0.000000e+00> : vector<5x5xf32>
    %161 = tpu.matmul %154, %157, %cst_69 {dimension_numbers = #tpu.dot_dimension_numbers<[1], [1], [0], [0], [0, 0, 1, 0], [], []>} : vector<5x64xbf16>, vector<5x64xbf16>, vector<5x5xf32> -> vector<5x5xf32>
    "tpu.trace_stop"() : () -> ()
    %cst_70 = arith.constant 2.500000e-01 : f32
    %162 = vector.broadcast %cst_70 : f32 to vector<5x5xf32>
    %163 = arith.mulf %161, %162 : vector<5x5xf32>
    %cst_71 = arith.constant dense<0xFF800000> : vector<5xf32>
    %164 = vector.multi_reduction <maximumf>, %163, %cst_71 [1] : vector<5x5xf32> to vector<5xf32>
    %165 = vector.shape_cast %164 : vector<5xf32> to vector<5x1xf32>
    %166 = vector.broadcast %165 : vector<5x1xf32> to vector<5x5xf32>
    %167 = arith.subf %163, %166 : vector<5x5xf32>
    %168 = math.exp %167 : vector<5x5xf32>
    %cst_72 = arith.constant dense<0.000000e+00> : vector<5xf32>
    %169 = vector.multi_reduction <add>, %168, %cst_72 [1] : vector<5x5xf32> to vector<5xf32>
    %170 = vector.shape_cast %169 : vector<5xf32> to vector<5x1xf32>
    %171 = tpu.reciprocal %170 {approx = true} : vector<5x1xf32> -> vector<5x1xf32>
    %172 = vector.broadcast %171 : vector<5x1xf32> to vector<5x5xf32>
    %173 = arith.mulf %168, %172 : vector<5x5xf32>
    %174 = arith.truncf %173 : vector<5x5xf32> to vector<5x5xbf16>
    %cst_73 = arith.constant dense<0.000000e+00> : vector<5x64xf32>
    %175 = tpu.matmul %174, %160, %cst_73 {dimension_numbers = #tpu.dot_dimension_numbers<[1], [0], [0], [1], [0, 0, 1, 1], [], []>} : vector<5x5xbf16>, vector<5x64xbf16>, vector<5x64xf32> -> vector<5x64xf32>
    %176 = arith.addf %146, %175 : vector<5x64xf32>
    %177 = arith.truncf %176 : vector<5x64xf32> to vector<5x64xbf16>
    %c0_74 = arith.constant 0 : index
    %c0_75 = arith.constant 0 : index
    %c0_76 = arith.constant 0 : index
    %178 = vector.load %arg12[%c0_74, %c0_75, %c0_76] : memref<2x64x64xbf16, #tpu.memory_space<vmem>>, vector<1x64x64xbf16>
    %179 = vector.shape_cast %178 : vector<1x64x64xbf16> to vector<64x64xbf16>
    %cst_77 = arith.constant dense<0.000000e+00> : vector<5x64xf32>
    %180 = tpu.matmul %177, %179, %cst_77 {dimension_numbers = #tpu.dot_dimension_numbers<[1], [0], [0], [1], [0, 0, 1, 1], [], []>} : vector<5x64xbf16>, vector<64x64xbf16>, vector<5x64xf32> -> vector<5x64xf32>
    %c0_78 = arith.constant 0 : index
    %c0_79 = arith.constant 0 : index
    %c0_80 = arith.constant 0 : index
    %181 = vector.load %arg13[%c0_78, %c0_79, %c0_80] : memref<2x1x64xf32, #tpu.memory_space<vmem>>, vector<1x1x64xf32>
    %182 = vector.shape_cast %181 : vector<1x1x64xf32> to vector<1x64xf32>
    %183 = vector.broadcast %182 : vector<1x64xf32> to vector<5x64xf32>
    %184 = arith.addf %180, %183 : vector<5x64xf32>
    %185 = arith.addf %6, %184 : vector<5x64xf32>
    %c0_81 = arith.constant 0 : index
    %c0_82 = arith.constant 0 : index
    %c0_83 = arith.constant 0 : index
    %186 = vector.load %arg14[%c0_81, %c0_82, %c0_83] : memref<2x1x64xf32, #tpu.memory_space<vmem>>, vector<1x1x64xf32>
    %187 = vector.shape_cast %186 : vector<1x1x64xf32> to vector<1x64xf32>
    %c0_84 = arith.constant 0 : index
    %c0_85 = arith.constant 0 : index
    %c0_86 = arith.constant 0 : index
    %188 = vector.load %arg15[%c0_84, %c0_85, %c0_86] : memref<2x1x64xf32, #tpu.memory_space<vmem>>, vector<1x1x64xf32>
    %189 = vector.shape_cast %188 : vector<1x1x64xf32> to vector<1x64xf32>
    %cst_87 = arith.constant dense<0.000000e+00> : vector<5xf32>
    %190 = vector.multi_reduction <add>, %185, %cst_87 [1] : vector<5x64xf32> to vector<5xf32>
    %191 = vector.shape_cast %190 : vector<5xf32> to vector<5x1xf32>
    %cst_88 = arith.constant 6.400000e+01 : f32
    %192 = vector.broadcast %cst_88 : f32 to vector<5x1xf32>
    %193 = arith.divf %191, %192 : vector<5x1xf32>
    %194 = vector.broadcast %193 : vector<5x1xf32> to vector<5x64xf32>
    %195 = arith.subf %185, %194 : vector<5x64xf32>
    %196 = arith.mulf %195, %195 : vector<5x64xf32>
    %cst_89 = arith.constant dense<0.000000e+00> : vector<5xf32>
    %197 = vector.multi_reduction <add>, %196, %cst_89 [1] : vector<5x64xf32> to vector<5xf32>
    %198 = vector.shape_cast %197 : vector<5xf32> to vector<5x1xf32>
    %cst_90 = arith.constant 6.400000e+01 : f32
    %199 = vector.broadcast %cst_90 : f32 to vector<5x1xf32>
    %200 = arith.divf %198, %199 : vector<5x1xf32>
    %201 = vector.broadcast %193 : vector<5x1xf32> to vector<5x64xf32>
    %202 = arith.subf %185, %201 : vector<5x64xf32>
    %cst_91 = arith.constant 9.99999997E-7 : f32
    %203 = vector.broadcast %cst_91 : f32 to vector<5x1xf32>
    %204 = arith.addf %200, %203 : vector<5x1xf32>
    %205 = math.rsqrt %204 : vector<5x1xf32>
    %206 = vector.broadcast %205 : vector<5x1xf32> to vector<5x64xf32>
    %207 = arith.mulf %202, %206 : vector<5x64xf32>
    %208 = vector.broadcast %187 : vector<1x64xf32> to vector<5x64xf32>
    %209 = arith.mulf %207, %208 : vector<5x64xf32>
    %210 = vector.broadcast %189 : vector<1x64xf32> to vector<5x64xf32>
    %211 = arith.addf %209, %210 : vector<5x64xf32>
    %212 = arith.truncf %211 : vector<5x64xf32> to vector<5x64xbf16>
    %c0_92 = arith.constant 0 : index
    %c0_93 = arith.constant 0 : index
    %c0_94 = arith.constant 0 : index
    %213 = vector.load %arg16[%c0_92, %c0_93, %c0_94] : memref<2x64x128xbf16, #tpu.memory_space<vmem>>, vector<1x64x128xbf16>
    %214 = vector.shape_cast %213 : vector<1x64x128xbf16> to vector<64x128xbf16>
    %cst_95 = arith.constant dense<0.000000e+00> : vector<5x128xf32>
    %215 = tpu.matmul %212, %214, %cst_95 {dimension_numbers = #tpu.dot_dimension_numbers<[1], [0], [0], [1], [0, 0, 1, 1], [], []>} : vector<5x64xbf16>, vector<64x128xbf16>, vector<5x128xf32> -> vector<5x128xf32>
    %c0_96 = arith.constant 0 : index
    %c0_97 = arith.constant 0 : index
    %c0_98 = arith.constant 0 : index
    %216 = vector.load %arg17[%c0_96, %c0_97, %c0_98] : memref<2x1x128xf32, #tpu.memory_space<vmem>>, vector<1x1x128xf32>
    %217 = vector.shape_cast %216 : vector<1x1x128xf32> to vector<1x128xf32>
    %218 = vector.broadcast %217 : vector<1x128xf32> to vector<5x128xf32>
    %219 = arith.addf %215, %218 : vector<5x128xf32>
    %cst_99 = arith.constant 5.000000e-01 : f32
    %220 = vector.broadcast %cst_99 : f32 to vector<5x128xf32>
    %221 = arith.mulf %220, %219 : vector<5x128xf32>
    %cst_100 = arith.constant 0.707106769 : f32
    %222 = vector.broadcast %cst_100 : f32 to vector<5x128xf32>
    %223 = arith.mulf %219, %222 : vector<5x128xf32>
    %224 = math.erf %223 : vector<5x128xf32>
    %cst_101 = arith.constant 1.000000e+00 : f32
    %225 = vector.broadcast %cst_101 : f32 to vector<5x128xf32>
    %226 = arith.addf %225, %224 : vector<5x128xf32>
    %227 = arith.mulf %221, %226 : vector<5x128xf32>
    %228 = arith.truncf %227 : vector<5x128xf32> to vector<5x128xbf16>
    %c0_102 = arith.constant 0 : index
    %c0_103 = arith.constant 0 : index
    %c0_104 = arith.constant 0 : index
    %229 = vector.load %arg18[%c0_102, %c0_103, %c0_104] : memref<2x128x64xbf16, #tpu.memory_space<vmem>>, vector<1x128x64xbf16>
    %230 = vector.shape_cast %229 : vector<1x128x64xbf16> to vector<128x64xbf16>
    %cst_105 = arith.constant dense<0.000000e+00> : vector<5x64xf32>
    %231 = tpu.matmul %228, %230, %cst_105 {dimension_numbers = #tpu.dot_dimension_numbers<[1], [0], [0], [1], [0, 0, 1, 1], [], []>} : vector<5x128xbf16>, vector<128x64xbf16>, vector<5x64xf32> -> vector<5x64xf32>
    %c0_106 = arith.constant 0 : index
    %c0_107 = arith.constant 0 : index
    %c0_108 = arith.constant 0 : index
    %232 = vector.load %arg19[%c0_106, %c0_107, %c0_108] : memref<2x1x64xf32, #tpu.memory_space<vmem>>, vector<1x1x64xf32>
    %233 = vector.shape_cast %232 : vector<1x1x64xf32> to vector<1x64xf32>
    %234 = vector.broadcast %233 : vector<1x64xf32> to vector<5x64xf32>
    %235 = arith.addf %231, %234 : vector<5x64xf32>
    %236 = arith.addf %185, %235 : vector<5x64xf32>
    %c1 = arith.constant 1 : index
    %c0_109 = arith.constant 0 : index
    %c0_110 = arith.constant 0 : index
    %237 = vector.load %arg4[%c1, %c0_109, %c0_110] : memref<2x1x64xf32, #tpu.memory_space<vmem>>, vector<1x1x64xf32>
    %238 = vector.shape_cast %237 : vector<1x1x64xf32> to vector<1x64xf32>
    %c1_111 = arith.constant 1 : index
    %c0_112 = arith.constant 0 : index
    %c0_113 = arith.constant 0 : index
    %239 = vector.load %arg5[%c1_111, %c0_112, %c0_113] : memref<2x1x64xf32, #tpu.memory_space<vmem>>, vector<1x1x64xf32>
    %240 = vector.shape_cast %239 : vector<1x1x64xf32> to vector<1x64xf32>
    %cst_114 = arith.constant dense<0.000000e+00> : vector<5xf32>
    %241 = vector.multi_reduction <add>, %236, %cst_114 [1] : vector<5x64xf32> to vector<5xf32>
    %242 = vector.shape_cast %241 : vector<5xf32> to vector<5x1xf32>
    %cst_115 = arith.constant 6.400000e+01 : f32
    %243 = vector.broadcast %cst_115 : f32 to vector<5x1xf32>
    %244 = arith.divf %242, %243 : vector<5x1xf32>
    %245 = vector.broadcast %244 : vector<5x1xf32> to vector<5x64xf32>
    %246 = arith.subf %236, %245 : vector<5x64xf32>
    %247 = arith.mulf %246, %246 : vector<5x64xf32>
    %cst_116 = arith.constant dense<0.000000e+00> : vector<5xf32>
    %248 = vector.multi_reduction <add>, %247, %cst_116 [1] : vector<5x64xf32> to vector<5xf32>
    %249 = vector.shape_cast %248 : vector<5xf32> to vector<5x1xf32>
    %cst_117 = arith.constant 6.400000e+01 : f32
    %250 = vector.broadcast %cst_117 : f32 to vector<5x1xf32>
    %251 = arith.divf %249, %250 : vector<5x1xf32>
    %252 = vector.broadcast %244 : vector<5x1xf32> to vector<5x64xf32>
    %253 = arith.subf %236, %252 : vector<5x64xf32>
    %cst_118 = arith.constant 9.99999997E-7 : f32
    %254 = vector.broadcast %cst_118 : f32 to vector<5x1xf32>
    %255 = arith.addf %251, %254 : vector<5x1xf32>
    %256 = math.rsqrt %255 : vector<5x1xf32>
    %257 = vector.broadcast %256 : vector<5x1xf32> to vector<5x64xf32>
    %258 = arith.mulf %253, %257 : vector<5x64xf32>
    %259 = vector.broadcast %238 : vector<1x64xf32> to vector<5x64xf32>
    %260 = arith.mulf %258, %259 : vector<5x64xf32>
    %261 = vector.broadcast %240 : vector<1x64xf32> to vector<5x64xf32>
    %262 = arith.addf %260, %261 : vector<5x64xf32>
    %263 = arith.truncf %262 : vector<5x64xf32> to vector<5x64xbf16>
    %c1_119 = arith.constant 1 : index
    %c0_120 = arith.constant 0 : index
    %c0_121 = arith.constant 0 : index
    %264 = vector.load %arg6[%c1_119, %c0_120, %c0_121] : memref<2x64x64xbf16, #tpu.memory_space<vmem>>, vector<1x64x64xbf16>
    %265 = vector.shape_cast %264 : vector<1x64x64xbf16> to vector<64x64xbf16>
    %cst_122 = arith.constant dense<0.000000e+00> : vector<5x64xf32>
    %266 = tpu.matmul %263, %265, %cst_122 {dimension_numbers = #tpu.dot_dimension_numbers<[1], [0], [0], [1], [0, 0, 1, 1], [], []>} : vector<5x64xbf16>, vector<64x64xbf16>, vector<5x64xf32> -> vector<5x64xf32>
    %c1_123 = arith.constant 1 : index
    %c0_124 = arith.constant 0 : index
    %c0_125 = arith.constant 0 : index
    %267 = vector.load %arg7[%c1_123, %c0_124, %c0_125] : memref<2x1x64xf32, #tpu.memory_space<vmem>>, vector<1x1x64xf32>
    %268 = vector.shape_cast %267 : vector<1x1x64xf32> to vector<1x64xf32>
    %269 = vector.broadcast %268 : vector<1x64xf32> to vector<5x64xf32>
    %270 = arith.addf %266, %269 : vector<5x64xf32>
    %c1_126 = arith.constant 1 : index
    %c0_127 = arith.constant 0 : index
    %c0_128 = arith.constant 0 : index
    %271 = vector.load %arg8[%c1_126, %c0_127, %c0_128] : memref<2x64x64xbf16, #tpu.memory_space<vmem>>, vector<1x64x64xbf16>
    %272 = vector.shape_cast %271 : vector<1x64x64xbf16> to vector<64x64xbf16>
    %cst_129 = arith.constant dense<0.000000e+00> : vector<5x64xf32>
    %273 = tpu.matmul %263, %272, %cst_129 {dimension_numbers = #tpu.dot_dimension_numbers<[1], [0], [0], [1], [0, 0, 1, 1], [], []>} : vector<5x64xbf16>, vector<64x64xbf16>, vector<5x64xf32> -> vector<5x64xf32>
    %c1_130 = arith.constant 1 : index
    %c0_131 = arith.constant 0 : index
    %c0_132 = arith.constant 0 : index
    %274 = vector.load %arg9[%c1_130, %c0_131, %c0_132] : memref<2x1x64xf32, #tpu.memory_space<vmem>>, vector<1x1x64xf32>
    %275 = vector.shape_cast %274 : vector<1x1x64xf32> to vector<1x64xf32>
    %276 = vector.broadcast %275 : vector<1x64xf32> to vector<5x64xf32>
    %277 = arith.addf %273, %276 : vector<5x64xf32>
    %c1_133 = arith.constant 1 : index
    %c0_134 = arith.constant 0 : index
    %c0_135 = arith.constant 0 : index
    %278 = vector.load %arg10[%c1_133, %c0_134, %c0_135] : memref<2x64x64xbf16, #tpu.memory_space<vmem>>, vector<1x64x64xbf16>
    %279 = vector.shape_cast %278 : vector<1x64x64xbf16> to vector<64x64xbf16>
    %cst_136 = arith.constant dense<0.000000e+00> : vector<5x64xf32>
    %280 = tpu.matmul %263, %279, %cst_136 {dimension_numbers = #tpu.dot_dimension_numbers<[1], [0], [0], [1], [0, 0, 1, 1], [], []>} : vector<5x64xbf16>, vector<64x64xbf16>, vector<5x64xf32> -> vector<5x64xf32>
    %c1_137 = arith.constant 1 : index
    %c0_138 = arith.constant 0 : index
    %c0_139 = arith.constant 0 : index
    %281 = vector.load %arg11[%c1_137, %c0_138, %c0_139] : memref<2x1x64xf32, #tpu.memory_space<vmem>>, vector<1x1x64xf32>
    %282 = vector.shape_cast %281 : vector<1x1x64xf32> to vector<1x64xf32>
    %283 = vector.broadcast %282 : vector<1x64xf32> to vector<5x64xf32>
    %284 = arith.addf %280, %283 : vector<5x64xf32>
    %cst_140 = arith.constant 0.000000e+00 : f32
    %285 = vector.broadcast %cst_140 : f32 to vector<5x64xf32>
    %c0_i32_141 = arith.constant 0 : i32
    %286 = vector.broadcast %c0_i32_141 : i32 to vector<5x64xi32>
    %287 = arith.cmpi sge, %7, %286 : vector<5x64xi32>
    %c16_i32_142 = arith.constant 16 : i32
    %288 = vector.broadcast %c16_i32_142 : i32 to vector<5x64xi32>
    %289 = arith.cmpi slt, %7, %288 : vector<5x64xi32>
    %290 = arith.andi %287, %289 : vector<5x64xi1>
    %cst_143 = arith.constant 0.000000e+00 : f32
    %291 = vector.broadcast %cst_143 : f32 to vector<5x64xf32>
    %292 = arith.select %290, %270, %291 : vector<5x64xi1>, vector<5x64xf32>
    %293 = arith.truncf %292 : vector<5x64xf32> to vector<5x64xbf16>
    %cst_144 = arith.constant 0.000000e+00 : f32
    %294 = vector.broadcast %cst_144 : f32 to vector<5x64xf32>
    %295 = arith.select %290, %277, %294 : vector<5x64xi1>, vector<5x64xf32>
    %296 = arith.truncf %295 : vector<5x64xf32> to vector<5x64xbf16>
    %cst_145 = arith.constant 0.000000e+00 : f32
    %297 = vector.broadcast %cst_145 : f32 to vector<5x64xf32>
    %298 = arith.select %290, %284, %297 : vector<5x64xi1>, vector<5x64xf32>
    %299 = arith.truncf %298 : vector<5x64xf32> to vector<5x64xbf16>
    "tpu.trace_start"() <{level = 10 : i32, message = "qd,kd->qk"}> : () -> ()
    %cst_146 = arith.constant dense<0.000000e+00> : vector<5x5xf32>
    %300 = tpu.matmul %293, %296, %cst_146 {dimension_numbers = #tpu.dot_dimension_numbers<[1], [1], [0], [0], [0, 0, 1, 0], [], []>} : vector<5x64xbf16>, vector<5x64xbf16>, vector<5x5xf32> -> vector<5x5xf32>
    "tpu.trace_stop"() : () -> ()
    %cst_147 = arith.constant 2.500000e-01 : f32
    %301 = vector.broadcast %cst_147 : f32 to vector<5x5xf32>
    %302 = arith.mulf %300, %301 : vector<5x5xf32>
    %cst_148 = arith.constant dense<0xFF800000> : vector<5xf32>
    %303 = vector.multi_reduction <maximumf>, %302, %cst_148 [1] : vector<5x5xf32> to vector<5xf32>
    %304 = vector.shape_cast %303 : vector<5xf32> to vector<5x1xf32>
    %305 = vector.broadcast %304 : vector<5x1xf32> to vector<5x5xf32>
    %306 = arith.subf %302, %305 : vector<5x5xf32>
    %307 = math.exp %306 : vector<5x5xf32>
    %cst_149 = arith.constant dense<0.000000e+00> : vector<5xf32>
    %308 = vector.multi_reduction <add>, %307, %cst_149 [1] : vector<5x5xf32> to vector<5xf32>
    %309 = vector.shape_cast %308 : vector<5xf32> to vector<5x1xf32>
    %310 = tpu.reciprocal %309 {approx = true} : vector<5x1xf32> -> vector<5x1xf32>
    %311 = vector.broadcast %310 : vector<5x1xf32> to vector<5x5xf32>
    %312 = arith.mulf %307, %311 : vector<5x5xf32>
    %313 = arith.truncf %312 : vector<5x5xf32> to vector<5x5xbf16>
    %cst_150 = arith.constant dense<0.000000e+00> : vector<5x64xf32>
    %314 = tpu.matmul %313, %299, %cst_150 {dimension_numbers = #tpu.dot_dimension_numbers<[1], [0], [0], [1], [0, 0, 1, 1], [], []>} : vector<5x5xbf16>, vector<5x64xbf16>, vector<5x64xf32> -> vector<5x64xf32>
    %315 = arith.addf %285, %314 : vector<5x64xf32>
    %c16_i32_151 = arith.constant 16 : i32
    %316 = vector.broadcast %c16_i32_151 : i32 to vector<5x64xi32>
    %317 = arith.cmpi sge, %7, %316 : vector<5x64xi32>
    %c32_i32_152 = arith.constant 32 : i32
    %318 = vector.broadcast %c32_i32_152 : i32 to vector<5x64xi32>
    %319 = arith.cmpi slt, %7, %318 : vector<5x64xi32>
    %320 = arith.andi %317, %319 : vector<5x64xi1>
    %cst_153 = arith.constant 0.000000e+00 : f32
    %321 = vector.broadcast %cst_153 : f32 to vector<5x64xf32>
    %322 = arith.select %320, %270, %321 : vector<5x64xi1>, vector<5x64xf32>
    %323 = arith.truncf %322 : vector<5x64xf32> to vector<5x64xbf16>
    %cst_154 = arith.constant 0.000000e+00 : f32
    %324 = vector.broadcast %cst_154 : f32 to vector<5x64xf32>
    %325 = arith.select %320, %277, %324 : vector<5x64xi1>, vector<5x64xf32>
    %326 = arith.truncf %325 : vector<5x64xf32> to vector<5x64xbf16>
    %cst_155 = arith.constant 0.000000e+00 : f32
    %327 = vector.broadcast %cst_155 : f32 to vector<5x64xf32>
    %328 = arith.select %320, %284, %327 : vector<5x64xi1>, vector<5x64xf32>
    %329 = arith.truncf %328 : vector<5x64xf32> to vector<5x64xbf16>
    "tpu.trace_start"() <{level = 10 : i32, message = "qd,kd->qk"}> : () -> ()
    %cst_156 = arith.constant dense<0.000000e+00> : vector<5x5xf32>
    %330 = tpu.matmul %323, %326, %cst_156 {dimension_numbers = #tpu.dot_dimension_numbers<[1], [1], [0], [0], [0, 0, 1, 0], [], []>} : vector<5x64xbf16>, vector<5x64xbf16>, vector<5x5xf32> -> vector<5x5xf32>
    "tpu.trace_stop"() : () -> ()
    %cst_157 = arith.constant 2.500000e-01 : f32
    %331 = vector.broadcast %cst_157 : f32 to vector<5x5xf32>
    %332 = arith.mulf %330, %331 : vector<5x5xf32>
    %cst_158 = arith.constant dense<0xFF800000> : vector<5xf32>
    %333 = vector.multi_reduction <maximumf>, %332, %cst_158 [1] : vector<5x5xf32> to vector<5xf32>
    %334 = vector.shape_cast %333 : vector<5xf32> to vector<5x1xf32>
    %335 = vector.broadcast %334 : vector<5x1xf32> to vector<5x5xf32>
    %336 = arith.subf %332, %335 : vector<5x5xf32>
    %337 = math.exp %336 : vector<5x5xf32>
    %cst_159 = arith.constant dense<0.000000e+00> : vector<5xf32>
    %338 = vector.multi_reduction <add>, %337, %cst_159 [1] : vector<5x5xf32> to vector<5xf32>
    %339 = vector.shape_cast %338 : vector<5xf32> to vector<5x1xf32>
    %340 = tpu.reciprocal %339 {approx = true} : vector<5x1xf32> -> vector<5x1xf32>
    %341 = vector.broadcast %340 : vector<5x1xf32> to vector<5x5xf32>
    %342 = arith.mulf %337, %341 : vector<5x5xf32>
    %343 = arith.truncf %342 : vector<5x5xf32> to vector<5x5xbf16>
    %cst_160 = arith.constant dense<0.000000e+00> : vector<5x64xf32>
    %344 = tpu.matmul %343, %329, %cst_160 {dimension_numbers = #tpu.dot_dimension_numbers<[1], [0], [0], [1], [0, 0, 1, 1], [], []>} : vector<5x5xbf16>, vector<5x64xbf16>, vector<5x64xf32> -> vector<5x64xf32>
    %345 = arith.addf %315, %344 : vector<5x64xf32>
    %c32_i32_161 = arith.constant 32 : i32
    %346 = vector.broadcast %c32_i32_161 : i32 to vector<5x64xi32>
    %347 = arith.cmpi sge, %7, %346 : vector<5x64xi32>
    %c48_i32_162 = arith.constant 48 : i32
    %348 = vector.broadcast %c48_i32_162 : i32 to vector<5x64xi32>
    %349 = arith.cmpi slt, %7, %348 : vector<5x64xi32>
    %350 = arith.andi %347, %349 : vector<5x64xi1>
    %cst_163 = arith.constant 0.000000e+00 : f32
    %351 = vector.broadcast %cst_163 : f32 to vector<5x64xf32>
    %352 = arith.select %350, %270, %351 : vector<5x64xi1>, vector<5x64xf32>
    %353 = arith.truncf %352 : vector<5x64xf32> to vector<5x64xbf16>
    %cst_164 = arith.constant 0.000000e+00 : f32
    %354 = vector.broadcast %cst_164 : f32 to vector<5x64xf32>
    %355 = arith.select %350, %277, %354 : vector<5x64xi1>, vector<5x64xf32>
    %356 = arith.truncf %355 : vector<5x64xf32> to vector<5x64xbf16>
    %cst_165 = arith.constant 0.000000e+00 : f32
    %357 = vector.broadcast %cst_165 : f32 to vector<5x64xf32>
    %358 = arith.select %350, %284, %357 : vector<5x64xi1>, vector<5x64xf32>
    %359 = arith.truncf %358 : vector<5x64xf32> to vector<5x64xbf16>
    "tpu.trace_start"() <{level = 10 : i32, message = "qd,kd->qk"}> : () -> ()
    %cst_166 = arith.constant dense<0.000000e+00> : vector<5x5xf32>
    %360 = tpu.matmul %353, %356, %cst_166 {dimension_numbers = #tpu.dot_dimension_numbers<[1], [1], [0], [0], [0, 0, 1, 0], [], []>} : vector<5x64xbf16>, vector<5x64xbf16>, vector<5x5xf32> -> vector<5x5xf32>
    "tpu.trace_stop"() : () -> ()
    %cst_167 = arith.constant 2.500000e-01 : f32
    %361 = vector.broadcast %cst_167 : f32 to vector<5x5xf32>
    %362 = arith.mulf %360, %361 : vector<5x5xf32>
    %cst_168 = arith.constant dense<0xFF800000> : vector<5xf32>
    %363 = vector.multi_reduction <maximumf>, %362, %cst_168 [1] : vector<5x5xf32> to vector<5xf32>
    %364 = vector.shape_cast %363 : vector<5xf32> to vector<5x1xf32>
    %365 = vector.broadcast %364 : vector<5x1xf32> to vector<5x5xf32>
    %366 = arith.subf %362, %365 : vector<5x5xf32>
    %367 = math.exp %366 : vector<5x5xf32>
    %cst_169 = arith.constant dense<0.000000e+00> : vector<5xf32>
    %368 = vector.multi_reduction <add>, %367, %cst_169 [1] : vector<5x5xf32> to vector<5xf32>
    %369 = vector.shape_cast %368 : vector<5xf32> to vector<5x1xf32>
    %370 = tpu.reciprocal %369 {approx = true} : vector<5x1xf32> -> vector<5x1xf32>
    %371 = vector.broadcast %370 : vector<5x1xf32> to vector<5x5xf32>
    %372 = arith.mulf %367, %371 : vector<5x5xf32>
    %373 = arith.truncf %372 : vector<5x5xf32> to vector<5x5xbf16>
    %cst_170 = arith.constant dense<0.000000e+00> : vector<5x64xf32>
    %374 = tpu.matmul %373, %359, %cst_170 {dimension_numbers = #tpu.dot_dimension_numbers<[1], [0], [0], [1], [0, 0, 1, 1], [], []>} : vector<5x5xbf16>, vector<5x64xbf16>, vector<5x64xf32> -> vector<5x64xf32>
    %375 = arith.addf %345, %374 : vector<5x64xf32>
    %c48_i32_171 = arith.constant 48 : i32
    %376 = vector.broadcast %c48_i32_171 : i32 to vector<5x64xi32>
    %377 = arith.cmpi sge, %7, %376 : vector<5x64xi32>
    %c64_i32_172 = arith.constant 64 : i32
    %378 = vector.broadcast %c64_i32_172 : i32 to vector<5x64xi32>
    %379 = arith.cmpi slt, %7, %378 : vector<5x64xi32>
    %380 = arith.andi %377, %379 : vector<5x64xi1>
    %cst_173 = arith.constant 0.000000e+00 : f32
    %381 = vector.broadcast %cst_173 : f32 to vector<5x64xf32>
    %382 = arith.select %380, %270, %381 : vector<5x64xi1>, vector<5x64xf32>
    %383 = arith.truncf %382 : vector<5x64xf32> to vector<5x64xbf16>
    %cst_174 = arith.constant 0.000000e+00 : f32
    %384 = vector.broadcast %cst_174 : f32 to vector<5x64xf32>
    %385 = arith.select %380, %277, %384 : vector<5x64xi1>, vector<5x64xf32>
    %386 = arith.truncf %385 : vector<5x64xf32> to vector<5x64xbf16>
    %cst_175 = arith.constant 0.000000e+00 : f32
    %387 = vector.broadcast %cst_175 : f32 to vector<5x64xf32>
    %388 = arith.select %380, %284, %387 : vector<5x64xi1>, vector<5x64xf32>
    %389 = arith.truncf %388 : vector<5x64xf32> to vector<5x64xbf16>
    "tpu.trace_start"() <{level = 10 : i32, message = "qd,kd->qk"}> : () -> ()
    %cst_176 = arith.constant dense<0.000000e+00> : vector<5x5xf32>
    %390 = tpu.matmul %383, %386, %cst_176 {dimension_numbers = #tpu.dot_dimension_numbers<[1], [1], [0], [0], [0, 0, 1, 0], [], []>} : vector<5x64xbf16>, vector<5x64xbf16>, vector<5x5xf32> -> vector<5x5xf32>
    "tpu.trace_stop"() : () -> ()
    %cst_177 = arith.constant 2.500000e-01 : f32
    %391 = vector.broadcast %cst_177 : f32 to vector<5x5xf32>
    %392 = arith.mulf %390, %391 : vector<5x5xf32>
    %cst_178 = arith.constant dense<0xFF800000> : vector<5xf32>
    %393 = vector.multi_reduction <maximumf>, %392, %cst_178 [1] : vector<5x5xf32> to vector<5xf32>
    %394 = vector.shape_cast %393 : vector<5xf32> to vector<5x1xf32>
    %395 = vector.broadcast %394 : vector<5x1xf32> to vector<5x5xf32>
    %396 = arith.subf %392, %395 : vector<5x5xf32>
    %397 = math.exp %396 : vector<5x5xf32>
    %cst_179 = arith.constant dense<0.000000e+00> : vector<5xf32>
    %398 = vector.multi_reduction <add>, %397, %cst_179 [1] : vector<5x5xf32> to vector<5xf32>
    %399 = vector.shape_cast %398 : vector<5xf32> to vector<5x1xf32>
    %400 = tpu.reciprocal %399 {approx = true} : vector<5x1xf32> -> vector<5x1xf32>
    %401 = vector.broadcast %400 : vector<5x1xf32> to vector<5x5xf32>
    %402 = arith.mulf %397, %401 : vector<5x5xf32>
    %403 = arith.truncf %402 : vector<5x5xf32> to vector<5x5xbf16>
    %cst_180 = arith.constant dense<0.000000e+00> : vector<5x64xf32>
    %404 = tpu.matmul %403, %389, %cst_180 {dimension_numbers = #tpu.dot_dimension_numbers<[1], [0], [0], [1], [0, 0, 1, 1], [], []>} : vector<5x5xbf16>, vector<5x64xbf16>, vector<5x64xf32> -> vector<5x64xf32>
    %405 = arith.addf %375, %404 : vector<5x64xf32>
    %406 = arith.truncf %405 : vector<5x64xf32> to vector<5x64xbf16>
    %c1_181 = arith.constant 1 : index
    %c0_182 = arith.constant 0 : index
    %c0_183 = arith.constant 0 : index
    %407 = vector.load %arg12[%c1_181, %c0_182, %c0_183] : memref<2x64x64xbf16, #tpu.memory_space<vmem>>, vector<1x64x64xbf16>
    %408 = vector.shape_cast %407 : vector<1x64x64xbf16> to vector<64x64xbf16>
    %cst_184 = arith.constant dense<0.000000e+00> : vector<5x64xf32>
    %409 = tpu.matmul %406, %408, %cst_184 {dimension_numbers = #tpu.dot_dimension_numbers<[1], [0], [0], [1], [0, 0, 1, 1], [], []>} : vector<5x64xbf16>, vector<64x64xbf16>, vector<5x64xf32> -> vector<5x64xf32>
    %c1_185 = arith.constant 1 : index
    %c0_186 = arith.constant 0 : index
    %c0_187 = arith.constant 0 : index
    %410 = vector.load %arg13[%c1_185, %c0_186, %c0_187] : memref<2x1x64xf32, #tpu.memory_space<vmem>>, vector<1x1x64xf32>
    %411 = vector.shape_cast %410 : vector<1x1x64xf32> to vector<1x64xf32>
    %412 = vector.broadcast %411 : vector<1x64xf32> to vector<5x64xf32>
    %413 = arith.addf %409, %412 : vector<5x64xf32>
    %414 = arith.addf %236, %413 : vector<5x64xf32>
    %c1_188 = arith.constant 1 : index
    %c0_189 = arith.constant 0 : index
    %c0_190 = arith.constant 0 : index
    %415 = vector.load %arg14[%c1_188, %c0_189, %c0_190] : memref<2x1x64xf32, #tpu.memory_space<vmem>>, vector<1x1x64xf32>
    %416 = vector.shape_cast %415 : vector<1x1x64xf32> to vector<1x64xf32>
    %c1_191 = arith.constant 1 : index
    %c0_192 = arith.constant 0 : index
    %c0_193 = arith.constant 0 : index
    %417 = vector.load %arg15[%c1_191, %c0_192, %c0_193] : memref<2x1x64xf32, #tpu.memory_space<vmem>>, vector<1x1x64xf32>
    %418 = vector.shape_cast %417 : vector<1x1x64xf32> to vector<1x64xf32>
    %cst_194 = arith.constant dense<0.000000e+00> : vector<5xf32>
    %419 = vector.multi_reduction <add>, %414, %cst_194 [1] : vector<5x64xf32> to vector<5xf32>
    %420 = vector.shape_cast %419 : vector<5xf32> to vector<5x1xf32>
    %cst_195 = arith.constant 6.400000e+01 : f32
    %421 = vector.broadcast %cst_195 : f32 to vector<5x1xf32>
    %422 = arith.divf %420, %421 : vector<5x1xf32>
    %423 = vector.broadcast %422 : vector<5x1xf32> to vector<5x64xf32>
    %424 = arith.subf %414, %423 : vector<5x64xf32>
    %425 = arith.mulf %424, %424 : vector<5x64xf32>
    %cst_196 = arith.constant dense<0.000000e+00> : vector<5xf32>
    %426 = vector.multi_reduction <add>, %425, %cst_196 [1] : vector<5x64xf32> to vector<5xf32>
    %427 = vector.shape_cast %426 : vector<5xf32> to vector<5x1xf32>
    %cst_197 = arith.constant 6.400000e+01 : f32
    %428 = vector.broadcast %cst_197 : f32 to vector<5x1xf32>
    %429 = arith.divf %427, %428 : vector<5x1xf32>
    %430 = vector.broadcast %422 : vector<5x1xf32> to vector<5x64xf32>
    %431 = arith.subf %414, %430 : vector<5x64xf32>
    %cst_198 = arith.constant 9.99999997E-7 : f32
    %432 = vector.broadcast %cst_198 : f32 to vector<5x1xf32>
    %433 = arith.addf %429, %432 : vector<5x1xf32>
    %434 = math.rsqrt %433 : vector<5x1xf32>
    %435 = vector.broadcast %434 : vector<5x1xf32> to vector<5x64xf32>
    %436 = arith.mulf %431, %435 : vector<5x64xf32>
    %437 = vector.broadcast %416 : vector<1x64xf32> to vector<5x64xf32>
    %438 = arith.mulf %436, %437 : vector<5x64xf32>
    %439 = vector.broadcast %418 : vector<1x64xf32> to vector<5x64xf32>
    %440 = arith.addf %438, %439 : vector<5x64xf32>
    %441 = arith.truncf %440 : vector<5x64xf32> to vector<5x64xbf16>
    %c1_199 = arith.constant 1 : index
    %c0_200 = arith.constant 0 : index
    %c0_201 = arith.constant 0 : index
    %442 = vector.load %arg16[%c1_199, %c0_200, %c0_201] : memref<2x64x128xbf16, #tpu.memory_space<vmem>>, vector<1x64x128xbf16>
    %443 = vector.shape_cast %442 : vector<1x64x128xbf16> to vector<64x128xbf16>
    %cst_202 = arith.constant dense<0.000000e+00> : vector<5x128xf32>
    %444 = tpu.matmul %441, %443, %cst_202 {dimension_numbers = #tpu.dot_dimension_numbers<[1], [0], [0], [1], [0, 0, 1, 1], [], []>} : vector<5x64xbf16>, vector<64x128xbf16>, vector<5x128xf32> -> vector<5x128xf32>
    %c1_203 = arith.constant 1 : index
    %c0_204 = arith.constant 0 : index
    %c0_205 = arith.constant 0 : index
    %445 = vector.load %arg17[%c1_203, %c0_204, %c0_205] : memref<2x1x128xf32, #tpu.memory_space<vmem>>, vector<1x1x128xf32>
    %446 = vector.shape_cast %445 : vector<1x1x128xf32> to vector<1x128xf32>
    %447 = vector.broadcast %446 : vector<1x128xf32> to vector<5x128xf32>
    %448 = arith.addf %444, %447 : vector<5x128xf32>
    %cst_206 = arith.constant 5.000000e-01 : f32
    %449 = vector.broadcast %cst_206 : f32 to vector<5x128xf32>
    %450 = arith.mulf %449, %448 : vector<5x128xf32>
    %cst_207 = arith.constant 0.707106769 : f32
    %451 = vector.broadcast %cst_207 : f32 to vector<5x128xf32>
    %452 = arith.mulf %448, %451 : vector<5x128xf32>
    %453 = math.erf %452 : vector<5x128xf32>
    %cst_208 = arith.constant 1.000000e+00 : f32
    %454 = vector.broadcast %cst_208 : f32 to vector<5x128xf32>
    %455 = arith.addf %454, %453 : vector<5x128xf32>
    %456 = arith.mulf %450, %455 : vector<5x128xf32>
    %457 = arith.truncf %456 : vector<5x128xf32> to vector<5x128xbf16>
    %c1_209 = arith.constant 1 : index
    %c0_210 = arith.constant 0 : index
    %c0_211 = arith.constant 0 : index
    %458 = vector.load %arg18[%c1_209, %c0_210, %c0_211] : memref<2x128x64xbf16, #tpu.memory_space<vmem>>, vector<1x128x64xbf16>
    %459 = vector.shape_cast %458 : vector<1x128x64xbf16> to vector<128x64xbf16>
    %cst_212 = arith.constant dense<0.000000e+00> : vector<5x64xf32>
    %460 = tpu.matmul %457, %459, %cst_212 {dimension_numbers = #tpu.dot_dimension_numbers<[1], [0], [0], [1], [0, 0, 1, 1], [], []>} : vector<5x128xbf16>, vector<128x64xbf16>, vector<5x64xf32> -> vector<5x64xf32>
    %c1_213 = arith.constant 1 : index
    %c0_214 = arith.constant 0 : index
    %c0_215 = arith.constant 0 : index
    %461 = vector.load %arg19[%c1_213, %c0_214, %c0_215] : memref<2x1x64xf32, #tpu.memory_space<vmem>>, vector<1x1x64xf32>
    %462 = vector.shape_cast %461 : vector<1x1x64xf32> to vector<1x64xf32>
    %463 = vector.broadcast %462 : vector<1x64xf32> to vector<5x64xf32>
    %464 = arith.addf %460, %463 : vector<5x64xf32>
    %465 = arith.addf %414, %464 : vector<5x64xf32>
    %c0_216 = arith.constant 0 : index
    %c0_217 = arith.constant 0 : index
    %466 = vector.load %arg20[%c0_216, %c0_217] : memref<1x64xf32, #tpu.memory_space<vmem>>, vector<1x64xf32>
    %c0_218 = arith.constant 0 : index
    %c0_219 = arith.constant 0 : index
    %467 = vector.load %arg21[%c0_218, %c0_219] : memref<1x64xf32, #tpu.memory_space<vmem>>, vector<1x64xf32>
    %cst_220 = arith.constant dense<0.000000e+00> : vector<5xf32>
    %468 = vector.multi_reduction <add>, %465, %cst_220 [1] : vector<5x64xf32> to vector<5xf32>
    %469 = vector.shape_cast %468 : vector<5xf32> to vector<5x1xf32>
    %cst_221 = arith.constant 6.400000e+01 : f32
    %470 = vector.broadcast %cst_221 : f32 to vector<5x1xf32>
    %471 = arith.divf %469, %470 : vector<5x1xf32>
    %472 = vector.broadcast %471 : vector<5x1xf32> to vector<5x64xf32>
    %473 = arith.subf %465, %472 : vector<5x64xf32>
    %474 = arith.mulf %473, %473 : vector<5x64xf32>
    %cst_222 = arith.constant dense<0.000000e+00> : vector<5xf32>
    %475 = vector.multi_reduction <add>, %474, %cst_222 [1] : vector<5x64xf32> to vector<5xf32>
    %476 = vector.shape_cast %475 : vector<5xf32> to vector<5x1xf32>
    %cst_223 = arith.constant 6.400000e+01 : f32
    %477 = vector.broadcast %cst_223 : f32 to vector<5x1xf32>
    %478 = arith.divf %476, %477 : vector<5x1xf32>
    %479 = vector.broadcast %471 : vector<5x1xf32> to vector<5x64xf32>
    %480 = arith.subf %465, %479 : vector<5x64xf32>
    %cst_224 = arith.constant 9.99999997E-7 : f32
    %481 = vector.broadcast %cst_224 : f32 to vector<5x1xf32>
    %482 = arith.addf %478, %481 : vector<5x1xf32>
    %483 = math.rsqrt %482 : vector<5x1xf32>
    %484 = vector.broadcast %483 : vector<5x1xf32> to vector<5x64xf32>
    %485 = arith.mulf %480, %484 : vector<5x64xf32>
    %486 = vector.broadcast %466 : vector<1x64xf32> to vector<5x64xf32>
    %487 = arith.mulf %485, %486 : vector<5x64xf32>
    %488 = vector.broadcast %467 : vector<1x64xf32> to vector<5x64xf32>
    %489 = arith.addf %487, %488 : vector<5x64xf32>
    %490 = vector.extract_strided_slice %489 {offsets = [0, 0], sizes = [1, 64], strides = [1, 1]} : vector<5x64xf32> to vector<1x64xf32>
    %c0_225 = arith.constant 0 : index
    %c0_226 = arith.constant 0 : index
    %491 = vector.load %arg22[%c0_225, %c0_226] : memref<1x64xf32, #tpu.memory_space<vmem>>, vector<1x64xf32>
    %c0_227 = arith.constant 0 : index
    %c0_228 = arith.constant 0 : index
    %492 = vector.load %arg23[%c0_227, %c0_228] : memref<1x64xf32, #tpu.memory_space<vmem>>, vector<1x64xf32>
    %cst_229 = arith.constant dense<0.000000e+00> : vector<1xf32>
    %493 = vector.multi_reduction <add>, %490, %cst_229 [1] : vector<1x64xf32> to vector<1xf32>
    %494 = vector.shape_cast %493 : vector<1xf32> to vector<1x1xf32>
    %cst_230 = arith.constant 6.400000e+01 : f32
    %495 = vector.broadcast %cst_230 : f32 to vector<1x1xf32>
    %496 = arith.divf %494, %495 : vector<1x1xf32>
    %497 = vector.broadcast %496 : vector<1x1xf32> to vector<1x64xf32>
    %498 = arith.subf %490, %497 : vector<1x64xf32>
    %499 = arith.mulf %498, %498 : vector<1x64xf32>
    %cst_231 = arith.constant dense<0.000000e+00> : vector<1xf32>
    %500 = vector.multi_reduction <add>, %499, %cst_231 [1] : vector<1x64xf32> to vector<1xf32>
    %501 = vector.shape_cast %500 : vector<1xf32> to vector<1x1xf32>
    %cst_232 = arith.constant 6.400000e+01 : f32
    %502 = vector.broadcast %cst_232 : f32 to vector<1x1xf32>
    %503 = arith.divf %501, %502 : vector<1x1xf32>
    %504 = vector.broadcast %496 : vector<1x1xf32> to vector<1x64xf32>
    %505 = arith.subf %490, %504 : vector<1x64xf32>
    %cst_233 = arith.constant 9.99999974E-6 : f32
    %506 = vector.broadcast %cst_233 : f32 to vector<1x1xf32>
    %507 = arith.addf %503, %506 : vector<1x1xf32>
    %508 = math.rsqrt %507 : vector<1x1xf32>
    %509 = vector.broadcast %508 : vector<1x1xf32> to vector<1x64xf32>
    %510 = arith.mulf %505, %509 : vector<1x64xf32>
    %511 = arith.mulf %510, %491 : vector<1x64xf32>
    %512 = arith.addf %511, %492 : vector<1x64xf32>
    %513 = arith.truncf %512 : vector<1x64xf32> to vector<1x64xbf16>
    %c0_234 = arith.constant 0 : index
    %c0_235 = arith.constant 0 : index
    %514 = vector.load %arg24[%c0_234, %c0_235] : memref<64x128xbf16, #tpu.memory_space<vmem>>, vector<64x128xbf16>
    %cst_236 = arith.constant dense<0.000000e+00> : vector<1x128xf32>
    %515 = tpu.matmul %513, %514, %cst_236 {dimension_numbers = #tpu.dot_dimension_numbers<[1], [0], [0], [1], [0, 0, 1, 1], [], []>} : vector<1x64xbf16>, vector<64x128xbf16>, vector<1x128xf32> -> vector<1x128xf32>
    %c0_237 = arith.constant 0 : index
    %c0_238 = arith.constant 0 : index
    %516 = vector.load %arg25[%c0_237, %c0_238] : memref<1x128xf32, #tpu.memory_space<vmem>>, vector<1x128xf32>
    %517 = arith.addf %515, %516 : vector<1x128xf32>
    %cst_239 = arith.constant 5.000000e-01 : f32
    %518 = vector.broadcast %cst_239 : f32 to vector<1x128xf32>
    %519 = arith.mulf %518, %517 : vector<1x128xf32>
    %cst_240 = arith.constant 0.707106769 : f32
    %520 = vector.broadcast %cst_240 : f32 to vector<1x128xf32>
    %521 = arith.mulf %517, %520 : vector<1x128xf32>
    %522 = math.erf %521 : vector<1x128xf32>
    %cst_241 = arith.constant 1.000000e+00 : f32
    %523 = vector.broadcast %cst_241 : f32 to vector<1x128xf32>
    %524 = arith.addf %523, %522 : vector<1x128xf32>
    %525 = arith.mulf %519, %524 : vector<1x128xf32>
    %c0_242 = arith.constant 0 : index
    %c0_243 = arith.constant 0 : index
    %526 = vector.load %arg26[%c0_242, %c0_243] : memref<1x128xf32, #tpu.memory_space<vmem>>, vector<1x128xf32>
    %c0_244 = arith.constant 0 : index
    %c0_245 = arith.constant 0 : index
    %527 = vector.load %arg27[%c0_244, %c0_245] : memref<1x128xf32, #tpu.memory_space<vmem>>, vector<1x128xf32>
    %cst_246 = arith.constant dense<0.000000e+00> : vector<1xf32>
    %528 = vector.multi_reduction <add>, %525, %cst_246 [1] : vector<1x128xf32> to vector<1xf32>
    %529 = vector.shape_cast %528 : vector<1xf32> to vector<1x1xf32>
    %cst_247 = arith.constant 1.280000e+02 : f32
    %530 = vector.broadcast %cst_247 : f32 to vector<1x1xf32>
    %531 = arith.divf %529, %530 : vector<1x1xf32>
    %532 = vector.broadcast %531 : vector<1x1xf32> to vector<1x128xf32>
    %533 = arith.subf %525, %532 : vector<1x128xf32>
    %534 = arith.mulf %533, %533 : vector<1x128xf32>
    %cst_248 = arith.constant dense<0.000000e+00> : vector<1xf32>
    %535 = vector.multi_reduction <add>, %534, %cst_248 [1] : vector<1x128xf32> to vector<1xf32>
    %536 = vector.shape_cast %535 : vector<1xf32> to vector<1x1xf32>
    %cst_249 = arith.constant 1.280000e+02 : f32
    %537 = vector.broadcast %cst_249 : f32 to vector<1x1xf32>
    %538 = arith.divf %536, %537 : vector<1x1xf32>
    %539 = vector.broadcast %531 : vector<1x1xf32> to vector<1x128xf32>
    %540 = arith.subf %525, %539 : vector<1x128xf32>
    %cst_250 = arith.constant 9.99999974E-6 : f32
    %541 = vector.broadcast %cst_250 : f32 to vector<1x1xf32>
    %542 = arith.addf %538, %541 : vector<1x1xf32>
    %543 = math.rsqrt %542 : vector<1x1xf32>
    %544 = vector.broadcast %543 : vector<1x1xf32> to vector<1x128xf32>
    %545 = arith.mulf %540, %544 : vector<1x128xf32>
    %546 = arith.mulf %545, %526 : vector<1x128xf32>
    %547 = arith.addf %546, %527 : vector<1x128xf32>
    %548 = arith.truncf %547 : vector<1x128xf32> to vector<1x128xbf16>
    %c0_251 = arith.constant 0 : index
    %c0_252 = arith.constant 0 : index
    %549 = vector.load %arg28[%c0_251, %c0_252] : memref<128x128xbf16, #tpu.memory_space<vmem>>, vector<128x128xbf16>
    %cst_253 = arith.constant dense<0.000000e+00> : vector<1x128xf32>
    %550 = tpu.matmul %548, %549, %cst_253 {dimension_numbers = #tpu.dot_dimension_numbers<[1], [0], [0], [1], [0, 0, 1, 1], [], []>} : vector<1x128xbf16>, vector<128x128xbf16>, vector<1x128xf32> -> vector<1x128xf32>
    %c0_254 = arith.constant 0 : index
    %c0_255 = arith.constant 0 : index
    %551 = vector.load %arg29[%c0_254, %c0_255] : memref<1x128xf32, #tpu.memory_space<vmem>>, vector<1x128xf32>
    %552 = arith.addf %550, %551 : vector<1x128xf32>
    %c0_256 = arith.constant 0 : index
    %c0_257 = arith.constant 0 : index
    %c0_258 = arith.constant 0 : index
    %553 = vector.load %arg30[%c0_256, %c0_257, %c0_258] : memref<1x1x128xf32, #tpu.memory_space<vmem>>, vector<1x1x128xf32>
    %554 = vector.shape_cast %553 : vector<1x1x128xf32> to vector<1x128xf32>
    %555 = vector.shape_cast %552 : vector<1x128xf32> to vector<1x1x128xf32>
    tpu.vector_store %arg30[%c0_256, %c0_257, %c0_258], %555 {strides = array<i32>} : memref<1x1x128xf32, #tpu.memory_space<vmem>>, vector<1x1x128xf32>,
    return
  }
  func.func @transform_0(%arg0: i32) -> (i32, i32, i32) {
    %c0_i32 = arith.constant 0 : i32
    %c0_i32_0 = arith.constant 0 : i32
    %c0_i32_1 = arith.constant 0 : i32
    return %arg0, %c0_i32, %c0_i32_0 : i32, i32, i32
  }
  func.func @transform_1(%arg0: i32) -> (i32, i32) {
    %c0_i32 = arith.constant 0 : i32
    %c0_i32_0 = arith.constant 0 : i32
    %c0_i32_1 = arith.constant 0 : i32
    return %c0_i32, %c0_i32_0 : i32, i32
  }
  func.func @transform_2(%arg0: i32) -> (i32, i32) {
    %c0_i32 = arith.constant 0 : i32
    %c0_i32_0 = arith.constant 0 : i32
    %c0_i32_1 = arith.constant 0 : i32
    return %c0_i32, %c0_i32_0 : i32, i32
  }
  func.func @transform_3(%arg0: i32) -> (i32, i32, i32) {
    %c0_i32 = arith.constant 0 : i32
    %c0_i32_0 = arith.constant 0 : i32
    %c0_i32_1 = arith.constant 0 : i32
    %c0_i32_2 = arith.constant 0 : i32
    return %c0_i32, %c0_i32_0, %c0_i32_1 : i32, i32, i32
  }
  func.func @transform_4(%arg0: i32) -> (i32, i32, i32) {
    %c0_i32 = arith.constant 0 : i32
    %c0_i32_0 = arith.constant 0 : i32
    %c0_i32_1 = arith.constant 0 : i32
    %c0_i32_2 = arith.constant 0 : i32
    return %c0_i32, %c0_i32_0, %c0_i32_1 : i32, i32, i32
  }
  func.func @transform_5(%arg0: i32) -> (i32, i32, i32) {
    %c0_i32 = arith.constant 0 : i32
    %c0_i32_0 = arith.constant 0 : i32
    %c0_i32_1 = arith.constant 0 : i32
    %c0_i32_2 = arith.constant 0 : i32
    return %c0_i32, %c0_i32_0, %c0_i32_1 : i32, i32, i32
  }
  func.func @transform_6(%arg0: i32) -> (i32, i32, i32) {
    %c0_i32 = arith.constant 0 : i32
    %c0_i32_0 = arith.constant 0 : i32
    %c0_i32_1 = arith.constant 0 : i32
    %c0_i32_2 = arith.constant 0 : i32
    return %c0_i32, %c0_i32_0, %c0_i32_1 : i32, i32, i32
  }
  func.func @transform_7(%arg0: i32) -> (i32, i32, i32) {
    %c0_i32 = arith.constant 0 : i32
    %c0_i32_0 = arith.constant 0 : i32
    %c0_i32_1 = arith.constant 0 : i32
    %c0_i32_2 = arith.constant 0 : i32
    return %c0_i32, %c0_i32_0, %c0_i32_1 : i32, i32, i32
  }
  func.func @transform_8(%arg0: i32) -> (i32, i32, i32) {
    %c0_i32 = arith.constant 0 : i32
    %c0_i32_0 = arith.constant 0 : i32
    %c0_i32_1 = arith.constant 0 : i32
    %c0_i32_2 = arith.constant 0 : i32
    return %c0_i32, %c0_i32_0, %c0_i32_1 : i32, i32, i32
  }
  func.func @transform_9(%arg0: i32) -> (i32, i32, i32) {
    %c0_i32 = arith.constant 0 : i32
    %c0_i32_0 = arith.constant 0 : i32
    %c0_i32_1 = arith.constant 0 : i32
    %c0_i32_2 = arith.constant 0 : i32
    return %c0_i32, %c0_i32_0, %c0_i32_1 : i32, i32, i32
  }
  func.func @transform_10(%arg0: i32) -> (i32, i32, i32) {
    %c0_i32 = arith.constant 0 : i32
    %c0_i32_0 = arith.constant 0 : i32
    %c0_i32_1 = arith.constant 0 : i32
    %c0_i32_2 = arith.constant 0 : i32
    return %c0_i32, %c0_i32_0, %c0_i32_1 : i32, i32, i32
  }
  func.func @transform_11(%arg0: i32) -> (i32, i32, i32) {
    %c0_i32 = arith.constant 0 : i32
    %c0_i32_0 = arith.constant 0 : i32
    %c0_i32_1 = arith.constant 0 : i32
    %c0_i32_2 = arith.constant 0 : i32
    return %c0_i32, %c0_i32_0, %c0_i32_1 : i32, i32, i32
  }
  func.func @transform_12(%arg0: i32) -> (i32, i32, i32) {
    %c0_i32 = arith.constant 0 : i32
    %c0_i32_0 = arith.constant 0 : i32
    %c0_i32_1 = arith.constant 0 : i32
    %c0_i32_2 = arith.constant 0 : i32
    return %c0_i32, %c0_i32_0, %c0_i32_1 : i32, i32, i32
  }
  func.func @transform_13(%arg0: i32) -> (i32, i32, i32) {
    %c0_i32 = arith.constant 0 : i32
    %c0_i32_0 = arith.constant 0 : i32
    %c0_i32_1 = arith.constant 0 : i32
    %c0_i32_2 = arith.constant 0 : i32
    return %c0_i32, %c0_i32_0, %c0_i32_1 : i32, i32, i32
  }
  func.func @transform_14(%arg0: i32) -> (i32, i32, i32) {
    %c0_i32 = arith.constant 0 : i32
    %c0_i32_0 = arith.constant 0 : i32
    %c0_i32_1 = arith.constant 0 : i32
    %c0_i32_2 = arith.constant 0 : i32
    return %c0_i32, %c0_i32_0, %c0_i32_1 : i32, i32, i32
  }
  func.func @transform_15(%arg0: i32) -> (i32, i32, i32) {
    %c0_i32 = arith.constant 0 : i32
    %c0_i32_0 = arith.constant 0 : i32
    %c0_i32_1 = arith.constant 0 : i32
    %c0_i32_2 = arith.constant 0 : i32
    return %c0_i32, %c0_i32_0, %c0_i32_1 : i32, i32, i32
  }
  func.func @transform_16(%arg0: i32) -> (i32, i32, i32) {
    %c0_i32 = arith.constant 0 : i32
    %c0_i32_0 = arith.constant 0 : i32
    %c0_i32_1 = arith.constant 0 : i32
    %c0_i32_2 = arith.constant 0 : i32
    return %c0_i32, %c0_i32_0, %c0_i32_1 : i32, i32, i32
  }
  func.func @transform_17(%arg0: i32) -> (i32, i32, i32) {
    %c0_i32 = arith.constant 0 : i32
    %c0_i32_0 = arith.constant 0 : i32
    %c0_i32_1 = arith.constant 0 : i32
    %c0_i32_2 = arith.constant 0 : i32
    return %c0_i32, %c0_i32_0, %c0_i32_1 : i32, i32, i32
  }
  func.func @transform_18(%arg0: i32) -> (i32, i32, i32) {
    %c0_i32 = arith.constant 0 : i32
    %c0_i32_0 = arith.constant 0 : i32
    %c0_i32_1 = arith.constant 0 : i32
    %c0_i32_2 = arith.constant 0 : i32
    return %c0_i32, %c0_i32_0, %c0_i32_1 : i32, i32, i32
  }
  func.func @transform_19(%arg0: i32) -> (i32, i32) {
    %c0_i32 = arith.constant 0 : i32
    %c0_i32_0 = arith.constant 0 : i32
    %c0_i32_1 = arith.constant 0 : i32
    return %c0_i32, %c0_i32_0 : i32, i32
  }
  func.func @transform_20(%arg0: i32) -> (i32, i32) {
    %c0_i32 = arith.constant 0 : i32
    %c0_i32_0 = arith.constant 0 : i32
    %c0_i32_1 = arith.constant 0 : i32
    return %c0_i32, %c0_i32_0 : i32, i32
  }
  func.func @transform_21(%arg0: i32) -> (i32, i32) {
    %c0_i32 = arith.constant 0 : i32
    %c0_i32_0 = arith.constant 0 : i32
    %c0_i32_1 = arith.constant 0 : i32
    return %c0_i32, %c0_i32_0 : i32, i32
  }
  func.func @transform_22(%arg0: i32) -> (i32, i32) {
    %c0_i32 = arith.constant 0 : i32
    %c0_i32_0 = arith.constant 0 : i32
    %c0_i32_1 = arith.constant 0 : i32
    return %c0_i32, %c0_i32_0 : i32, i32
  }
  func.func @transform_23(%arg0: i32) -> (i32, i32) {
    %c0_i32 = arith.constant 0 : i32
    %c0_i32_0 = arith.constant 0 : i32
    %c0_i32_1 = arith.constant 0 : i32
    return %c0_i32, %c0_i32_0 : i32, i32
  }
  func.func @transform_24(%arg0: i32) -> (i32, i32) {
    %c0_i32 = arith.constant 0 : i32
    %c0_i32_0 = arith.constant 0 : i32
    %c0_i32_1 = arith.constant 0 : i32
    return %c0_i32, %c0_i32_0 : i32, i32
  }
  func.func @transform_25(%arg0: i32) -> (i32, i32) {
    %c0_i32 = arith.constant 0 : i32
    %c0_i32_0 = arith.constant 0 : i32
    %c0_i32_1 = arith.constant 0 : i32
    return %c0_i32, %c0_i32_0 : i32, i32
  }
  func.func @transform_26(%arg0: i32) -> (i32, i32) {
    %c0_i32 = arith.constant 0 : i32
    %c0_i32_0 = arith.constant 0 : i32
    %c0_i32_1 = arith.constant 0 : i32
    return %c0_i32, %c0_i32_0 : i32, i32
  }
  func.func @transform_27(%arg0: i32) -> (i32, i32) {
    %c0_i32 = arith.constant 0 : i32
    %c0_i32_0 = arith.constant 0 : i32
    %c0_i32_1 = arith.constant 0 : i32
    return %c0_i32, %c0_i32_0 : i32, i32
  }
  func.func @transform_28(%arg0: i32) -> (i32, i32) {
    %c0_i32 = arith.constant 0 : i32
    %c0_i32_0 = arith.constant 0 : i32
    %c0_i32_1 = arith.constant 0 : i32
    return %c0_i32, %c0_i32_0 : i32, i32
  }
  func.func @transform_29(%arg0: i32) -> (i32, i32, i32) {
    %c0_i32 = arith.constant 0 : i32
    %c0_i32_0 = arith.constant 0 : i32
    %c0_i32_1 = arith.constant 0 : i32
    return %arg0, %c0_i32, %c0_i32_0 : i32, i32, i32
  }
}

</mosaic_0001>

<llo_original>
// kernel: model_forward.1
$region0: #{model_forward.1}
  #allocation0 [shape = 'u32[]', space=smem, size = 0x4, offset = 0x4, fixed_abs, tag = 'smem constant byte address 0x4 - core index']
  #allocation1 [shape = 'u32[72,128]{1,0:T(1,128)}', space=vmem, size = 0x9000, scoped, tag = 'internal scratch']
  %s0 = inlined_call_operand.smem [shape: u32[30], index: -1, kind: input, shape index: {}]
  %s1 = sld [smem:[%s0]]
  %s2 = scalar_lea.smem %s0, 1
  %s3 = sld [smem:[%s2]]
  %s4 = scalar_lea.smem %s0, 2
  %s5 = sld [smem:[%s4]]
  %s6 = scalar_lea.smem %s0, 3
  %s7 = sld [smem:[%s6]]
  %s8 = scalar_lea.smem %s0, 4
  %s9 = sld [smem:[%s8]]
  %s10 = scalar_lea.smem %s0, 5
  %s11 = sld [smem:[%s10]]
  %s12 = scalar_lea.smem %s0, 6
  %s13 = sld [smem:[%s12]]
  %s14 = scalar_lea.smem %s0, 7
  %s15 = sld [smem:[%s14]]
  %s16 = scalar_lea.smem %s0, 8
  %s17 = sld [smem:[%s16]]
  %s18 = scalar_lea.smem %s0, 9
  %s19 = sld [smem:[%s18]]
  %s20 = scalar_lea.smem %s0, 10
  %s21 = sld [smem:[%s20]]
  %s22 = scalar_lea.smem %s0, 11
  %s23 = sld [smem:[%s22]]
  %s24 = scalar_lea.smem %s0, 12
  %s25 = sld [smem:[%s24]]
  %s26 = scalar_lea.smem %s0, 13
  %s27 = sld [smem:[%s26]]
  %s28 = scalar_lea.smem %s0, 14
  %s29 = sld [smem:[%s28]]
  %s30 = scalar_lea.smem %s0, 15
  %s31 = sld [smem:[%s30]]
  %s32 = scalar_lea.smem %s0, 16
  %s33 = sld [smem:[%s32]]
  %s34 = scalar_lea.smem %s0, 17
  %s35 = sld [smem:[%s34]]
  %s36 = scalar_lea.smem %s0, 18
  %s37 = sld [smem:[%s36]]
  %s38 = scalar_lea.smem %s0, 19
  %s39 = sld [smem:[%s38]]
  %s40 = scalar_lea.smem %s0, 20
  %s41 = sld [smem:[%s40]]
  %s42 = scalar_lea.smem %s0, 21
  %s43 = sld [smem:[%s42]]
  %s44 = scalar_lea.smem %s0, 22
  %s45 = sld [smem:[%s44]]
  %s46 = scalar_lea.smem %s0, 23
  %s47 = sld [smem:[%s46]]
  %s48 = scalar_lea.smem %s0, 24
  %s49 = sld [smem:[%s48]]
  %s50 = scalar_lea.smem %s0, 25
  %s51 = sld [smem:[%s50]]
  %s52 = scalar_lea.smem %s0, 26
  %s53 = sld [smem:[%s52]]
  %s54 = scalar_lea.smem %s0, 27
  %s55 = sld [smem:[%s54]]
  %s56 = scalar_lea.smem %s0, 28
  %s57 = sld [smem:[%s56]]
  %s58 = scalar_lea.smem %s0, 29
  %s59 = sld [smem:[%s58]]
  %s60 = sld [smem:[#allocation0]]
  $region149: #{model_forward.1} parent=0
    _
  %s62 = ssub.s32 1, %s60
  %s63 = scalar_select 0, %s62, %s60
  $region1: #{model_forward.1} parent=0
    #allocation2 [shape = 'u8[1024]{0}', space=vmem, size = 0x400, scoped, tag = 'output window, operand 0']
    #allocation3 [shape = 's32[2]{0}', space=sflag, size = 0x8, scoped, tag = 'scoped memory for model_forward.1']
    %64 = vsyncpa [#allocation3], 0
    %s65 = scalar_lea.sflag [#allocation3], 1
    %66 = vsyncpa %s65, 0
    loop: start=0, step=1, limit=4
    $region2: #{model_forward.1} parent=1 // loop_pre_header
      _
    $region3: #{model_forward.1} parent=1 // loop_header
      %s68 = sphi 0, %s72
      %p69 = scmp.ge.s32.totalorder %s68, 4
      %s78 = sphi 0, %s80
      %s81 = sphi 0, %s78
      %s82 = sphi 0, %s81
      %s98 = sphi 0, %s82
      %s102 = sphi 0, %s102
      %s104 = sphi 0, %s102
      %s105 = sphi 0, %s104
      %s119 = sphi 0, %s105
      %s123 = sphi 0, %s123
      %s125 = sphi 0, %s123
      %s126 = sphi 0, %s125
      %s140 = sphi 0, %s126
      %s144 = sphi 0, %s144
      %s146 = sphi 0, %s144
      %s147 = sphi 0, %s146
      %s161 = sphi 0, %s147
      %s165 = sphi 0, %s165
      %s167 = sphi 0, %s165
      %s168 = sphi 0, %s167
      %s182 = sphi 0, %s168
      %s186 = sphi 0, %s186
      %s188 = sphi 0, %s186
      %s189 = sphi 0, %s188
      %s203 = sphi 0, %s189
      %s207 = sphi 0, %s207
      %s209 = sphi 0, %s207
      %s210 = sphi 0, %s209
      %s224 = sphi 0, %s210
      %s228 = sphi 0, %s228
      %s230 = sphi 0, %s228
      %s231 = sphi 0, %s230
      %s245 = sphi 0, %s231
      %s249 = sphi 0, %s249
      %s251 = sphi 0, %s249
      %s252 = sphi 0, %s251
      %s266 = sphi 0, %s252
      %s270 = sphi 0, %s270
      %s272 = sphi 0, %s270
      %s273 = sphi 0, %s272
      %s287 = sphi 0, %s273
      %s291 = sphi 0, %s291
      %s293 = sphi 0, %s291
      %s294 = sphi 0, %s293
      %s308 = sphi 0, %s294
      %s312 = sphi 0, %s312
      %s314 = sphi 0, %s312
      %s315 = sphi 0, %s314
      %s329 = sphi 0, %s315
      %s333 = sphi 0, %s333
      %s335 = sphi 0, %s333
      %s336 = sphi 0, %s335
      %s350 = sphi 0, %s336
      %s354 = sphi 0, %s354
      %s356 = sphi 0, %s354
      %s357 = sphi 0, %s356
      %s371 = sphi 0, %s357
      %s375 = sphi 0, %s375
      %s377 = sphi 0, %s375
      %s378 = sphi 0, %s377
      %s392 = sphi 0, %s378
      %s396 = sphi 0, %s396
      %s398 = sphi 0, %s396
      %s399 = sphi 0, %s398
      %s413 = sphi 0, %s399
      %s417 = sphi 0, %s417
      %s419 = sphi 0, %s417
      %s420 = sphi 0, %s419
      %s434 = sphi 0, %s420
      %s438 = sphi 0, %s438
      %s440 = sphi 0, %s438
      %s441 = sphi 0, %s440
      %s455 = sphi 0, %s441
      %s459 = sphi 0, %s459
      %s461 = sphi 0, %s459
      %s462 = sphi 0, %s461
      %s476 = sphi 0, %s462
      %s480 = sphi 0, %s480
      %s482 = sphi 0, %s480
      %s483 = sphi 0, %s482
      %s497 = sphi 0, %s483
      %s501 = sphi 0, %s501
      %s503 = sphi 0, %s501
      %s504 = sphi 0, %s503
      %s518 = sphi 0, %s504
      %s522 = sphi 0, %s522
      %s524 = sphi 0, %s522
      %s525 = sphi 0, %s524
      %s539 = sphi 0, %s525
      %s543 = sphi 0, %s543
      %s545 = sphi 0, %s543
      %s546 = sphi 0, %s545
      %s560 = sphi 0, %s546
      %s564 = sphi 0, %s564
      %s566 = sphi 0, %s564
      %s567 = sphi 0, %s566
      %s581 = sphi 0, %s567
      %s585 = sphi 0, %s585
      %s587 = sphi 0, %s585
      %s588 = sphi 0, %s587
      %s602 = sphi 0, %s588
      %s606 = sphi 0, %s606
      %s608 = sphi 0, %s606
      %s609 = sphi 0, %s608
      %s623 = sphi 0, %s609
      %s627 = sphi 0, %s627
      %s629 = sphi 0, %s627
      %s630 = sphi 0, %s629
      %s644 = sphi 0, %s630
      %s648 = sphi 0, %s648
      %s650 = sphi 0, %s648
      %s651 = sphi 0, %s650
      %s665 = sphi 0, %s651
      %s669 = sphi 0, %s669
      %s671 = sphi 0, %s669
      %s672 = sphi 0, %s671
      %s686 = sphi 0, %s672
      %s692 = sphi 0, %s694
      %s695 = sphi 0, %s692
      %s696 = sphi 0, %s695
      %s712 = sphi 0, %s696
    $region4: #{model_forward.1} parent=1 // loop_header_branch
      %71 = sbr.rel (%p69) target = $region8
    $region5: #{model_forward.1} parent=1 // loop_body
      %s73 = ssub.s32 %s68, 1
      %s74 = ssub.s32 %s68, 2
      %s75 = sadd.s32 %s68, 1
      %s76 = ssub.s32 %s68, %s75
      %p77 = scmp.eq.s32.totalorder %s76, 0
      %s79 = sadd.s32 %s78, 1
      %s80 = scalar_select %p77, %s78, %s79
      %p83 = pneg %p77
      %p84 = scmp.eq.s32.totalorder %s68, 1
      %p85 = por %p83, %p84
      %p86 = scmp.ne.s32.totalorder %s78, %s81
      %p87 = scmp.eq.s32.totalorder %s68, 0
      %p88 = por %p86, %p87
      %p89 = scmp.ne.s32.totalorder %s78, %s81
      %p90 = scmp.eq.s32.totalorder %s73, 1
      %p91 = por %p89, %p90
      %p92 = scmp.ne.s32.totalorder %s81, %s82
      %p93 = scmp.eq.s32.totalorder %s73, 0
      %p94 = por %p92, %p93
      %p95 = scmp.ne.s32.totalorder %s81, %s82
      %p96 = scmp.eq.s32.totalorder %s74, 1
      %p97 = por %p95, %p96
      %p99 = scmp.ne.s32.totalorder %s82, %s98
      %p100 = scmp.eq.s32.totalorder %s74, 0
      %p101 = por %p99, %p100
      %s103 = sadd.s32 %s102, 1
      %p106 = scmp.eq.s32.totalorder %s68, 1
      %p107 = scmp.ne.s32.totalorder %s102, %s104
      %p108 = scmp.eq.s32.totalorder %s68, 0
      %p109 = por %p107, %p108
      %p110 = scmp.ne.s32.totalorder %s102, %s104
      %p111 = scmp.eq.s32.totalorder %s73, 1
      %p112 = por %p110, %p111
      %p113 = scmp.ne.s32.totalorder %s104, %s105
      %p114 = scmp.eq.s32.totalorder %s73, 0
      %p115 = por %p113, %p114
      %p116 = scmp.ne.s32.totalorder %s104, %s105
      %p117 = scmp.eq.s32.totalorder %s74, 1
      %p118 = por %p116, %p117
      %p120 = scmp.ne.s32.totalorder %s105, %s119
      %p121 = scmp.eq.s32.totalorder %s74, 0
      %p122 = por %p120, %p121
      %s124 = sadd.s32 %s123, 1
      %p127 = scmp.eq.s32.totalorder %s68, 1
      %p128 = scmp.ne.s32.totalorder %s123, %s125
      %p129 = scmp.eq.s32.totalorder %s68, 0
      %p130 = por %p128, %p129
      %p131 = scmp.ne.s32.totalorder %s123, %s125
      %p132 = scmp.eq.s32.totalorder %s73, 1
      %p133 = por %p131, %p132
      %p134 = scmp.ne.s32.totalorder %s125, %s126
      %p135 = scmp.eq.s32.totalorder %s73, 0
      %p136 = por %p134, %p135
      %p137 = scmp.ne.s32.totalorder %s125, %s126
      %p138 = scmp.eq.s32.totalorder %s74, 1
      %p139 = por %p137, %p138
      %p141 = scmp.ne.s32.totalorder %s126, %s140
      %p142 = scmp.eq.s32.totalorder %s74, 0
      %p143 = por %p141, %p142
      %s145 = sadd.s32 %s144, 1
      %p148 = scmp.eq.s32.totalorder %s68, 1
      %p149 = scmp.ne.s32.totalorder %s144, %s146
      %p150 = scmp.eq.s32.totalorder %s68, 0
      %p151 = por %p149, %p150
      %p152 = scmp.ne.s32.totalorder %s144, %s146
      %p153 = scmp.eq.s32.totalorder %s73, 1
      %p154 = por %p152, %p153
      %p155 = scmp.ne.s32.totalorder %s146, %s147
      %p156 = scmp.eq.s32.totalorder %s73, 0
      %p157 = por %p155, %p156
      %p158 = scmp.ne.s32.totalorder %s146, %s147
      %p159 = scmp.eq.s32.totalorder %s74, 1
      %p160 = por %p158, %p159
      %p162 = scmp.ne.s32.totalorder %s147, %s161
      %p163 = scmp.eq.s32.totalorder %s74, 0
      %p164 = por %p162, %p163
      %s166 = sadd.s32 %s165, 1
      %p169 = scmp.eq.s32.totalorder %s68, 1
      %p170 = scmp.ne.s32.totalorder %s165, %s167
      %p171 = scmp.eq.s32.totalorder %s68, 0
      %p172 = por %p170, %p171
      %p173 = scmp.ne.s32.totalorder %s165, %s167
      %p174 = scmp.eq.s32.totalorder %s73, 1
      %p175 = por %p173, %p174
      %p176 = scmp.ne.s32.totalorder %s167, %s168
      %p177 = scmp.eq.s32.totalorder %s73, 0
      %p178 = por %p176, %p177
      %p179 = scmp.ne.s32.totalorder %s167, %s168
      %p180 = scmp.eq.s32.totalorder %s74, 1
      %p181 = por %p179, %p180
      %p183 = scmp.ne.s32.totalorder %s168, %s182
      %p184 = scmp.eq.s32.totalorder %s74, 0
      %p185 = por %p183, %p184
      %s187 = sadd.s32 %s186, 1
      %p190 = scmp.eq.s32.totalorder %s68, 1
      %p191 = scmp.ne.s32.totalorder %s186, %s188
      %p192 = scmp.eq.s32.totalorder %s68, 0
      %p193 = por %p191, %p192
      %p194 = scmp.ne.s32.totalorder %s186, %s188
      %p195 = scmp.eq.s32.totalorder %s73, 1
      %p196 = por %p194, %p195
      %p197 = scmp.ne.s32.totalorder %s188, %s189
      %p198 = scmp.eq.s32.totalorder %s73, 0
      %p199 = por %p197, %p198
      %p200 = scmp.ne.s32.totalorder %s188, %s189
      %p201 = scmp.eq.s32.totalorder %s74, 1
      %p202 = por %p200, %p201
      %p204 = scmp.ne.s32.totalorder %s189, %s203
      %p205 = scmp.eq.s32.totalorder %s74, 0
      %p206 = por %p204, %p205
      %s208 = sadd.s32 %s207, 1
      %p211 = scmp.eq.s32.totalorder %s68, 1
      %p212 = scmp.ne.s32.totalorder %s207, %s209
      %p213 = scmp.eq.s32.totalorder %s68, 0
      %p214 = por %p212, %p213
      %p215 = scmp.ne.s32.totalorder %s207, %s209
      %p216 = scmp.eq.s32.totalorder %s73, 1
      %p217 = por %p215, %p216
      %p218 = scmp.ne.s32.totalorder %s209, %s210
      %p219 = scmp.eq.s32.totalorder %s73, 0
      %p220 = por %p218, %p219
      %p221 = scmp.ne.s32.totalorder %s209, %s210
      %p222 = scmp.eq.s32.totalorder %s74, 1
      %p223 = por %p221, %p222
      %p225 = scmp.ne.s32.totalorder %s210, %s224
      %p226 = scmp.eq.s32.totalorder %s74, 0
      %p227 = por %p225, %p226
      %s229 = sadd.s32 %s228, 1
      %p232 = scmp.eq.s32.totalorder %s68, 1
      %p233 = scmp.ne.s32.totalorder %s228, %s230
      %p234 = scmp.eq.s32.totalorder %s68, 0
      %p235 = por %p233, %p234
      %p236 = scmp.ne.s32.totalorder %s228, %s230
      %p237 = scmp.eq.s32.totalorder %s73, 1
      %p238 = por %p236, %p237
      %p239 = scmp.ne.s32.totalorder %s230, %s231
      %p240 = scmp.eq.s32.totalorder %s73, 0
      %p241 = por %p239, %p240
      %p242 = scmp.ne.s32.totalorder %s230, %s231
      %p243 = scmp.eq.s32.totalorder %s74, 1
      %p244 = por %p242, %p243
      %p246 = scmp.ne.s32.totalorder %s231, %s245
      %p247 = scmp.eq.s32.totalorder %s74, 0
      %p248 = por %p246, %p247
      %s250 = sadd.s32 %s249, 1
      %p253 = scmp.eq.s32.totalorder %s68, 1
      %p254 = scmp.ne.s32.totalorder %s249, %s251
      %p255 = scmp.eq.s32.totalorder %s68, 0
      %p256 = por %p254, %p255
      %p257 = scmp.ne.s32.totalorder %s249, %s251
      %p258 = scmp.eq.s32.totalorder %s73, 1
      %p259 = por %p257, %p258
      %p260 = scmp.ne.s32.totalorder %s251, %s252
      %p261 = scmp.eq.s32.totalorder %s73, 0
      %p262 = por %p260, %p261
      %p263 = scmp.ne.s32.totalorder %s251, %s252
      %p264 = scmp.eq.s32.totalorder %s74, 1
      %p265 = por %p263, %p264
      %p267 = scmp.ne.s32.totalorder %s252, %s266
      %p268 = scmp.eq.s32.totalorder %s74, 0
      %p269 = por %p267, %p268
      %s271 = sadd.s32 %s270, 1
      %p274 = scmp.eq.s32.totalorder %s68, 1
      %p275 = scmp.ne.s32.totalorder %s270, %s272
      %p276 = scmp.eq.s32.totalorder %s68, 0
      %p277 = por %p275, %p276
      %p278 = scmp.ne.s32.totalorder %s270, %s272
      %p279 = scmp.eq.s32.totalorder %s73, 1
      %p280 = por %p278, %p279
      %p281 = scmp.ne.s32.totalorder %s272, %s273
      %p282 = scmp.eq.s32.totalorder %s73, 0
      %p283 = por %p281, %p282
      %p284 = scmp.ne.s32.totalorder %s272, %s273
      %p285 = scmp.eq.s32.totalorder %s74, 1
      %p286 = por %p284, %p285
      %p288 = scmp.ne.s32.totalorder %s273, %s287
      %p289 = scmp.eq.s32.totalorder %s74, 0
      %p290 = por %p288, %p289
      %s292 = sadd.s32 %s291, 1
      %p295 = scmp.eq.s32.totalorder %s68, 1
      %p296 = scmp.ne.s32.totalorder %s291, %s293
      %p297 = scmp.eq.s32.totalorder %s68, 0
      %p298 = por %p296, %p297
      %p299 = scmp.ne.s32.totalorder %s291, %s293
      %p300 = scmp.eq.s32.totalorder %s73, 1
      %p301 = por %p299, %p300
      %p302 = scmp.ne.s32.totalorder %s293, %s294
      %p303 = scmp.eq.s32.totalorder %s73, 0
      %p304 = por %p302, %p303
      %p305 = scmp.ne.s32.totalorder %s293, %s294
      %p306 = scmp.eq.s32.totalorder %s74, 1
      %p307 = por %p305, %p306
      %p309 = scmp.ne.s32.totalorder %s294, %s308
      %p310 = scmp.eq.s32.totalorder %s74, 0
      %p311 = por %p309, %p310
      %s313 = sadd.s32 %s312, 1
      %p316 = scmp.eq.s32.totalorder %s68, 1
      %p317 = scmp.ne.s32.totalorder %s312, %s314
      %p318 = scmp.eq.s32.totalorder %s68, 0
      %p319 = por %p317, %p318
      %p320 = scmp.ne.s32.totalorder %s312, %s314
      %p321 = scmp.eq.s32.totalorder %s73, 1
      %p322 = por %p320, %p321
      %p323 = scmp.ne.s32.totalorder %s314, %s315
      %p324 = scmp.eq.s32.totalorder %s73, 0
      %p325 = por %p323, %p324
      %p326 = scmp.ne.s32.totalorder %s314, %s315
      %p327 = scmp.eq.s32.totalorder %s74, 1
      %p328 = por %p326, %p327
      %p330 = scmp.ne.s32.totalorder %s315, %s329
      %p331 = scmp.eq.s32.totalorder %s74, 0
      %p332 = por %p330, %p331
      %s334 = sadd.s32 %s333, 1
      %p337 = scmp.eq.s32.totalorder %s68, 1
      %p338 = scmp.ne.s32.totalorder %s333, %s335
      %p339 = scmp.eq.s32.totalorder %s68, 0
      %p340 = por %p338, %p339
      %p341 = scmp.ne.s32.totalorder %s333, %s335
      %p342 = scmp.eq.s32.totalorder %s73, 1
      %p343 = por %p341, %p342
      %p344 = scmp.ne.s32.totalorder %s335, %s336
      %p345 = scmp.eq.s32.totalorder %s73, 0
      %p346 = por %p344, %p345
      %p347 = scmp.ne.s32.totalorder %s335, %s336
      %p348 = scmp.eq.s32.totalorder %s74, 1
      %p349 = por %p347, %p348
      %p351 = scmp.ne.s32.totalorder %s336, %s350
      %p352 = scmp.eq.s32.totalorder %s74, 0
      %p353 = por %p351, %p352
      %s355 = sadd.s32 %s354, 1
      %p358 = scmp.eq.s32.totalorder %s68, 1
      %p359 = scmp.ne.s32.totalorder %s354, %s356
      %p360 = scmp.eq.s32.totalorder %s68, 0
      %p361 = por %p359, %p360
      %p362 = scmp.ne.s32.totalorder %s354, %s356
      %p363 = scmp.eq.s32.totalorder %s73, 1
      %p364 = por %p362, %p363
      %p365 = scmp.ne.s32.totalorder %s356, %s357
      %p366 = scmp.eq.s32.totalorder %s73, 0
      %p367 = por %p365, %p366
      %p368 = scmp.ne.s32.totalorder %s356, %s357
      %p369 = scmp.eq.s32.totalorder %s74, 1
      %p370 = por %p368, %p369
      %p372 = scmp.ne.s32.totalorder %s357, %s371
      %p373 = scmp.eq.s32.totalorder %s74, 0
      %p374 = por %p372, %p373
      %s376 = sadd.s32 %s375, 1
      %p379 = scmp.eq.s32.totalorder %s68, 1
      %p380 = scmp.ne.s32.totalorder %s375, %s377
      %p381 = scmp.eq.s32.totalorder %s68, 0
      %p382 = por %p380, %p381
      %p383 = scmp.ne.s32.totalorder %s375, %s377
      %p384 = scmp.eq.s32.totalorder %s73, 1
      %p385 = por %p383, %p384
      %p386 = scmp.ne.s32.totalorder %s377, %s378
      %p387 = scmp.eq.s32.totalorder %s73, 0
      %p388 = por %p386, %p387
      %p389 = scmp.ne.s32.totalorder %s377, %s378
      %p390 = scmp.eq.s32.totalorder %s74, 1
      %p391 = por %p389, %p390
      %p393 = scmp.ne.s32.totalorder %s378, %s392
      %p394 = scmp.eq.s32.totalorder %s74, 0
      %p395 = por %p393, %p394
      %s397 = sadd.s32 %s396, 1
      %p400 = scmp.eq.s32.totalorder %s68, 1
      %p401 = scmp.ne.s32.totalorder %s396, %s398
      %p402 = scmp.eq.s32.totalorder %s68, 0
      %p403 = por %p401, %p402
      %p404 = scmp.ne.s32.totalorder %s396, %s398
      %p405 = scmp.eq.s32.totalorder %s73, 1
      %p406 = por %p404, %p405
      %p407 = scmp.ne.s32.totalorder %s398, %s399
      %p408 = scmp.eq.s32.totalorder %s73, 0
      %p409 = por %p407, %p408
      %p410 = scmp.ne.s32.totalorder %s398, %s399
      %p411 = scmp.eq.s32.totalorder %s74, 1
      %p412 = por %p410, %p411
      %p414 = scmp.ne.s32.totalorder %s399, %s413
      %p415 = scmp.eq.s32.totalorder %s74, 0
      %p416 = por %p414, %p415
      %s418 = sadd.s32 %s417, 1
      %p421 = scmp.eq.s32.totalorder %s68, 1
      %p422 = scmp.ne.s32.totalorder %s417, %s419
      %p423 = scmp.eq.s32.totalorder %s68, 0
      %p424 = por %p422, %p423
      %p425 = scmp.ne.s32.totalorder %s417, %s419
      %p426 = scmp.eq.s32.totalorder %s73, 1
      %p427 = por %p425, %p426
      %p428 = scmp.ne.s32.totalorder %s419, %s420
      %p429 = scmp.eq.s32.totalorder %s73, 0
      %p430 = por %p428, %p429
      %p431 = scmp.ne.s32.totalorder %s419, %s420
      %p432 = scmp.eq.s32.totalorder %s74, 1
      %p433 = por %p431, %p432
      %p435 = scmp.ne.s32.totalorder %s420, %s434
      %p436 = scmp.eq.s32.totalorder %s74, 0
      %p437 = por %p435, %p436
      %s439 = sadd.s32 %s438, 1
      %p442 = scmp.eq.s32.totalorder %s68, 1
      %p443 = scmp.ne.s32.totalorder %s438, %s440
      %p444 = scmp.eq.s32.totalorder %s68, 0
      %p445 = por %p443, %p444
      %p446 = scmp.ne.s32.totalorder %s438, %s440
      %p447 = scmp.eq.s32.totalorder %s73, 1
      %p448 = por %p446, %p447
      %p449 = scmp.ne.s32.totalorder %s440, %s441
      %p450 = scmp.eq.s32.totalorder %s73, 0
      %p451 = por %p449, %p450
      %p452 = scmp.ne.s32.totalorder %s440, %s441
      %p453 = scmp.eq.s32.totalorder %s74, 1
      %p454 = por %p452, %p453
      %p456 = scmp.ne.s32.totalorder %s441, %s455
      %p457 = scmp.eq.s32.totalorder %s74, 0
      %p458 = por %p456, %p457
      %s460 = sadd.s32 %s459, 1
      %p463 = scmp.eq.s32.totalorder %s68, 1
      %p464 = scmp.ne.s32.totalorder %s459, %s461
      %p465 = scmp.eq.s32.totalorder %s68, 0
      %p466 = por %p464, %p465
      %p467 = scmp.ne.s32.totalorder %s459, %s461
      %p468 = scmp.eq.s32.totalorder %s73, 1
      %p469 = por %p467, %p468
      %p470 = scmp.ne.s32.totalorder %s461, %s462
      %p471 = scmp.eq.s32.totalorder %s73, 0
      %p472 = por %p470, %p471
      %p473 = scmp.ne.s32.totalorder %s461, %s462
      %p474 = scmp.eq.s32.totalorder %s74, 1
      %p475 = por %p473, %p474
      %p477 = scmp.ne.s32.totalorder %s462, %s476
      %p478 = scmp.eq.s32.totalorder %s74, 0
      %p479 = por %p477, %p478
      %s481 = sadd.s32 %s480, 1
      %p484 = scmp.eq.s32.totalorder %s68, 1
      %p485 = scmp.ne.s32.totalorder %s480, %s482
      %p486 = scmp.eq.s32.totalorder %s68, 0
      %p487 = por %p485, %p486
      %p488 = scmp.ne.s32.totalorder %s480, %s482
      %p489 = scmp.eq.s32.totalorder %s73, 1
      %p490 = por %p488, %p489
      %p491 = scmp.ne.s32.totalorder %s482, %s483
      %p492 = scmp.eq.s32.totalorder %s73, 0
      %p493 = por %p491, %p492
      %p494 = scmp.ne.s32.totalorder %s482, %s483
      %p495 = scmp.eq.s32.totalorder %s74, 1
      %p496 = por %p494, %p495
      %p498 = scmp.ne.s32.totalorder %s483, %s497
      %p499 = scmp.eq.s32.totalorder %s74, 0
      %p500 = por %p498, %p499
      %s502 = sadd.s32 %s501, 1
      %p505 = scmp.eq.s32.totalorder %s68, 1
      %p506 = scmp.ne.s32.totalorder %s501, %s503
      %p507 = scmp.eq.s32.totalorder %s68, 0
      %p508 = por %p506, %p507
      %p509 = scmp.ne.s32.totalorder %s501, %s503
      %p510 = scmp.eq.s32.totalorder %s73, 1
      %p511 = por %p509, %p510
      %p512 = scmp.ne.s32.totalorder %s503, %s504
      %p513 = scmp.eq.s32.totalorder %s73, 0
      %p514 = por %p512, %p513
      %p515 = scmp.ne.s32.totalorder %s503, %s504
      %p516 = scmp.eq.s32.totalorder %s74, 1
      %p517 = por %p515, %p516
      %p519 = scmp.ne.s32.totalorder %s504, %s518
      %p520 = scmp.eq.s32.totalorder %s74, 0
      %p521 = por %p519, %p520
      %s523 = sadd.s32 %s522, 1
      %p526 = scmp.eq.s32.totalorder %s68, 1
      %p527 = scmp.ne.s32.totalorder %s522, %s524
      %p528 = scmp.eq.s32.totalorder %s68, 0
      %p529 = por %p527, %p528
      %p530 = scmp.ne.s32.totalorder %s522, %s524
      %p531 = scmp.eq.s32.totalorder %s73, 1
      %p532 = por %p530, %p531
      %p533 = scmp.ne.s32.totalorder %s524, %s525
      %p534 = scmp.eq.s32.totalorder %s73, 0
      %p535 = por %p533, %p534
      %p536 = scmp.ne.s32.totalorder %s524, %s525
      %p537 = scmp.eq.s32.totalorder %s74, 1
      %p538 = por %p536, %p537
      %p540 = scmp.ne.s32.totalorder %s525, %s539
      %p541 = scmp.eq.s32.totalorder %s74, 0
      %p542 = por %p540, %p541
      %s544 = sadd.s32 %s543, 1
      %p547 = scmp.eq.s32.totalorder %s68, 1
      %p548 = scmp.ne.s32.totalorder %s543, %s545
      %p549 = scmp.eq.s32.totalorder %s68, 0
      %p550 = por %p548, %p549
      %p551 = scmp.ne.s32.totalorder %s543, %s545
      %p552 = scmp.eq.s32.totalorder %s73, 1
      %p553 = por %p551, %p552
      %p554 = scmp.ne.s32.totalorder %s545, %s546
      %p555 = scmp.eq.s32.totalorder %s73, 0
      %p556 = por %p554, %p555
      %p557 = scmp.ne.s32.totalorder %s545, %s546
      %p558 = scmp.eq.s32.totalorder %s74, 1
      %p559 = por %p557, %p558
      %p561 = scmp.ne.s32.totalorder %s546, %s560
      %p562 = scmp.eq.s32.totalorder %s74, 0
      %p563 = por %p561, %p562
      %s565 = sadd.s32 %s564, 1
      %p568 = scmp.eq.s32.totalorder %s68, 1
      %p569 = scmp.ne.s32.totalorder %s564, %s566
      %p570 = scmp.eq.s32.totalorder %s68, 0
      %p571 = por %p569, %p570
      %p572 = scmp.ne.s32.totalorder %s564, %s566
      %p573 = scmp.eq.s32.totalorder %s73, 1
      %p574 = por %p572, %p573
      %p575 = scmp.ne.s32.totalorder %s566, %s567
      %p576 = scmp.eq.s32.totalorder %s73, 0
      %p577 = por %p575, %p576
      %p578 = scmp.ne.s32.totalorder %s566, %s567
      %p579 = scmp.eq.s32.totalorder %s74, 1
      %p580 = por %p578, %p579
      %p582 = scmp.ne.s32.totalorder %s567, %s581
      %p583 = scmp.eq.s32.totalorder %s74, 0
      %p584 = por %p582, %p583
      %s586 = sadd.s32 %s585, 1
      %p589 = scmp.eq.s32.totalorder %s68, 1
      %p590 = scmp.ne.s32.totalorder %s585, %s587
      %p591 = scmp.eq.s32.totalorder %s68, 0
      %p592 = por %p590, %p591
      %p593 = scmp.ne.s32.totalorder %s585, %s587
      %p594 = scmp.eq.s32.totalorder %s73, 1
      %p595 = por %p593, %p594
      %p596 = scmp.ne.s32.totalorder %s587, %s588
      %p597 = scmp.eq.s32.totalorder %s73, 0
      %p598 = por %p596, %p597
      %p599 = scmp.ne.s32.totalorder %s587, %s588
      %p600 = scmp.eq.s32.totalorder %s74, 1
      %p601 = por %p599, %p600
      %p603 = scmp.ne.s32.totalorder %s588, %s602
      %p604 = scmp.eq.s32.totalorder %s74, 0
      %p605 = por %p603, %p604
      %s607 = sadd.s32 %s606, 1
      %p610 = scmp.eq.s32.totalorder %s68, 1
      %p611 = scmp.ne.s32.totalorder %s606, %s608
      %p612 = scmp.eq.s32.totalorder %s68, 0
      %p613 = por %p611, %p612
      %p614 = scmp.ne.s32.totalorder %s606, %s608
      %p615 = scmp.eq.s32.totalorder %s73, 1
      %p616 = por %p614, %p615
      %p617 = scmp.ne.s32.totalorder %s608, %s609
      %p618 = scmp.eq.s32.totalorder %s73, 0
      %p619 = por %p617, %p618
      %p620 = scmp.ne.s32.totalorder %s608, %s609
      %p621 = scmp.eq.s32.totalorder %s74, 1
      %p622 = por %p620, %p621
      %p624 = scmp.ne.s32.totalorder %s609, %s623
      %p625 = scmp.eq.s32.totalorder %s74, 0
      %p626 = por %p624, %p625
      %s628 = sadd.s32 %s627, 1
      %p631 = scmp.eq.s32.totalorder %s68, 1
      %p632 = scmp.ne.s32.totalorder %s627, %s629
      %p633 = scmp.eq.s32.totalorder %s68, 0
      %p634 = por %p632, %p633
      %p635 = scmp.ne.s32.totalorder %s627, %s629
      %p636 = scmp.eq.s32.totalorder %s73, 1
      %p637 = por %p635, %p636
      %p638 = scmp.ne.s32.totalorder %s629, %s630
      %p639 = scmp.eq.s32.totalorder %s73, 0
      %p640 = por %p638, %p639
      %p641 = scmp.ne.s32.totalorder %s629, %s630
      %p642 = scmp.eq.s32.totalorder %s74, 1
      %p643 = por %p641, %p642
      %p645 = scmp.ne.s32.totalorder %s630, %s644
      %p646 = scmp.eq.s32.totalorder %s74, 0
      %p647 = por %p645, %p646
      %s649 = sadd.s32 %s648, 1
      %p652 = scmp.eq.s32.totalorder %s68, 1
      %p653 = scmp.ne.s32.totalorder %s648, %s650
      %p654 = scmp.eq.s32.totalorder %s68, 0
      %p655 = por %p653, %p654
      %p656 = scmp.ne.s32.totalorder %s648, %s650
      %p657 = scmp.eq.s32.totalorder %s73, 1
      %p658 = por %p656, %p657
      %p659 = scmp.ne.s32.totalorder %s650, %s651
      %p660 = scmp.eq.s32.totalorder %s73, 0
      %p661 = por %p659, %p660
      %p662 = scmp.ne.s32.totalorder %s650, %s651
      %p663 = scmp.eq.s32.totalorder %s74, 1
      %p664 = por %p662, %p663
      %p666 = scmp.ne.s32.totalorder %s651, %s665
      %p667 = scmp.eq.s32.totalorder %s74, 0
      %p668 = por %p666, %p667
      %s670 = sadd.s32 %s669, 1
      %p673 = scmp.eq.s32.totalorder %s68, 1
      %p674 = scmp.ne.s32.totalorder %s669, %s671
      %p675 = scmp.eq.s32.totalorder %s68, 0
      %p676 = por %p674, %p675
      %p677 = scmp.ne.s32.totalorder %s669, %s671
      %p678 = scmp.eq.s32.totalorder %s73, 1
      %p679 = por %p677, %p678
      %p680 = scmp.ne.s32.totalorder %s671, %s672
      %p681 = scmp.eq.s32.totalorder %s73, 0
      %p682 = por %p680, %p681
      %p683 = scmp.ne.s32.totalorder %s671, %s672
      %p684 = scmp.eq.s32.totalorder %s74, 1
      %p685 = por %p683, %p684
      %p687 = scmp.ne.s32.totalorder %s672, %s686
      %p688 = scmp.eq.s32.totalorder %s74, 0
      %p689 = por %p687, %p688
      %s690 = ssub.s32 %s68, %s75
      %p691 = scmp.eq.s32.totalorder %s690, 0
      %s693 = sadd.s32 %s692, 1
      %s694 = scalar_select %p691, %s692, %s693
      %p697 = pneg %p691
      %p698 = scmp.eq.s32.totalorder %s68, 1
      %p699 = por %p697, %p698
      %p700 = scmp.ne.s32.totalorder %s692, %s695
      %p701 = scmp.eq.s32.totalorder %s68, 0
      %p702 = por %p700, %p701
      %p703 = scmp.ne.s32.totalorder %s692, %s695
      %p704 = scmp.eq.s32.totalorder %s73, 1
      %p705 = por %p703, %p704
      %p706 = scmp.ne.s32.totalorder %s695, %s696
      %p707 = scmp.eq.s32.totalorder %s73, 0
      %p708 = por %p706, %p707
      %p709 = scmp.ne.s32.totalorder %s695, %s696
      %p710 = scmp.eq.s32.totalorder %s74, 1
      %p711 = por %p709, %p710
      %p713 = scmp.ne.s32.totalorder %s696, %s712
      %p714 = scmp.eq.s32.totalorder %s74, 0
      %p715 = por %p713, %p714
      %p716 = scmp.le.s32.totalorder 1, %s68
      %p717 = scmp.lt.s32.totalorder %s68, 3
      %p718 = pnand %p716, %p717
      %p719 = pneg %p718
      // Predicated region
      $region9: #{model_forward.1} parent=5 // pred_check
        _
      $region10: #{model_forward.1} parent=5 // pred_check_branch
        %721 = sbr.rel (%p718) target = $region12
      $region11: #{model_forward.1} parent=5 // pred_region
        %s722 = ssub.s32 %s68, 1
        // Predicated region
        $region13: #{model_forward.1} parent=11 // pred_check
          %p723 = pneg %p115
        $region14: #{model_forward.1} parent=11 // pred_check_branch
          %725 = sbr.rel (%p723) target = $region16
        $region15: #{model_forward.1} parent=11 // pred_region
          _
        $region16: #{model_forward.1} parent=11 // pred_fallthru
          _
        // Predicated region
        $region17: #{model_forward.1} parent=11 // pred_check
          %p726 = pneg %p136
        $region18: #{model_forward.1} parent=11 // pred_check_branch
          %728 = sbr.rel (%p726) target = $region20
        $region19: #{model_forward.1} parent=11 // pred_region
          _
        $region20: #{model_forward.1} parent=11 // pred_fallthru
          _
        // Predicated region
        $region21: #{model_forward.1} parent=11 // pred_check
          %p729 = pneg %p157
        $region22: #{model_forward.1} parent=11 // pred_check_branch
          %731 = sbr.rel (%p729) target = $region24
        $region23: #{model_forward.1} parent=11 // pred_region
          _
        $region24: #{model_forward.1} parent=11 // pred_fallthru
          _
        // Predicated region
        $region25: #{model_forward.1} parent=11 // pred_check
          %p732 = pneg %p178
        $region26: #{model_forward.1} parent=11 // pred_check_branch
          %734 = sbr.rel (%p732) target = $region28
        $region27: #{model_forward.1} parent=11 // pred_region
          _
        $region28: #{model_forward.1} parent=11 // pred_fallthru
          _
        // Predicated region
        $region29: #{model_forward.1} parent=11 // pred_check
          %p735 = pneg %p199
        $region30: #{model_forward.1} parent=11 // pred_check_branch
          %737 = sbr.rel (%p735) target = $region32
        $region31: #{model_forward.1} parent=11 // pred_region
          _
        $region32: #{model_forward.1} parent=11 // pred_fallthru
          _
        // Predicated region
        $region33: #{model_forward.1} parent=11 // pred_check
          %p738 = pneg %p220
        $region34: #{model_forward.1} parent=11 // pred_check_branch
          %740 = sbr.rel (%p738) target = $region36
        $region35: #{model_forward.1} parent=11 // pred_region
          _
        $region36: #{model_forward.1} parent=11 // pred_fallthru
          _
        // Predicated region
        $region37: #{model_forward.1} parent=11 // pred_check
          %p741 = pneg %p241
        $region38: #{model_forward.1} parent=11 // pred_check_branch
          %743 = sbr.rel (%p741) target = $region40
        $region39: #{model_forward.1} parent=11 // pred_region
          _
        $region40: #{model_forward.1} parent=11 // pred_fallthru
          _
        // Predicated region
        $region41: #{model_forward.1} parent=11 // pred_check
          %p744 = pneg %p262
        $region42: #{model_forward.1} parent=11 // pred_check_branch
          %746 = sbr.rel (%p744) target = $region44
        $region43: #{model_forward.1} parent=11 // pred_region
          _
        $region44: #{model_forward.1} parent=11 // pred_fallthru
          _
        // Predicated region
        $region45: #{model_forward.1} parent=11 // pred_check
          %p747 = pneg %p283
        $region46: #{model_forward.1} parent=11 // pred_check_branch
          %749 = sbr.rel (%p747) target = $region48
        $region47: #{model_forward.1} parent=11 // pred_region
          _
        $region48: #{model_forward.1} parent=11 // pred_fallthru
          _
        // Predicated region
        $region49: #{model_forward.1} parent=11 // pred_check
          %p750 = pneg %p304
        $region50: #{model_forward.1} parent=11 // pred_check_branch
          %752 = sbr.rel (%p750) target = $region52
        $region51: #{model_forward.1} parent=11 // pred_region
          _
        $region52: #{model_forward.1} parent=11 // pred_fallthru
          _
        // Predicated region
        $region53: #{model_forward.1} parent=11 // pred_check
          %p753 = pneg %p325
        $region54: #{model_forward.1} parent=11 // pred_check_branch
          %755 = sbr.rel (%p753) target = $region56
        $region55: #{model_forward.1} parent=11 // pred_region
          _
        $region56: #{model_forward.1} parent=11 // pred_fallthru
          _
        // Predicated region
        $region57: #{model_forward.1} parent=11 // pred_check
          %p756 = pneg %p346
        $region58: #{model_forward.1} parent=11 // pred_check_branch
          %758 = sbr.rel (%p756) target = $region60
        $region59: #{model_forward.1} parent=11 // pred_region
          _
        $region60: #{model_forward.1} parent=11 // pred_fallthru
          _
        // Predicated region
        $region61: #{model_forward.1} parent=11 // pred_check
          %p759 = pneg %p367
        $region62: #{model_forward.1} parent=11 // pred_check_branch
          %761 = sbr.rel (%p759) target = $region64
        $region63: #{model_forward.1} parent=11 // pred_region
          _
        $region64: #{model_forward.1} parent=11 // pred_fallthru
          _
        // Predicated region
        $region65: #{model_forward.1} parent=11 // pred_check
          %p762 = pneg %p388
        $region66: #{model_forward.1} parent=11 // pred_check_branch
          %764 = sbr.rel (%p762) target = $region68
        $region67: #{model_forward.1} parent=11 // pred_region
          _
        $region68: #{model_forward.1} parent=11 // pred_fallthru
          _
        // Predicated region
        $region69: #{model_forward.1} parent=11 // pred_check
          %p765 = pneg %p409
        $region70: #{model_forward.1} parent=11 // pred_check_branch
          %767 = sbr.rel (%p765) target = $region72
        $region71: #{model_forward.1} parent=11 // pred_region
          _
        $region72: #{model_forward.1} parent=11 // pred_fallthru
          _
        // Predicated region
        $region73: #{model_forward.1} parent=11 // pred_check
          %p768 = pneg %p430
        $region74: #{model_forward.1} parent=11 // pred_check_branch
          %770 = sbr.rel (%p768) target = $region76
        $region75: #{model_forward.1} parent=11 // pred_region
          _
        $region76: #{model_forward.1} parent=11 // pred_fallthru
          _
        // Predicated region
        $region77: #{model_forward.1} parent=11 // pred_check
          %p771 = pneg %p451
        $region78: #{model_forward.1} parent=11 // pred_check_branch
          %773 = sbr.rel (%p771) target = $region80
        $region79: #{model_forward.1} parent=11 // pred_region
          _
        $region80: #{model_forward.1} parent=11 // pred_fallthru
          _
        // Predicated region
        $region81: #{model_forward.1} parent=11 // pred_check
          %p774 = pneg %p472
        $region82: #{model_forward.1} parent=11 // pred_check_branch
          %776 = sbr.rel (%p774) target = $region84
        $region83: #{model_forward.1} parent=11 // pred_region
          _
        $region84: #{model_forward.1} parent=11 // pred_fallthru
          _
        // Predicated region
        $region85: #{model_forward.1} parent=11 // pred_check
          %p777 = pneg %p493
        $region86: #{model_forward.1} parent=11 // pred_check_branch
          %779 = sbr.rel (%p777) target = $region88
        $region87: #{model_forward.1} parent=11 // pred_region
          _
        $region88: #{model_forward.1} parent=11 // pred_fallthru
          _
        // Predicated region
        $region89: #{model_forward.1} parent=11 // pred_check
          %p780 = pneg %p514
        $region90: #{model_forward.1} parent=11 // pred_check_branch
          %782 = sbr.rel (%p780) target = $region92
        $region91: #{model_forward.1} parent=11 // pred_region
          _
        $region92: #{model_forward.1} parent=11 // pred_fallthru
          _
        // Predicated region
        $region93: #{model_forward.1} parent=11 // pred_check
          %p783 = pneg %p535
        $region94: #{model_forward.1} parent=11 // pred_check_branch
          %785 = sbr.rel (%p783) target = $region96
        $region95: #{model_forward.1} parent=11 // pred_region
          _
        $region96: #{model_forward.1} parent=11 // pred_fallthru
          _
        // Predicated region
        $region97: #{model_forward.1} parent=11 // pred_check
          %p786 = pneg %p556
        $region98: #{model_forward.1} parent=11 // pred_check_branch
          %788 = sbr.rel (%p786) target = $region100
        $region99: #{model_forward.1} parent=11 // pred_region
          _
        $region100: #{model_forward.1} parent=11 // pred_fallthru
          _
        // Predicated region
        $region101: #{model_forward.1} parent=11 // pred_check
          %p789 = pneg %p577
        $region102: #{model_forward.1} parent=11 // pred_check_branch
          %791 = sbr.rel (%p789) target = $region104
        $region103: #{model_forward.1} parent=11 // pred_region
          _
        $region104: #{model_forward.1} parent=11 // pred_fallthru
          _
        // Predicated region
        $region105: #{model_forward.1} parent=11 // pred_check
          %p792 = pneg %p598
        $region106: #{model_forward.1} parent=11 // pred_check_branch
          %794 = sbr.rel (%p792) target = $region108
        $region107: #{model_forward.1} parent=11 // pred_region
          _
        $region108: #{model_forward.1} parent=11 // pred_fallthru
          _
        // Predicated region
        $region109: #{model_forward.1} parent=11 // pred_check
          %p795 = pneg %p619
        $region110: #{model_forward.1} parent=11 // pred_check_branch
          %797 = sbr.rel (%p795) target = $region112
        $region111: #{model_forward.1} parent=11 // pred_region
          _
        $region112: #{model_forward.1} parent=11 // pred_fallthru
          _
        // Predicated region
        $region113: #{model_forward.1} parent=11 // pred_check
          %p798 = pneg %p640
        $region114: #{model_forward.1} parent=11 // pred_check_branch
          %800 = sbr.rel (%p798) target = $region116
        $region115: #{model_forward.1} parent=11 // pred_region
          _
        $region116: #{model_forward.1} parent=11 // pred_fallthru
          _
        // Predicated region
        $region117: #{model_forward.1} parent=11 // pred_check
          %p801 = pneg %p661
        $region118: #{model_forward.1} parent=11 // pred_check_branch
          %803 = sbr.rel (%p801) target = $region120
        $region119: #{model_forward.1} parent=11 // pred_region
          _
        $region120: #{model_forward.1} parent=11 // pred_fallthru
          _
        // Predicated region
        $region121: #{model_forward.1} parent=11 // pred_check
          %p804 = pneg %p682
        $region122: #{model_forward.1} parent=11 // pred_check_branch
          %806 = sbr.rel (%p804) target = $region124
        $region123: #{model_forward.1} parent=11 // pred_region
          _
        $region124: #{model_forward.1} parent=11 // pred_fallthru
          _
      $region12: #{model_forward.1} parent=5 // pred_fallthru
        _
      %p807 = scmp.lt.s32.totalorder %s68, 2
      // Predicated region
      $region125: #{model_forward.1} parent=5 // pred_check
        %p808 = pneg %p807
      $region126: #{model_forward.1} parent=5 // pred_check_branch
        %810 = sbr.rel (%p808) target = $region128
      $region127: #{model_forward.1} parent=5 // pred_region
        // Predicated region
        $region129: #{model_forward.1} parent=127 // pred_check
          %p811 = pneg %p88
        $region130: #{model_forward.1} parent=127 // pred_check_branch
          %813 = sbr.rel (%p811) target = $region132
        $region131: #{model_forward.1} parent=127 // pred_region
          %p814 = scmp.lt.s32.totalorder %s68, 1
          %s815 = scalar_select %p814, %s68, 1
          %s816 = smul.addr %s815, 6
          %s817 = smul.addr %s816, 8
          %s818 = scalar_lea.vmem %s1, %s817
        $region132: #{model_forward.1} parent=127 // pred_fallthru
          _
      $region128: #{model_forward.1} parent=5 // pred_fallthru
        _
      %p819 = scmp.le.s32.totalorder 1, %s68
      %p820 = scmp.lt.s32.totalorder %s68, 3
      %p821 = pnand %p819, %p820
      %p822 = pneg %p821
      // Predicated region
      $region133: #{model_forward.1} parent=5 // pred_check
        _
      $region134: #{model_forward.1} parent=5 // pred_check_branch
        %824 = sbr.rel (%p821) target = $region136
      $region135: #{model_forward.1} parent=5 // pred_region
        %s825 = ssub.s32 %s68, 1
        %p826 = scmp.lt.s32.totalorder %s73, 1
        %s827 = scalar_select %p826, %s73, 1
        %s828 = smul.addr %s827, 6
        %s829 = smul.addr %s828, 8
        %s830 = scalar_lea.vmem %s1, %s829
        %p831 = pneg %p94
        %p832 = pneg %p91
        %p833 = pneg %p115
        %p834 = pneg %p112
        %p835 = pneg %p136
        %p836 = pneg %p133
        %p837 = pneg %p157
        %p838 = pneg %p154
        %p839 = pneg %p178
        %p840 = pneg %p175
        %p841 = pneg %p199
        %p842 = pneg %p196
        %p843 = pneg %p220
        %p844 = pneg %p217
        %p845 = pneg %p241
        %p846 = pneg %p238
        %p847 = pneg %p262
        %p848 = pneg %p259
        %p849 = pneg %p283
        %p850 = pneg %p280
        %p851 = pneg %p304
        %p852 = pneg %p301
        %p853 = pneg %p325
        %p854 = pneg %p322
        %p855 = pneg %p346
        %p856 = pneg %p343
        %p857 = pneg %p367
        %p858 = pneg %p364
        %p859 = pneg %p388
        %p860 = pneg %p385
        %p861 = pneg %p409
        %p862 = pneg %p406
        %p863 = pneg %p430
        %p864 = pneg %p427
        %p865 = pneg %p451
        %p866 = pneg %p448
        %p867 = pneg %p472
        %p868 = pneg %p469
        %p869 = pneg %p493
        %p870 = pneg %p490
        %p871 = pneg %p514
        %p872 = pneg %p511
        %p873 = pneg %p535
        %p874 = pneg %p532
        %p875 = pneg %p556
        %p876 = pneg %p553
        %p877 = pneg %p577
        %p878 = pneg %p574
        %p879 = pneg %p598
        %p880 = pneg %p595
        %p881 = pneg %p619
        %p882 = pneg %p616
        %p883 = pneg %p640
        %p884 = pneg %p637
        %p885 = pneg %p661
        %p886 = pneg %p658
        %p887 = pneg %p682
        %p888 = pneg %p679
        %p889 = pneg %p708
        %p890 = pneg %p705
        %s891 = sand.u32 %s695, 1
        %s892 = scalar_lea.sflag [#allocation3], %s891
        %s893 = sand.u32 %s695, 1
        %s894 = scalar_lea.vmem [#allocation2], %s893
        %p895 = scmp.lt.s32.totalorder %s73, 1
        %s896 = scalar_select %p895, %s73, 1
        %s897 = smul.addr %s896, 6
        %s898 = smul.addr %s897, 8
        %s899 = scalar_lea.vmem %s1, %s898
        %v901 = vld [vmem:[%s899] sm:$0x1f]
        %v902 = vld [vmem:[%s899 + $0x8] sm:$0x1f]
        %v903 = vld [vmem:[%s899 + $0x10] sm:$0x1f]
        %v904 = vld [vmem:[%s899 + $0x18] sm:$0x1f]
        %v905 = vld [vmem:[%s899 + $0x20] sm:$0x1f]
        %v906 = vld [vmem:[%s899 + $0x28] sm:$0x1f]
        %v907 = vpack.c.bf16 %v901, %v901
        %v908 = vpack.c.bf16 %v902, %v902
        %v909 = vpack.c.bf16 %v903, %v903
        %v910 = vpack.c.bf16 %v904, %v904
        %v911 = vpack.c.bf16 %v905, %v905
        %v912 = vpack.c.bf16 %v906, %v906
        %v913 = vld [vmem:[%s3] sm:$0xf]
        %v914 = vld [vmem:[%s3 + $0x4] sm:$0xf]
        %v915 = vld [vmem:[%s3 + $0x8] sm:$0xf]
        %v916 = vld [vmem:[%s3 + $0xc] sm:$0xf]
        %v917 = vld [vmem:[%s3 + $0x10] sm:$0xf]
        %v918 = vld [vmem:[%s3 + $0x14] sm:$0xf]
        %v919 = vld [vmem:[%s3 + $0x18] sm:$0xf]
        %v920 = vld [vmem:[%s3 + $0x1c] sm:$0xf]
        %v921 = vld [vmem:[%s3 + $0x20] sm:$0xf]
        %v922 = vld [vmem:[%s3 + $0x24] sm:$0xf]
        %v923 = vld [vmem:[%s3 + $0x28] sm:$0xf]
        %v924 = vld [vmem:[%s3 + $0x2c] sm:$0xf]
        %v925 = vld [vmem:[%s3 + $0x30] sm:$0xf]
        %v926 = vld [vmem:[%s3 + $0x34] sm:$0xf]
        %v927 = vld [vmem:[%s3 + $0x38] sm:$0xf]
        %v928 = vld [vmem:[%s3 + $0x3c] sm:$0xf]
        %v929 = vld [vmem:[%s3 + $0x40] sm:$0xf]
        %v930 = vld [vmem:[%s3 + $0x44] sm:$0xf]
        %v931 = vld [vmem:[%s3 + $0x48] sm:$0xf]
        %v932 = vld [vmem:[%s3 + $0x4c] sm:$0xf]
        %v933 = vld [vmem:[%s3 + $0x50] sm:$0xf]
        %v934 = vld [vmem:[%s3 + $0x54] sm:$0xf]
        %v935 = vld [vmem:[%s3 + $0x58] sm:$0xf]
        %v936 = vld [vmem:[%s3 + $0x5c] sm:$0xf]
        %v937 = vld [vmem:[%s3 + $0x60] sm:$0xf]
        %v938 = vld [vmem:[%s3 + $0x64] sm:$0xf]
        %v939 = vld [vmem:[%s3 + $0x68] sm:$0xf]
        %v940 = vld [vmem:[%s3 + $0x6c] sm:$0xf]
        %v941 = vld [vmem:[%s3 + $0x70] sm:$0xf]
        %v942 = vld [vmem:[%s3 + $0x74] sm:$0xf]
        %v943 = vld [vmem:[%s3 + $0x78] sm:$0xf]
        %v944 = vld [vmem:[%s3 + $0x7c] sm:$0xf]
        %v945 = vld [vmem:[%s3 + $0x80] sm:$0xf]
        %v946 = vld [vmem:[%s3 + $0x84] sm:$0xf]
        %v947 = vld [vmem:[%s3 + $0x88] sm:$0xf]
        %v948 = vld [vmem:[%s3 + $0x8c] sm:$0xf]
        %v949 = vld [vmem:[%s3 + $0x90] sm:$0xf]
        %v950 = vld [vmem:[%s3 + $0x94] sm:$0xf]
        %v951 = vld [vmem:[%s3 + $0x98] sm:$0xf]
        %v952 = vld [vmem:[%s3 + $0x9c] sm:$0xf]
        %v953 = vld [vmem:[%s3 + $0xa0] sm:$0xf]
        %v954 = vld [vmem:[%s3 + $0xa4] sm:$0xf]
        %v955 = vld [vmem:[%s3 + $0xa8] sm:$0xf]
        %v956 = vld [vmem:[%s3 + $0xac] sm:$0xf]
        %v957 = vld [vmem:[%s3 + $0xb0] sm:$0xf]
        %v958 = vld [vmem:[%s3 + $0xb4] sm:$0xf]
        %v959 = vld [vmem:[%s3 + $0xb8] sm:$0xf]
        %v960 = vld [vmem:[%s3 + $0xbc] sm:$0xf]
        %v961 = vld [vmem:[%s3 + $0xc0] sm:$0xf]
        %v962 = vld [vmem:[%s3 + $0xc4] sm:$0xf]
        %v963 = vld [vmem:[%s3 + $0xc8] sm:$0xf]
        %v964 = vld [vmem:[%s3 + $0xcc] sm:$0xf]
        %v965 = vld [vmem:[%s3 + $0xd0] sm:$0xf]
        %v966 = vld [vmem:[%s3 + $0xd4] sm:$0xf]
        %v967 = vld [vmem:[%s3 + $0xd8] sm:$0xf]
        %v968 = vld [vmem:[%s3 + $0xdc] sm:$0xf]
        %v969 = vld [vmem:[%s3 + $0xe0] sm:$0xf]
        %v970 = vld [vmem:[%s3 + $0xe4] sm:$0xf]
        %v971 = vld [vmem:[%s3 + $0xe8] sm:$0xf]
        %v972 = vld [vmem:[%s3 + $0xec] sm:$0xf]
        %v973 = vld [vmem:[%s3 + $0xf0] sm:$0xf]
        %v974 = vld [vmem:[%s3 + $0xf4] sm:$0xf]
        %v975 = vld [vmem:[%s3 + $0xf8] sm:$0xf]
        %v976 = vld [vmem:[%s3 + $0xfc] sm:$0xf]
        %v977 = vld [vmem:[%s3 + $0x100] sm:$0xf]
        %v978 = vld [vmem:[%s3 + $0x104] sm:$0xf]
        %v979 = vld [vmem:[%s3 + $0x108] sm:$0xf]
        %v980 = vld [vmem:[%s3 + $0x10c] sm:$0xf]
        %v981 = vld [vmem:[%s3 + $0x110] sm:$0xf]
        %v982 = vld [vmem:[%s3 + $0x114] sm:$0xf]
        %v983 = vld [vmem:[%s3 + $0x118] sm:$0xf]
        %v984 = vld [vmem:[%s3 + $0x11c] sm:$0xf]
        %v985 = vld [vmem:[%s3 + $0x120] sm:$0xf]
        %v986 = vld [vmem:[%s3 + $0x124] sm:$0xf]
        %v987 = vld [vmem:[%s3 + $0x128] sm:$0xf]
        %v988 = vld [vmem:[%s3 + $0x12c] sm:$0xf]
        %v989 = vld [vmem:[%s3 + $0x130] sm:$0xf]
        %v990 = vld [vmem:[%s3 + $0x134] sm:$0xf]
        %v991 = vld [vmem:[%s3 + $0x138] sm:$0xf]
        %v992 = vld [vmem:[%s3 + $0x13c] sm:$0xf]
        %v993 = vld [vmem:[%s3 + $0x140] sm:$0xf]
        %v994 = vld [vmem:[%s3 + $0x144] sm:$0xf]
        %v995 = vld [vmem:[%s3 + $0x148] sm:$0xf]
        %v996 = vld [vmem:[%s3 + $0x14c] sm:$0xf]
        %v997 = vld [vmem:[%s3 + $0x150] sm:$0xf]
        %v998 = vld [vmem:[%s3 + $0x154] sm:$0xf]
        %v999 = vld [vmem:[%s3 + $0x158] sm:$0xf]
        %v1000 = vld [vmem:[%s3 + $0x15c] sm:$0xf]
        %v1001 = vld [vmem:[%s3 + $0x160] sm:$0xf]
        %v1002 = vld [vmem:[%s3 + $0x164] sm:$0xf]
        %v1003 = vld [vmem:[%s3 + $0x168] sm:$0xf]
        %v1004 = vld [vmem:[%s3 + $0x16c] sm:$0xf]
        %v1005 = vld [vmem:[%s3 + $0x170] sm:$0xf]
        %v1006 = vld [vmem:[%s3 + $0x174] sm:$0xf]
        %v1007 = vld [vmem:[%s3 + $0x178] sm:$0xf]
        %v1008 = vld [vmem:[%s3 + $0x17c] sm:$0xf]
        %v1009 = vld [vmem:[%s5] sm:$0x1f]
        %v1106 = vunpack.c.l.b16 %v913
        %v1107 = vunpack.c.l.b16 %v914
        %v1108 = vunpack.c.l.b16 %v915
        %v1109 = vunpack.c.l.b16 %v916
        %v1110 = vunpack.c.l.b16 %v917
        %v1111 = vunpack.c.l.b16 %v918
        %v1112 = vunpack.c.l.b16 %v919
        %v1113 = vunpack.c.l.b16 %v920
        %v1114 = vunpack.c.l.b16 %v921
        %v1115 = vunpack.c.l.b16 %v922
        %v1116 = vunpack.c.l.b16 %v923
        %v1117 = vunpack.c.l.b16 %v924
        %v1118 = vunpack.c.l.b16 %v925
        %v1119 = vunpack.c.l.b16 %v926
        %v1120 = vunpack.c.l.b16 %v927
        %v1121 = vunpack.c.l.b16 %v928
        %v1122 = vunpack.c.l.b16 %v929
        %v1123 = vunpack.c.l.b16 %v930
        %v1124 = vunpack.c.l.b16 %v931
        %v1125 = vunpack.c.l.b16 %v932
        %v1126 = vunpack.c.l.b16 %v933
        %v1127 = vunpack.c.l.b16 %v934
        %v1128 = vunpack.c.l.b16 %v935
        %v1129 = vunpack.c.l.b16 %v936
        %v1130 = vunpack.c.l.b16 %v937
        %v1131 = vunpack.c.l.b16 %v938
        %v1132 = vunpack.c.l.b16 %v939
        %v1133 = vunpack.c.l.b16 %v940
        %v1134 = vunpack.c.l.b16 %v941
        %v1135 = vunpack.c.l.b16 %v942
        %v1136 = vunpack.c.l.b16 %v943
        %v1137 = vunpack.c.l.b16 %v944
        %v1138 = vunpack.c.l.b16 %v945
        %v1139 = vunpack.c.l.b16 %v946
        %v1140 = vunpack.c.l.b16 %v947
        %v1141 = vunpack.c.l.b16 %v948
        %v1142 = vunpack.c.l.b16 %v949
        %v1143 = vunpack.c.l.b16 %v950
        %v1144 = vunpack.c.l.b16 %v951
        %v1145 = vunpack.c.l.b16 %v952
        %v1146 = vunpack.c.l.b16 %v953
        %v1147 = vunpack.c.l.b16 %v954
        %v1148 = vunpack.c.l.b16 %v955
        %v1149 = vunpack.c.l.b16 %v956
        %v1150 = vunpack.c.l.b16 %v957
        %v1151 = vunpack.c.l.b16 %v958
        %v1152 = vunpack.c.l.b16 %v959
        %v1153 = vunpack.c.l.b16 %v960
        %v1154 = vunpack.c.l.b16 %v961
        %v1155 = vunpack.c.l.b16 %v962
        %v1156 = vunpack.c.l.b16 %v963
        %v1157 = vunpack.c.l.b16 %v964
        %v1158 = vunpack.c.l.b16 %v965
        %v1159 = vunpack.c.l.b16 %v966
        %v1160 = vunpack.c.l.b16 %v967
        %v1161 = vunpack.c.l.b16 %v968
        %v1162 = vunpack.c.l.b16 %v969
        %v1163 = vunpack.c.l.b16 %v970
        %v1164 = vunpack.c.l.b16 %v971
        %v1165 = vunpack.c.l.b16 %v972
        %v1166 = vunpack.c.l.b16 %v973
        %v1167 = vunpack.c.l.b16 %v974
        %v1168 = vunpack.c.l.b16 %v975
        %v1169 = vunpack.c.l.b16 %v976
        %v1170 = vunpack.c.l.b16 %v977
        %v1171 = vunpack.c.l.b16 %v978
        %v1172 = vunpack.c.l.b16 %v979
        %v1173 = vunpack.c.l.b16 %v980
        %v1174 = vunpack.c.l.b16 %v981
        %v1175 = vunpack.c.l.b16 %v982
        %v1176 = vunpack.c.l.b16 %v983
        %v1177 = vunpack.c.l.b16 %v984
        %v1178 = vunpack.c.l.b16 %v985
        %v1179 = vunpack.c.l.b16 %v986
        %v1180 = vunpack.c.l.b16 %v987
        %v1181 = vunpack.c.l.b16 %v988
        %v1182 = vunpack.c.l.b16 %v989
        %v1183 = vunpack.c.l.b16 %v990
        %v1184 = vunpack.c.l.b16 %v991
        %v1185 = vunpack.c.l.b16 %v992
        %v1186 = vunpack.c.l.b16 %v993
        %v1187 = vunpack.c.l.b16 %v994
        %v1188 = vunpack.c.l.b16 %v995
        %v1189 = vunpack.c.l.b16 %v996
        %v1190 = vunpack.c.l.b16 %v997
        %v1191 = vunpack.c.l.b16 %v998
        %v1192 = vunpack.c.l.b16 %v999
        %v1193 = vunpack.c.l.b16 %v1000
        %v1194 = vunpack.c.l.b16 %v1001
        %v1195 = vunpack.c.l.b16 %v1002
        %v1196 = vunpack.c.l.b16 %v1003
        %v1197 = vunpack.c.l.b16 %v1004
        %v1198 = vunpack.c.l.b16 %v1005
        %v1199 = vunpack.c.l.b16 %v1006
        %v1200 = vunpack.c.l.b16 %v1007
        %v1201 = vunpack.c.l.b16 %v1008
        %v1202 = vpack.c.b16 %v1107, %v1106
        %v1203 = vpack.c.b16 %v1109, %v1108
        %v1204 = vpack.c.b16 %v1111, %v1110
        %v1205 = vpack.c.b16 %v1113, %v1112
        %v1206 = vpack.c.b16 %v1115, %v1114
        %v1207 = vpack.c.b16 %v1117, %v1116
        %v1208 = vpack.c.b16 %v1119, %v1118
        %v1209 = vpack.c.b16 %v1121, %v1120
        %v1210 = vpack.c.b16 %v1123, %v1122
        %v1211 = vpack.c.b16 %v1125, %v1124
        %v1212 = vpack.c.b16 %v1127, %v1126
        %v1213 = vpack.c.b16 %v1129, %v1128
        %v1214 = vpack.c.b16 %v1131, %v1130
        %v1215 = vpack.c.b16 %v1133, %v1132
        %v1216 = vpack.c.b16 %v1135, %v1134
        %v1217 = vpack.c.b16 %v1137, %v1136
        %v1218 = vpack.c.b16 %v1139, %v1138
        %v1219 = vpack.c.b16 %v1141, %v1140
        %v1220 = vpack.c.b16 %v1143, %v1142
        %v1221 = vpack.c.b16 %v1145, %v1144
        %v1222 = vpack.c.b16 %v1147, %v1146
        %v1223 = vpack.c.b16 %v1149, %v1148
        %v1224 = vpack.c.b16 %v1151, %v1150
        %v1225 = vpack.c.b16 %v1153, %v1152
        %v1226 = vpack.c.b16 %v1155, %v1154
        %v1227 = vpack.c.b16 %v1157, %v1156
        %v1228 = vpack.c.b16 %v1159, %v1158
        %v1229 = vpack.c.b16 %v1161, %v1160
        %v1230 = vpack.c.b16 %v1163, %v1162
        %v1231 = vpack.c.b16 %v1165, %v1164
        %v1232 = vpack.c.b16 %v1167, %v1166
        %v1233 = vpack.c.b16 %v1169, %v1168
        %v1234 = vpack.c.b16 %v1171, %v1170
        %v1235 = vpack.c.b16 %v1173, %v1172
        %v1236 = vpack.c.b16 %v1175, %v1174
        %v1237 = vpack.c.b16 %v1177, %v1176
        %v1238 = vpack.c.b16 %v1179, %v1178
        %v1239 = vpack.c.b16 %v1181, %v1180
        %v1240 = vpack.c.b16 %v1183, %v1182
        %v1241 = vpack.c.b16 %v1185, %v1184
        %v1242 = vpack.c.b16 %v1187, %v1186
        %v1243 = vpack.c.b16 %v1189, %v1188
        %v1244 = vpack.c.b16 %v1191, %v1190
        %v1245 = vpack.c.b16 %v1193, %v1192
        %v1246 = vpack.c.b16 %v1195, %v1194
        %v1247 = vpack.c.b16 %v1197, %v1196
        %v1248 = vpack.c.b16 %v1199, %v1198
        %v1249 = vpack.c.b16 %v1201, %v1200
        %1298 = vmatpush.bf16.msra.mxu0 %v1209
        %1299 = vmatpush.bf16.msra.mxu0 %v1208
        %1300 = vmatpush.bf16.msra.mxu0 %v1207
        %1301 = vmatpush.bf16.msra.mxu0 %v1206
        %1302 = vmatpush.bf16.msra.mxu0 %v1205
        %1303 = vmatpush.bf16.msra.mxu0 %v1204
        %1304 = vmatpush.bf16.msra.mxu0 %v1203
        %1305 = vmatpush.bf16.msra.mxu0 %v1202
        %1306 = vmatmul.bf16.gmra.mxu0 %v907
        %v1307 = vpop.f32.mrf.mxu0
        %v1308 = vadd.f32 %v1009, %v1307
        %v1309 = vpop.f32.mrf.mxu0
        %1310 = vdwg.mxu0
        %1311 = vmatpush.bf16.msra.mxu0 %v1217
        %1312 = vmatpush.bf16.msra.mxu0 %v1216
        %1313 = vmatpush.bf16.msra.mxu0 %v1215
        %1314 = vmatpush.bf16.msra.mxu0 %v1214
        %1315 = vmatpush.bf16.msra.mxu0 %v1213
        %1316 = vmatpush.bf16.msra.mxu0 %v1212
        %1317 = vmatpush.bf16.msra.mxu0 %v1211
        %1318 = vmatpush.bf16.msra.mxu0 %v1210
        %1319 = vmatmul.bf16.gmra.mxu0 %v908
        %v1320 = vpop.f32.mrf.mxu0
        %v1321 = vadd.f32 %v1308, %v1320
        %v1322 = vpop.f32.mrf.mxu0
        %1323 = vdwg.mxu0
        %1324 = vmatpush.bf16.msra.mxu0 %v1225
        %1325 = vmatpush.bf16.msra.mxu0 %v1224
        %1326 = vmatpush.bf16.msra.mxu0 %v1223
        %1327 = vmatpush.bf16.msra.mxu0 %v1222
        %1328 = vmatpush.bf16.msra.mxu0 %v1221
        %1329 = vmatpush.bf16.msra.mxu0 %v1220
        %1330 = vmatpush.bf16.msra.mxu0 %v1219
        %1331 = vmatpush.bf16.msra.mxu0 %v1218
        %1332 = vmatmul.bf16.gmra.mxu0 %v909
        %v1333 = vpop.f32.mrf.mxu0
        %v1334 = vadd.f32 %v1321, %v1333
        %v1335 = vpop.f32.mrf.mxu0
        %1336 = vdwg.mxu0
        %1337 = vmatpush.bf16.msra.mxu0 %v1233
        %1338 = vmatpush.bf16.msra.mxu0 %v1232
        %1339 = vmatpush.bf16.msra.mxu0 %v1231
        %1340 = vmatpush.bf16.msra.mxu0 %v1230
        %1341 = vmatpush.bf16.msra.mxu0 %v1229
        %1342 = vmatpush.bf16.msra.mxu0 %v1228
        %1343 = vmatpush.bf16.msra.mxu0 %v1227
        %1344 = vmatpush.bf16.msra.mxu0 %v1226
        %1345 = vmatmul.bf16.gmra.mxu0 %v910
        %v1346 = vpop.f32.mrf.mxu0
        %v1347 = vadd.f32 %v1334, %v1346
        %v1348 = vpop.f32.mrf.mxu0
        %1349 = vdwg.mxu0
        %1350 = vmatpush.bf16.msra.mxu0 %v1241
        %1351 = vmatpush.bf16.msra.mxu0 %v1240
        %1352 = vmatpush.bf16.msra.mxu0 %v1239
        %1353 = vmatpush.bf16.msra.mxu0 %v1238
        %1354 = vmatpush.bf16.msra.mxu0 %v1237
        %1355 = vmatpush.bf16.msra.mxu0 %v1236
        %1356 = vmatpush.bf16.msra.mxu0 %v1235
        %1357 = vmatpush.bf16.msra.mxu0 %v1234
        %1358 = vmatmul.bf16.gmra.mxu0 %v911
        %v1359 = vpop.f32.mrf.mxu0
        %v1360 = vadd.f32 %v1347, %v1359
        %v1361 = vpop.f32.mrf.mxu0
        %1362 = vdwg.mxu0
        %1363 = vmatpush.bf16.msra.mxu0 %v1249
        %1364 = vmatpush.bf16.msra.mxu0 %v1248
        %1365 = vmatpush.bf16.msra.mxu0 %v1247
        %1366 = vmatpush.bf16.msra.mxu0 %v1246
        %1367 = vmatpush.bf16.msra.mxu0 %v1245
        %1368 = vmatpush.bf16.msra.mxu0 %v1244
        %1369 = vmatpush.bf16.msra.mxu0 %v1243
        %1370 = vmatpush.bf16.msra.mxu0 %v1242
        %1371 = vmatmul.bf16.gmra.mxu0 %v912
        %v1372 = vpop.f32.mrf.mxu0
        %v1373 = vadd.f32 %v1360, %v1372
        %v1374 = vpop.f32.mrf.mxu0
        %1375 = vdwg.mxu0
        %v1376 = vlaneseq
        %v1377 = vand.u32 %v1376, 127
        %v1378 = vld [vmem:[%s7] sm:$0x1]
        %v1379 = vld [vmem:[%s9] sm:$0x1]
        %vm1380 = vcmask 520192
        %v1381 = vsel %vm1380, %v1373, 0.0
        %1382 = vadd.xlane.f32.xlu0 %v1381
        %v1383 = vpop.xlane.xlu0 %1382
        %v1384 = vrcp.pop 64.0
        %v1385 = vmul.f32 64.0, %v1384
        %v1386 = vsub.f32 1.0, %v1385
        %v1387 = vmul.f32 %v1384, %v1386
        %v1388 = vadd.f32 %v1384, %v1387
        %vm1389 = vweird.f32 %v1384
        %v1390 = vsel %vm1389, %v1384, %v1388
        %v1391 = vmul.f32 %v1383, %v1390
        %v1392 = vsub.f32 %v1373, %v1391
        %v1393 = vmul.f32 %v1392, %v1392
        %v1394 = vsel %vm1380, %v1393, 0.0
        %1395 = vadd.xlane.f32.xlu0 %v1394
        %v1396 = vpop.xlane.xlu0 %1395
        %v1397 = vmul.f32 %v1396, %v1390
        %v1398 = vadd.f32 %v1397, 1e-06
        %v1399 = vrsqrt.pop %v1398
        %v1400 = vmul.f32 %v1399, %v1398
        %v1401 = vmul.f32 %v1400, %v1399
        %v1402 = vmul.f32 0.5, %v1401
        %v1403 = vsub.f32 1.5, %v1402
        %v1404 = vmul.f32 %v1399, %v1403
        %vm1405 = vweird.f32 %v1398
        %vm1406 = vweird.f32 %v1399
        %vm1407 = vmor %vm1405, %vm1406
        %v1408 = vsel %vm1407, %v1399, %v1404
        %v1409 = vmul.f32 %v1392, %v1408
        %v1411 = vperm.slane %v1378, 0
        %v1413 = vmul.f32 %v1409, %v1411
        %v1415 = vperm.slane %v1379, 0
        %v1417 = vadd.f32 %v1413, %v1415
        %v1418 = vpack.c.bf16 %v1417, %v1417
        %v1419 = vld [vmem:[%s11] sm:$0xf]
        %v1420 = vld [vmem:[%s11 + $0x4] sm:$0xf]
        %v1421 = vld [vmem:[%s11 + $0x8] sm:$0xf]
        %v1422 = vld [vmem:[%s11 + $0xc] sm:$0xf]
        %v1423 = vld [vmem:[%s11 + $0x10] sm:$0xf]
        %v1424 = vld [vmem:[%s11 + $0x14] sm:$0xf]
        %v1425 = vld [vmem:[%s11 + $0x18] sm:$0xf]
        %v1426 = vld [vmem:[%s11 + $0x1c] sm:$0xf]
        %v1427 = vld [vmem:[%s13] sm:$0x1]
        %v1429 = vperm.slane %v1427, 0
        %v1439 = vunpack.c.l.b16 %v1419
        %v1440 = vunpack.c.l.b16 %v1420
        %v1441 = vunpack.c.l.b16 %v1421
        %v1442 = vunpack.c.l.b16 %v1422
        %v1443 = vunpack.c.l.b16 %v1423
        %v1444 = vunpack.c.l.b16 %v1424
        %v1445 = vunpack.c.l.b16 %v1425
        %v1446 = vunpack.c.l.b16 %v1426
        %v1447 = vpack.c.b16 %v1440, %v1439
        %v1448 = vpack.c.b16 %v1442, %v1441
        %v1449 = vpack.c.b16 %v1444, %v1443
        %v1450 = vpack.c.b16 %v1446, %v1445
        %vm1455 = vcmask 523264
        %v1457 = vsel %vm1455, %v1418, 0
        %1459 = vmatpush.bf16.msra.mxu0 0
        %1460 = vmatpush.bf16.msra.mxu0 0
        %1461 = vmatpush.bf16.msra.mxu0 0
        %1462 = vmatpush.bf16.msra.mxu0 0
        %1463 = vmatpush.bf16.msra.mxu0 %v1450
        %1464 = vmatpush.bf16.msra.mxu0 %v1449
        %1465 = vmatpush.bf16.msra.mxu0 %v1448
        %1466 = vmatpush.bf16.msra.mxu0 %v1447
        %1467 = vmatmul.bf16.gmra.mxu0 %v1457
        %v1468 = vpop.f32.mrf.mxu0
        %v1469 = vadd.f32 %v1429, %v1468
        %v1470 = vpop.f32.mrf.mxu0
        %1471 = vdwg.mxu0
        %v1472 = vld [vmem:[%s15] sm:$0xf]
        %v1473 = vld [vmem:[%s15 + $0x4] sm:$0xf]
        %v1474 = vld [vmem:[%s15 + $0x8] sm:$0xf]
        %v1475 = vld [vmem:[%s15 + $0xc] sm:$0xf]
        %v1476 = vld [vmem:[%s15 + $0x10] sm:$0xf]
        %v1477 = vld [vmem:[%s15 + $0x14] sm:$0xf]
        %v1478 = vld [vmem:[%s15 + $0x18] sm:$0xf]
        %v1479 = vld [vmem:[%s15 + $0x1c] sm:$0xf]
        %v1480 = vld [vmem:[%s17] sm:$0x1]
        %v1482 = vperm.slane %v1480, 0
        %v1492 = vunpack.c.l.b16 %v1472
        %v1493 = vunpack.c.l.b16 %v1473
        %v1494 = vunpack.c.l.b16 %v1474
        %v1495 = vunpack.c.l.b16 %v1475
        %v1496 = vunpack.c.l.b16 %v1476
        %v1497 = vunpack.c.l.b16 %v1477
        %v1498 = vunpack.c.l.b16 %v1478
        %v1499 = vunpack.c.l.b16 %v1479
        %v1500 = vpack.c.b16 %v1493, %v1492
        %v1501 = vpack.c.b16 %v1495, %v1494
        %v1502 = vpack.c.b16 %v1497, %v1496
        %v1503 = vpack.c.b16 %v1499, %v1498
        %1508 = vmatpush.bf16.msra.mxu0 0
        %1509 = vmatpush.bf16.msra.mxu0 0
        %1510 = vmatpush.bf16.msra.mxu0 0
        %1511 = vmatpush.bf16.msra.mxu0 0
        %1512 = vmatpush.bf16.msra.mxu0 %v1503
        %1513 = vmatpush.bf16.msra.mxu0 %v1502
        %1514 = vmatpush.bf16.msra.mxu0 %v1501
        %1515 = vmatpush.bf16.msra.mxu0 %v1500
        %1516 = vmatmul.bf16.gmra.mxu0 %v1457
        %v1517 = vpop.f32.mrf.mxu0
        %v1518 = vadd.f32 %v1482, %v1517
        %v1519 = vpop.f32.mrf.mxu0
        %1520 = vdwg.mxu0
        %v1521 = vld [vmem:[%s19] sm:$0xf]
        %v1522 = vld [vmem:[%s19 + $0x4] sm:$0xf]
        %v1523 = vld [vmem:[%s19 + $0x8] sm:$0xf]
        %v1524 = vld [vmem:[%s19 + $0xc] sm:$0xf]
        %v1525 = vld [vmem:[%s19 + $0x10] sm:$0xf]
        %v1526 = vld [vmem:[%s19 + $0x14] sm:$0xf]
        %v1527 = vld [vmem:[%s19 + $0x18] sm:$0xf]
        %v1528 = vld [vmem:[%s19 + $0x1c] sm:$0xf]
        %v1529 = vld [vmem:[%s21] sm:$0x1]
        %v1531 = vperm.slane %v1529, 0
        %v1541 = vunpack.c.l.b16 %v1521
        %v1542 = vunpack.c.l.b16 %v1522
        %v1543 = vunpack.c.l.b16 %v1523
        %v1544 = vunpack.c.l.b16 %v1524
        %v1545 = vunpack.c.l.b16 %v1525
        %v1546 = vunpack.c.l.b16 %v1526
        %v1547 = vunpack.c.l.b16 %v1527
        %v1548 = vunpack.c.l.b16 %v1528
        %v1549 = vpack.c.b16 %v1542, %v1541
        %v1550 = vpack.c.b16 %v1544, %v1543
        %v1551 = vpack.c.b16 %v1546, %v1545
        %v1552 = vpack.c.b16 %v1548, %v1547
        %1557 = vmatpush.bf16.msra.mxu0 0
        %1558 = vmatpush.bf16.msra.mxu0 0
        %1559 = vmatpush.bf16.msra.mxu0 0
        %1560 = vmatpush.bf16.msra.mxu0 0
        %1561 = vmatpush.bf16.msra.mxu0 %v1552
        %1562 = vmatpush.bf16.msra.mxu0 %v1551
        %1563 = vmatpush.bf16.msra.mxu0 %v1550
        %1564 = vmatpush.bf16.msra.mxu0 %v1549
        %1565 = vmatmul.bf16.gmra.mxu0 %v1457
        %v1566 = vpop.f32.mrf.mxu0
        %v1567 = vadd.f32 %v1531, %v1566
        %v1568 = vpop.f32.mrf.mxu0
        %1569 = vdwg.mxu0
        %vm1570 = vcmp.ge.s32.totalorder %v1377, 0
        %vm1571 = vcmp.lt.s32.totalorder %v1377, 16
        %vm1572 = vmand %vm1570, %vm1571
        %v1573 = vsel %vm1572, %v1469, 0.0
        %v1574 = vpack.c.bf16 %v1573, %v1573
        %v1575 = vsel %vm1572, %v1518, 0.0
        %v1576 = vpack.c.bf16 %v1575, %v1575
        %v1577 = vsel %vm1572, %v1567, 0.0
        %v1578 = vpack.c.bf16 %v1577, %v1577
        %v1580 = vsel %vm1455, %v1574, 0
        %v1583 = vsel %vm1455, %v1576, 0
        %1585 = vmatpush.bf16.xpose.msra.mxu0 0
        %1586 = vmatpush.bf16.xpose.msra.mxu0 0
        %1587 = vmatpush.bf16.xpose.msra.mxu0 0
        %1588 = vmatpush.bf16.xpose.msra.mxu0 0
        %1589 = vmatpush.bf16.xpose.msra.mxu0 0
        %1590 = vmatpush.bf16.xpose.msra.mxu0 0
        %1591 = vmatpush.bf16.xpose.msra.mxu0 0
        %1592 = vmatpush.bf16.xpose.msra.mxu0 %v1583
        %1593 = vmatmul.bf16.gmra.mxu0 %v1580
        %v1594 = vpop.f32.mrf.mxu0
        %v1595 = vadd.f32 0.0, %v1594
        %v1596 = vpop.f32.mrf.mxu0
        %1597 = vdwg.mxu0
        %v1598 = vmul.f32 %v1595, 0.25
        %vm1599 = vcmask 36864
        %v1600 = vsel %vm1599, %v1598, -inf
        %1601 = vmax.xlane.f32.xlu0 %v1600
        %v1602 = vpop.xlane.xlu0 %1601
        %v1603 = vsub.f32 %v1598, %v1602
        %v1604 = vmul.f32 %v1603, 1.442695
        %v1605 = vpow.pop %v1604
        %v1606 = vsel %vm1599, %v1605, 0.0
        %1607 = vadd.xlane.f32.xlu0 %v1606
        %v1608 = vpop.xlane.xlu0 %1607
        %v1609 = vrcp.pop %v1608
        %v1610 = vmul.f32 %v1605, %v1609
        %v1611 = vpack.c.bf16 %v1610, %v1610
        %vm1612 = vcmp.ge.s32.totalorder %v1377, 16
        %vm1613 = vcmp.lt.s32.totalorder %v1377, 32
        %vm1614 = vmand %vm1612, %vm1613
        %v1615 = vsel %vm1614, %v1469, 0.0
        %v1616 = vpack.c.bf16 %v1615, %v1615
        %v1617 = vsel %vm1614, %v1518, 0.0
        %v1618 = vpack.c.bf16 %v1617, %v1617
        %v1619 = vsel %vm1614, %v1567, 0.0
        %v1620 = vpack.c.bf16 %v1619, %v1619
        %v1622 = vsel %vm1455, %v1616, 0
        %v1625 = vsel %vm1455, %v1618, 0
        %1627 = vmatpush.bf16.xpose.msra.mxu0 0
        %1628 = vmatpush.bf16.xpose.msra.mxu0 0
        %1629 = vmatpush.bf16.xpose.msra.mxu0 0
        %1630 = vmatpush.bf16.xpose.msra.mxu0 0
        %1631 = vmatpush.bf16.xpose.msra.mxu0 0
        %1632 = vmatpush.bf16.xpose.msra.mxu0 0
        %1633 = vmatpush.bf16.xpose.msra.mxu0 0
        %1634 = vmatpush.bf16.xpose.msra.mxu0 %v1625
        %1635 = vmatmul.bf16.gmra.mxu0 %v1622
        %v1636 = vpop.f32.mrf.mxu0
        %v1637 = vadd.f32 0.0, %v1636
        %v1638 = vpop.f32.mrf.mxu0
        %1639 = vdwg.mxu0
        %v1640 = vmul.f32 %v1637, 0.25
        %v1641 = vsel %vm1599, %v1640, -inf
        %1642 = vmax.xlane.f32.xlu0 %v1641
        %v1643 = vpop.xlane.xlu0 %1642
        %v1644 = vsub.f32 %v1640, %v1643
        %v1645 = vmul.f32 %v1644, 1.442695
        %v1646 = vpow.pop %v1645
        %v1647 = vsel %vm1599, %v1646, 0.0
        %1648 = vadd.xlane.f32.xlu0 %v1647
        %v1649 = vpop.xlane.xlu0 %1648
        %v1650 = vrcp.pop %v1649
        %v1651 = vmul.f32 %v1646, %v1650
        %v1652 = vpack.c.bf16 %v1651, %v1651
        %vm1653 = vcmask 39936
        %v1655 = vsel %vm1653, %v1652, 0
        %vm1657 = vcmask 1041408
        %vm1658 = vcmask 1042432
        %v1659 = vsel %vm1657, 4294967295, 65535
        %v1660 = vsel %vm1658, %v1659, 0
        %v1662 = vand.u32 %v1620, %v1660
        %1664 = vmatpush.bf16.msra.mxu0 0
        %1665 = vmatpush.bf16.msra.mxu0 0
        %1666 = vmatpush.bf16.msra.mxu0 0
        %1667 = vmatpush.bf16.msra.mxu0 0
        %1668 = vmatpush.bf16.msra.mxu0 0
        %1669 = vmatpush.bf16.msra.mxu0 0
        %1670 = vmatpush.bf16.msra.mxu0 0
        %1671 = vmatpush.bf16.msra.mxu0 %v1662
        %1672 = vmatmul.bf16.gmra.mxu0 %v1655
        %v1673 = vpop.f32.mrf.mxu0
        %v1674 = vadd.f32 0.0, %v1673
        %v1675 = vpop.f32.mrf.mxu0
        %1676 = vdwg.mxu0
        %v1678 = vsel %vm1653, %v1611, 0
        %v1681 = vand.u32 %v1578, %v1660
        %1683 = vmatpush.bf16.msra.mxu0 0
        %1684 = vmatpush.bf16.msra.mxu0 0
        %1685 = vmatpush.bf16.msra.mxu0 0
        %1686 = vmatpush.bf16.msra.mxu0 0
        %1687 = vmatpush.bf16.msra.mxu0 0
        %1688 = vmatpush.bf16.msra.mxu0 0
        %1689 = vmatpush.bf16.msra.mxu0 0
        %1690 = vmatpush.bf16.msra.mxu0 %v1681
        %1691 = vmatmul.bf16.gmra.mxu0 %v1678
        %v1692 = vpop.f32.mrf.mxu0
        %v1693 = vadd.f32 %v1674, %v1692
        %v1694 = vpop.f32.mrf.mxu0
        %1695 = vdwg.mxu0
        %vm1696 = vcmp.ge.s32.totalorder %v1377, 32
        %vm1697 = vcmp.lt.s32.totalorder %v1377, 48
        %vm1698 = vmand %vm1696, %vm1697
        %v1699 = vsel %vm1698, %v1469, 0.0
        %v1700 = vpack.c.bf16 %v1699, %v1699
        %v1701 = vsel %vm1698, %v1518, 0.0
        %v1702 = vpack.c.bf16 %v1701, %v1701
        %v1703 = vsel %vm1698, %v1567, 0.0
        %v1704 = vpack.c.bf16 %v1703, %v1703
        %v1706 = vsel %vm1455, %v1700, 0
        %v1709 = vsel %vm1455, %v1702, 0
        %1711 = vmatpush.bf16.xpose.msra.mxu0 0
        %1712 = vmatpush.bf16.xpose.msra.mxu0 0
        %1713 = vmatpush.bf16.xpose.msra.mxu0 0
        %1714 = vmatpush.bf16.xpose.msra.mxu0 0
        %1715 = vmatpush.bf16.xpose.msra.mxu0 0
        %1716 = vmatpush.bf16.xpose.msra.mxu0 0
        %1717 = vmatpush.bf16.xpose.msra.mxu0 0
        %1718 = vmatpush.bf16.xpose.msra.mxu0 %v1709
        %1719 = vmatmul.bf16.gmra.mxu0 %v1706
        %v1720 = vpop.f32.mrf.mxu0
        %v1721 = vadd.f32 0.0, %v1720
        %v1722 = vpop.f32.mrf.mxu0
        %1723 = vdwg.mxu0
        %v1724 = vmul.f32 %v1721, 0.25
        %v1725 = vsel %vm1599, %v1724, -inf
        %1726 = vmax.xlane.f32.xlu0 %v1725
        %v1727 = vpop.xlane.xlu0 %1726
        %v1728 = vsub.f32 %v1724, %v1727
        %v1729 = vmul.f32 %v1728, 1.442695
        %v1730 = vpow.pop %v1729
        %v1731 = vsel %vm1599, %v1730, 0.0
        %1732 = vadd.xlane.f32.xlu0 %v1731
        %v1733 = vpop.xlane.xlu0 %1732
        %v1734 = vrcp.pop %v1733
        %v1735 = vmul.f32 %v1730, %v1734
        %v1736 = vpack.c.bf16 %v1735, %v1735
        %v1738 = vsel %vm1653, %v1736, 0
        %v1741 = vand.u32 %v1704, %v1660
        %1743 = vmatpush.bf16.msra.mxu0 0
        %1744 = vmatpush.bf16.msra.mxu0 0
        %1745 = vmatpush.bf16.msra.mxu0 0
        %1746 = vmatpush.bf16.msra.mxu0 0
        %1747 = vmatpush.bf16.msra.mxu0 0
        %1748 = vmatpush.bf16.msra.mxu0 0
        %1749 = vmatpush.bf16.msra.mxu0 0
        %1750 = vmatpush.bf16.msra.mxu0 %v1741
        %1751 = vmatmul.bf16.gmra.mxu0 %v1738
        %v1752 = vpop.f32.mrf.mxu0
        %v1753 = vadd.f32 0.0, %v1752
        %v1754 = vpop.f32.mrf.mxu0
        %1755 = vdwg.mxu0
        %v1756 = vadd.f32 %v1693, %v1753
        %vm1757 = vcmp.ge.s32.totalorder %v1377, 48
        %vm1758 = vcmp.lt.s32.totalorder %v1377, 64
        %vm1759 = vmand %vm1757, %vm1758
        %v1760 = vsel %vm1759, %v1469, 0.0
        %v1761 = vpack.c.bf16 %v1760, %v1760
        %v1762 = vsel %vm1759, %v1518, 0.0
        %v1763 = vpack.c.bf16 %v1762, %v1762
        %v1764 = vsel %vm1759, %v1567, 0.0
        %v1765 = vpack.c.bf16 %v1764, %v1764
        %v1767 = vsel %vm1455, %v1761, 0
        %v1770 = vsel %vm1455, %v1763, 0
        %1772 = vmatpush.bf16.xpose.msra.mxu0 0
        %1773 = vmatpush.bf16.xpose.msra.mxu0 0
        %1774 = vmatpush.bf16.xpose.msra.mxu0 0
        %1775 = vmatpush.bf16.xpose.msra.mxu0 0
        %1776 = vmatpush.bf16.xpose.msra.mxu0 0
        %1777 = vmatpush.bf16.xpose.msra.mxu0 0
        %1778 = vmatpush.bf16.xpose.msra.mxu0 0
        %1779 = vmatpush.bf16.xpose.msra.mxu0 %v1770
        %1780 = vmatmul.bf16.gmra.mxu0 %v1767
        %v1781 = vpop.f32.mrf.mxu0
        %v1782 = vadd.f32 0.0, %v1781
        %v1783 = vpop.f32.mrf.mxu0
        %1784 = vdwg.mxu0
        %v1785 = vmul.f32 %v1782, 0.25
        %v1786 = vsel %vm1599, %v1785, -inf
        %1787 = vmax.xlane.f32.xlu0 %v1786
        %v1788 = vpop.xlane.xlu0 %1787
        %v1789 = vsub.f32 %v1785, %v1788
        %v1790 = vmul.f32 %v1789, 1.442695
        %v1791 = vpow.pop %v1790
        %v1792 = vsel %vm1599, %v1791, 0.0
        %1793 = vadd.xlane.f32.xlu0 %v1792
        %v1794 = vpop.xlane.xlu0 %1793
        %v1795 = vrcp.pop %v1794
        %v1796 = vmul.f32 %v1791, %v1795
        %v1797 = vpack.c.bf16 %v1796, %v1796
        %v1799 = vsel %vm1653, %v1797, 0
        %v1802 = vand.u32 %v1765, %v1660
        %1804 = vmatpush.bf16.msra.mxu0 0
        %1805 = vmatpush.bf16.msra.mxu0 0
        %1806 = vmatpush.bf16.msra.mxu0 0
        %1807 = vmatpush.bf16.msra.mxu0 0
        %1808 = vmatpush.bf16.msra.mxu0 0
        %1809 = vmatpush.bf16.msra.mxu0 0
        %1810 = vmatpush.bf16.msra.mxu0 0
        %1811 = vmatpush.bf16.msra.mxu0 %v1802
        %1812 = vmatmul.bf16.gmra.mxu0 %v1799
        %v1813 = vpop.f32.mrf.mxu0
        %v1814 = vadd.f32 0.0, %v1813
        %v1815 = vpop.f32.mrf.mxu0
        %1816 = vdwg.mxu0
        %v1817 = vadd.f32 %v1756, %v1814
        %v1818 = vpack.c.bf16 %v1817, %v1817
        %v1819 = vld [vmem:[%s23] sm:$0xf]
        %v1820 = vld [vmem:[%s23 + $0x4] sm:$0xf]
        %v1821 = vld [vmem:[%s23 + $0x8] sm:$0xf]
        %v1822 = vld [vmem:[%s23 + $0xc] sm:$0xf]
        %v1823 = vld [vmem:[%s23 + $0x10] sm:$0xf]
        %v1824 = vld [vmem:[%s23 + $0x14] sm:$0xf]
        %v1825 = vld [vmem:[%s23 + $0x18] sm:$0xf]
        %v1826 = vld [vmem:[%s23 + $0x1c] sm:$0xf]
        %v1827 = vld [vmem:[%s25] sm:$0x1]
        %v1829 = vperm.slane %v1827, 0
        %v1839 = vunpack.c.l.b16 %v1819
        %v1840 = vunpack.c.l.b16 %v1820
        %v1841 = vunpack.c.l.b16 %v1821
        %v1842 = vunpack.c.l.b16 %v1822
        %v1843 = vunpack.c.l.b16 %v1823
        %v1844 = vunpack.c.l.b16 %v1824
        %v1845 = vunpack.c.l.b16 %v1825
        %v1846 = vunpack.c.l.b16 %v1826
        %v1847 = vpack.c.b16 %v1840, %v1839
        %v1848 = vpack.c.b16 %v1842, %v1841
        %v1849 = vpack.c.b16 %v1844, %v1843
        %v1850 = vpack.c.b16 %v1846, %v1845
        %v1856 = vsel %vm1455, %v1818, 0
        %1858 = vmatpush.bf16.msra.mxu0 0
        %1859 = vmatpush.bf16.msra.mxu0 0
        %1860 = vmatpush.bf16.msra.mxu0 0
        %1861 = vmatpush.bf16.msra.mxu0 0
        %1862 = vmatpush.bf16.msra.mxu0 %v1850
        %1863 = vmatpush.bf16.msra.mxu0 %v1849
        %1864 = vmatpush.bf16.msra.mxu0 %v1848
        %1865 = vmatpush.bf16.msra.mxu0 %v1847
        %1866 = vmatmul.bf16.gmra.mxu0 %v1856
        %v1867 = vpop.f32.mrf.mxu0
        %v1868 = vadd.f32 %v1829, %v1867
        %v1869 = vpop.f32.mrf.mxu0
        %1870 = vdwg.mxu0
        %v1871 = vadd.f32 %v1373, %v1868
        %v1872 = vld [vmem:[%s27] sm:$0x1]
        %v1873 = vld [vmem:[%s29] sm:$0x1]
        %v1874 = vsel %vm1380, %v1871, 0.0
        %1875 = vadd.xlane.f32.xlu0 %v1874
        %v1876 = vpop.xlane.xlu0 %1875
        %v1877 = vmul.f32 %v1876, %v1390
        %v1878 = vsub.f32 %v1871, %v1877
        %v1879 = vmul.f32 %v1878, %v1878
        %v1880 = vsel %vm1380, %v1879, 0.0
        %1881 = vadd.xlane.f32.xlu0 %v1880
        %v1882 = vpop.xlane.xlu0 %1881
        %v1883 = vmul.f32 %v1882, %v1390
        %v1884 = vadd.f32 %v1883, 1e-06
        %v1885 = vrsqrt.pop %v1884
        %v1886 = vmul.f32 %v1885, %v1884
        %v1887 = vmul.f32 %v1886, %v1885
        %v1888 = vmul.f32 0.5, %v1887
        %v1889 = vsub.f32 1.5, %v1888
        %v1890 = vmul.f32 %v1885, %v1889
        %vm1891 = vweird.f32 %v1884
        %vm1892 = vweird.f32 %v1885
        %vm1893 = vmor %vm1891, %vm1892
        %v1894 = vsel %vm1893, %v1885, %v1890
        %v1895 = vmul.f32 %v1878, %v1894
        %v1897 = vperm.slane %v1872, 0
        %v1899 = vmul.f32 %v1895, %v1897
        %v1901 = vperm.slane %v1873, 0
        %v1903 = vadd.f32 %v1899, %v1901
        %v1904 = vpack.c.bf16 %v1903, %v1903
        %v1905 = vld [vmem:[%s31] sm:$0xf]
        %v1906 = vld [vmem:[%s31 + $0x4] sm:$0xf]
        %v1907 = vld [vmem:[%s31 + $0x8] sm:$0xf]
        %v1908 = vld [vmem:[%s31 + $0xc] sm:$0xf]
        %v1909 = vld [vmem:[%s31 + $0x10] sm:$0xf]
        %v1910 = vld [vmem:[%s31 + $0x14] sm:$0xf]
        %v1911 = vld [vmem:[%s31 + $0x18] sm:$0xf]
        %v1912 = vld [vmem:[%s31 + $0x1c] sm:$0xf]
        %v1913 = vld [vmem:[%s33] sm:$0x1]
        %v1915 = vperm.slane %v1913, 0
        %v1925 = vunpack.c.l.b16 %v1905
        %v1926 = vunpack.c.l.b16 %v1906
        %v1927 = vunpack.c.l.b16 %v1907
        %v1928 = vunpack.c.l.b16 %v1908
        %v1929 = vunpack.c.l.b16 %v1909
        %v1930 = vunpack.c.l.b16 %v1910
        %v1931 = vunpack.c.l.b16 %v1911
        %v1932 = vunpack.c.l.b16 %v1912
        %v1933 = vpack.c.b16 %v1926, %v1925
        %v1934 = vpack.c.b16 %v1928, %v1927
        %v1935 = vpack.c.b16 %v1930, %v1929
        %v1936 = vpack.c.b16 %v1932, %v1931
        %v1942 = vsel %vm1455, %v1904, 0
        %1944 = vmatpush.bf16.msra.mxu0 0
        %1945 = vmatpush.bf16.msra.mxu0 0
        %1946 = vmatpush.bf16.msra.mxu0 0
        %1947 = vmatpush.bf16.msra.mxu0 0
        %1948 = vmatpush.bf16.msra.mxu0 %v1936
        %1949 = vmatpush.bf16.msra.mxu0 %v1935
        %1950 = vmatpush.bf16.msra.mxu0 %v1934
        %1951 = vmatpush.bf16.msra.mxu0 %v1933
        %1952 = vmatmul.bf16.gmra.mxu0 %v1942
        %v1953 = vpop.f32.mrf.mxu0
        %v1954 = vadd.f32 %v1915, %v1953
        %v1955 = vpop.f32.mrf.mxu0
        %1956 = vdwg.mxu0
        %v1957 = vmul.f32 %v1954, 0.5
        %v1958 = vmul.f32 %v1954, 0.70710677
        %v1959 = vmul.f32 %v1958, %v1958
        %v1960 = vmin.f32 16.0, %v1959
        %v1961 = vmul.f32 %v1960, 2.1237322e-06
        %v1962 = vadd.f32 %v1961, 0.00028619796
        %v1963 = vmul.f32 %v1960, %v1962
        %v1964 = vadd.f32 %v1963, 0.0036580483
        %v1965 = vmul.f32 %v1960, %v1964
        %v1966 = vadd.f32 %v1965, 0.05243302
        %v1967 = vmul.f32 %v1960, %v1966
        %v1968 = vadd.f32 %v1967, 0.18741608
        %v1969 = vmul.f32 %v1960, %v1968
        %v1970 = vadd.f32 %v1969, 1.1283791
        %v1971 = vmul.f32 %v1958, %v1970
        %v1972 = vmul.f32 %v1960, 3.8918573e-05
        %v1973 = vadd.f32 %v1972, 0.001143296
        %v1974 = vmul.f32 %v1960, %v1973
        %v1975 = vadd.f32 %v1974, 0.014752088
        %v1976 = vmul.f32 %v1960, %v1975
        %v1977 = vadd.f32 %v1976, 0.112945676
        %v1978 = vmul.f32 %v1960, %v1977
        %v1979 = vadd.f32 %v1978, 0.4994258
        %v1980 = vmul.f32 %v1960, %v1979
        %v1981 = vadd.f32 %v1980, 1.0
        %v1982 = vrcp.pop %v1981
        %v1983 = vmul.f32 %v1981, %v1982
        %v1984 = vsub.f32 1.0, %v1983
        %v1985 = vmul.f32 %v1982, %v1984
        %v1986 = vadd.f32 %v1982, %v1985
        %vm1987 = vweird.f32 %v1981
        %vm1988 = vweird.f32 %v1982
        %vm1989 = vmor %vm1987, %vm1988
        %v1990 = vsel %vm1989, %v1982, %v1986
        %v1991 = vand.u32 2147483647, %v1981
        %vm1992 = vcmp.eq.f32.partialorder %v1991, 8.507059e+37
        %v1993 = vand.u32 %v1981, 2147483648
        %v1994 = vor.u32 1.1754944e-38, %v1993
        %v1995 = vsel %vm1992, %v1994, %v1990
        %v1996 = vmul.f32 %v1971, %v1995
        %v1997 = vmin.f32 %v1996, 1.0
        %v1998 = vmax.f32 %v1997, -1.0
        %v1999 = vadd.f32 %v1998, 1.0
        %v2000 = vmul.f32 %v1957, %v1999
        %v2001 = vpack.c.bf16 %v2000, %v2000
        %v2002 = vld [vmem:[%s35] sm:$0xf]
        %v2003 = vld [vmem:[%s35 + $0x4] sm:$0xf]
        %v2004 = vld [vmem:[%s35 + $0x8] sm:$0xf]
        %v2005 = vld [vmem:[%s35 + $0xc] sm:$0xf]
        %v2006 = vld [vmem:[%s35 + $0x10] sm:$0xf]
        %v2007 = vld [vmem:[%s35 + $0x14] sm:$0xf]
        %v2008 = vld [vmem:[%s35 + $0x18] sm:$0xf]
        %v2009 = vld [vmem:[%s35 + $0x1c] sm:$0xf]
        %v2010 = vld [vmem:[%s35 + $0x20] sm:$0xf]
        %v2011 = vld [vmem:[%s35 + $0x24] sm:$0xf]
        %v2012 = vld [vmem:[%s35 + $0x28] sm:$0xf]
        %v2013 = vld [vmem:[%s35 + $0x2c] sm:$0xf]
        %v2014 = vld [vmem:[%s35 + $0x30] sm:$0xf]
        %v2015 = vld [vmem:[%s35 + $0x34] sm:$0xf]
        %v2016 = vld [vmem:[%s35 + $0x38] sm:$0xf]
        %v2017 = vld [vmem:[%s35 + $0x3c] sm:$0xf]
        %v2018 = vld [vmem:[%s37] sm:$0x1]
        %v2020 = vperm.slane %v2018, 0
        %v2038 = vunpack.c.l.b16 %v2002
        %v2039 = vunpack.c.l.b16 %v2003
        %v2040 = vunpack.c.l.b16 %v2004
        %v2041 = vunpack.c.l.b16 %v2005
        %v2042 = vunpack.c.l.b16 %v2006
        %v2043 = vunpack.c.l.b16 %v2007
        %v2044 = vunpack.c.l.b16 %v2008
        %v2045 = vunpack.c.l.b16 %v2009
        %v2046 = vunpack.c.l.b16 %v2010
        %v2047 = vunpack.c.l.b16 %v2011
        %v2048 = vunpack.c.l.b16 %v2012
        %v2049 = vunpack.c.l.b16 %v2013
        %v2050 = vunpack.c.l.b16 %v2014
        %v2051 = vunpack.c.l.b16 %v2015
        %v2052 = vunpack.c.l.b16 %v2016
        %v2053 = vunpack.c.l.b16 %v2017
        %v2054 = vpack.c.b16 %v2039, %v2038
        %v2055 = vpack.c.b16 %v2041, %v2040
        %v2056 = vpack.c.b16 %v2043, %v2042
        %v2057 = vpack.c.b16 %v2045, %v2044
        %v2058 = vpack.c.b16 %v2047, %v2046
        %v2059 = vpack.c.b16 %v2049, %v2048
        %v2060 = vpack.c.b16 %v2051, %v2050
        %v2061 = vpack.c.b16 %v2053, %v2052
        %2070 = vmatpush.bf16.msra.mxu0 %v2061
        %2071 = vmatpush.bf16.msra.mxu0 %v2060
        %2072 = vmatpush.bf16.msra.mxu0 %v2059
        %2073 = vmatpush.bf16.msra.mxu0 %v2058
        %2074 = vmatpush.bf16.msra.mxu0 %v2057
        %2075 = vmatpush.bf16.msra.mxu0 %v2056
        %2076 = vmatpush.bf16.msra.mxu0 %v2055
        %2077 = vmatpush.bf16.msra.mxu0 %v2054
        %2078 = vmatmul.bf16.gmra.mxu0 %v2001
        %v2079 = vpop.f32.mrf.mxu0
        %v2080 = vadd.f32 %v2020, %v2079
        %v2081 = vpop.f32.mrf.mxu0
        %2082 = vdwg.mxu0
        %v2083 = vadd.f32 %v1871, %v2080
        %s2084 = scalar_lea.vmem %s7, 1
        %v2085 = vld [vmem:[%s2084] sm:$0x1]
        %s2086 = scalar_lea.vmem %s9, 1
        %v2087 = vld [vmem:[%s2086] sm:$0x1]
        %v2088 = vsel %vm1380, %v2083, 0.0
        %2089 = vadd.xlane.f32.xlu0 %v2088
        %v2090 = vpop.xlane.xlu0 %2089
        %v2091 = vmul.f32 %v2090, %v1390
        %v2092 = vsub.f32 %v2083, %v2091
        %v2093 = vmul.f32 %v2092, %v2092
        %v2094 = vsel %vm1380, %v2093, 0.0
        %2095 = vadd.xlane.f32.xlu0 %v2094
        %v2096 = vpop.xlane.xlu0 %2095
        %v2097 = vmul.f32 %v2096, %v1390
        %v2098 = vadd.f32 %v2097, 1e-06
        %v2099 = vrsqrt.pop %v2098
        %v2100 = vmul.f32 %v2099, %v2098
        %v2101 = vmul.f32 %v2100, %v2099
        %v2102 = vmul.f32 0.5, %v2101
        %v2103 = vsub.f32 1.5, %v2102
        %v2104 = vmul.f32 %v2099, %v2103
        %vm2105 = vweird.f32 %v2098
        %vm2106 = vweird.f32 %v2099
        %vm2107 = vmor %vm2105, %vm2106
        %v2108 = vsel %vm2107, %v2099, %v2104
        %v2109 = vmul.f32 %v2092, %v2108
        %v2111 = vperm.slane %v2085, 0
        %v2113 = vmul.f32 %v2109, %v2111
        %v2115 = vperm.slane %v2087, 0
        %v2117 = vadd.f32 %v2113, %v2115
        %v2118 = vpack.c.bf16 %v2117, %v2117
        %s2119 = scalar_lea.vmem %s11, 32
        %v2120 = vld [vmem:[%s2119] sm:$0xf]
        %v2121 = vld [vmem:[%s2119 + $0x4] sm:$0xf]
        %v2122 = vld [vmem:[%s2119 + $0x8] sm:$0xf]
        %v2123 = vld [vmem:[%s2119 + $0xc] sm:$0xf]
        %v2124 = vld [vmem:[%s2119 + $0x10] sm:$0xf]
        %v2125 = vld [vmem:[%s2119 + $0x14] sm:$0xf]
        %v2126 = vld [vmem:[%s2119 + $0x18] sm:$0xf]
        %v2127 = vld [vmem:[%s2119 + $0x1c] sm:$0xf]
        %s2128 = scalar_lea.vmem %s13, 1
        %v2129 = vld [vmem:[%s2128] sm:$0x1]
        %v2131 = vperm.slane %v2129, 0
        %v2141 = vunpack.c.l.b16 %v2120
        %v2142 = vunpack.c.l.b16 %v2121
        %v2143 = vunpack.c.l.b16 %v2122
        %v2144 = vunpack.c.l.b16 %v2123
        %v2145 = vunpack.c.l.b16 %v2124
        %v2146 = vunpack.c.l.b16 %v2125
        %v2147 = vunpack.c.l.b16 %v2126
        %v2148 = vunpack.c.l.b16 %v2127
        %v2149 = vpack.c.b16 %v2142, %v2141
        %v2150 = vpack.c.b16 %v2144, %v2143
        %v2151 = vpack.c.b16 %v2146, %v2145
        %v2152 = vpack.c.b16 %v2148, %v2147
        %v2158 = vsel %vm1455, %v2118, 0
        %2160 = vmatpush.bf16.msra.mxu0 0
        %2161 = vmatpush.bf16.msra.mxu0 0
        %2162 = vmatpush.bf16.msra.mxu0 0
        %2163 = vmatpush.bf16.msra.mxu0 0
        %2164 = vmatpush.bf16.msra.mxu0 %v2152
        %2165 = vmatpush.bf16.msra.mxu0 %v2151
        %2166 = vmatpush.bf16.msra.mxu0 %v2150
        %2167 = vmatpush.bf16.msra.mxu0 %v2149
        %2168 = vmatmul.bf16.gmra.mxu0 %v2158
        %v2169 = vpop.f32.mrf.mxu0
        %v2170 = vadd.f32 %v2131, %v2169
        %v2171 = vpop.f32.mrf.mxu0
        %2172 = vdwg.mxu0
        %s2173 = scalar_lea.vmem %s15, 32
        %v2174 = vld [vmem:[%s2173] sm:$0xf]
        %v2175 = vld [vmem:[%s2173 + $0x4] sm:$0xf]
        %v2176 = vld [vmem:[%s2173 + $0x8] sm:$0xf]
        %v2177 = vld [vmem:[%s2173 + $0xc] sm:$0xf]
        %v2178 = vld [vmem:[%s2173 + $0x10] sm:$0xf]
        %v2179 = vld [vmem:[%s2173 + $0x14] sm:$0xf]
        %v2180 = vld [vmem:[%s2173 + $0x18] sm:$0xf]
        %v2181 = vld [vmem:[%s2173 + $0x1c] sm:$0xf]
        %s2182 = scalar_lea.vmem %s17, 1
        %v2183 = vld [vmem:[%s2182] sm:$0x1]
        %v2185 = vperm.slane %v2183, 0
        %v2195 = vunpack.c.l.b16 %v2174
        %v2196 = vunpack.c.l.b16 %v2175
        %v2197 = vunpack.c.l.b16 %v2176
        %v2198 = vunpack.c.l.b16 %v2177
        %v2199 = vunpack.c.l.b16 %v2178
        %v2200 = vunpack.c.l.b16 %v2179
        %v2201 = vunpack.c.l.b16 %v2180
        %v2202 = vunpack.c.l.b16 %v2181
        %v2203 = vpack.c.b16 %v2196, %v2195
        %v2204 = vpack.c.b16 %v2198, %v2197
        %v2205 = vpack.c.b16 %v2200, %v2199
        %v2206 = vpack.c.b16 %v2202, %v2201
        %2211 = vmatpush.bf16.msra.mxu0 0
        %2212 = vmatpush.bf16.msra.mxu0 0
        %2213 = vmatpush.bf16.msra.mxu0 0
        %2214 = vmatpush.bf16.msra.mxu0 0
        %2215 = vmatpush.bf16.msra.mxu0 %v2206
        %2216 = vmatpush.bf16.msra.mxu0 %v2205
        %2217 = vmatpush.bf16.msra.mxu0 %v2204
        %2218 = vmatpush.bf16.msra.mxu0 %v2203
        %2219 = vmatmul.bf16.gmra.mxu0 %v2158
        %v2220 = vpop.f32.mrf.mxu0
        %v2221 = vadd.f32 %v2185, %v2220
        %v2222 = vpop.f32.mrf.mxu0
        %2223 = vdwg.mxu0
        %s2224 = scalar_lea.vmem %s19, 32
        %v2225 = vld [vmem:[%s2224] sm:$0xf]
        %v2226 = vld [vmem:[%s2224 + $0x4] sm:$0xf]
        %v2227 = vld [vmem:[%s2224 + $0x8] sm:$0xf]
        %v2228 = vld [vmem:[%s2224 + $0xc] sm:$0xf]
        %v2229 = vld [vmem:[%s2224 + $0x10] sm:$0xf]
        %v2230 = vld [vmem:[%s2224 + $0x14] sm:$0xf]
        %v2231 = vld [vmem:[%s2224 + $0x18] sm:$0xf]
        %v2232 = vld [vmem:[%s2224 + $0x1c] sm:$0xf]
        %s2233 = scalar_lea.vmem %s21, 1
        %v2234 = vld [vmem:[%s2233] sm:$0x1]
        %v2236 = vperm.slane %v2234, 0
        %v2246 = vunpack.c.l.b16 %v2225
        %v2247 = vunpack.c.l.b16 %v2226
        %v2248 = vunpack.c.l.b16 %v2227
        %v2249 = vunpack.c.l.b16 %v2228
        %v2250 = vunpack.c.l.b16 %v2229
        %v2251 = vunpack.c.l.b16 %v2230
        %v2252 = vunpack.c.l.b16 %v2231
        %v2253 = vunpack.c.l.b16 %v2232
        %v2254 = vpack.c.b16 %v2247, %v2246
        %v2255 = vpack.c.b16 %v2249, %v2248
        %v2256 = vpack.c.b16 %v2251, %v2250
        %v2257 = vpack.c.b16 %v2253, %v2252
        %2262 = vmatpush.bf16.msra.mxu0 0
        %2263 = vmatpush.bf16.msra.mxu0 0
        %2264 = vmatpush.bf16.msra.mxu0 0
        %2265 = vmatpush.bf16.msra.mxu0 0
        %2266 = vmatpush.bf16.msra.mxu0 %v2257
        %2267 = vmatpush.bf16.msra.mxu0 %v2256
        %2268 = vmatpush.bf16.msra.mxu0 %v2255
        %2269 = vmatpush.bf16.msra.mxu0 %v2254
        %2270 = vmatmul.bf16.gmra.mxu0 %v2158
        %v2271 = vpop.f32.mrf.mxu0
        %v2272 = vadd.f32 %v2236, %v2271
        %v2273 = vpop.f32.mrf.mxu0
        %2274 = vdwg.mxu0
        %v2275 = vsel %vm1572, %v2170, 0.0
        %v2276 = vpack.c.bf16 %v2275, %v2275
        %v2277 = vsel %vm1572, %v2221, 0.0
        %v2278 = vpack.c.bf16 %v2277, %v2277
        %v2279 = vsel %vm1572, %v2272, 0.0
        %v2280 = vpack.c.bf16 %v2279, %v2279
        %v2282 = vsel %vm1455, %v2276, 0
        %v2285 = vsel %vm1455, %v2278, 0
        %2287 = vmatpush.bf16.xpose.msra.mxu0 0
        %2288 = vmatpush.bf16.xpose.msra.mxu0 0
        %2289 = vmatpush.bf16.xpose.msra.mxu0 0
        %2290 = vmatpush.bf16.xpose.msra.mxu0 0
        %2291 = vmatpush.bf16.xpose.msra.mxu0 0
        %2292 = vmatpush.bf16.xpose.msra.mxu0 0
        %2293 = vmatpush.bf16.xpose.msra.mxu0 0
        %2294 = vmatpush.bf16.xpose.msra.mxu0 %v2285
        %2295 = vmatmul.bf16.gmra.mxu0 %v2282
        %v2296 = vpop.f32.mrf.mxu0
        %v2297 = vadd.f32 0.0, %v2296
        %v2298 = vpop.f32.mrf.mxu0
        %2299 = vdwg.mxu0
        %v2300 = vmul.f32 %v2297, 0.25
        %v2301 = vsel %vm1599, %v2300, -inf
        %2302 = vmax.xlane.f32.xlu0 %v2301
        %v2303 = vpop.xlane.xlu0 %2302
        %v2304 = vsub.f32 %v2300, %v2303
        %v2305 = vmul.f32 %v2304, 1.442695
        %v2306 = vpow.pop %v2305
        %v2307 = vsel %vm1599, %v2306, 0.0
        %2308 = vadd.xlane.f32.xlu0 %v2307
        %v2309 = vpop.xlane.xlu0 %2308
        %v2310 = vrcp.pop %v2309
        %v2311 = vmul.f32 %v2306, %v2310
        %v2312 = vpack.c.bf16 %v2311, %v2311
        %v2313 = vsel %vm1614, %v2170, 0.0
        %v2314 = vpack.c.bf16 %v2313, %v2313
        %v2315 = vsel %vm1614, %v2221, 0.0
        %v2316 = vpack.c.bf16 %v2315, %v2315
        %v2317 = vsel %vm1614, %v2272, 0.0
        %v2318 = vpack.c.bf16 %v2317, %v2317
        %v2320 = vsel %vm1455, %v2314, 0
        %v2323 = vsel %vm1455, %v2316, 0
        %2325 = vmatpush.bf16.xpose.msra.mxu0 0
        %2326 = vmatpush.bf16.xpose.msra.mxu0 0
        %2327 = vmatpush.bf16.xpose.msra.mxu0 0
        %2328 = vmatpush.bf16.xpose.msra.mxu0 0
        %2329 = vmatpush.bf16.xpose.msra.mxu0 0
        %2330 = vmatpush.bf16.xpose.msra.mxu0 0
        %2331 = vmatpush.bf16.xpose.msra.mxu0 0
        %2332 = vmatpush.bf16.xpose.msra.mxu0 %v2323
        %2333 = vmatmul.bf16.gmra.mxu0 %v2320
        %v2334 = vpop.f32.mrf.mxu0
        %v2335 = vadd.f32 0.0, %v2334
        %v2336 = vpop.f32.mrf.mxu0
        %2337 = vdwg.mxu0
        %v2338 = vmul.f32 %v2335, 0.25
        %v2339 = vsel %vm1599, %v2338, -inf
        %2340 = vmax.xlane.f32.xlu0 %v2339
        %v2341 = vpop.xlane.xlu0 %2340
        %v2342 = vsub.f32 %v2338, %v2341
        %v2343 = vmul.f32 %v2342, 1.442695
        %v2344 = vpow.pop %v2343
        %v2345 = vsel %vm1599, %v2344, 0.0
        %2346 = vadd.xlane.f32.xlu0 %v2345
        %v2347 = vpop.xlane.xlu0 %2346
        %v2348 = vrcp.pop %v2347
        %v2349 = vmul.f32 %v2344, %v2348
        %v2350 = vpack.c.bf16 %v2349, %v2349
        %v2352 = vsel %vm1653, %v2350, 0
        %v2355 = vand.u32 %v2318, %v1660
        %2357 = vmatpush.bf16.msra.mxu0 0
        %2358 = vmatpush.bf16.msra.mxu0 0
        %2359 = vmatpush.bf16.msra.mxu0 0
        %2360 = vmatpush.bf16.msra.mxu0 0
        %2361 = vmatpush.bf16.msra.mxu0 0
        %2362 = vmatpush.bf16.msra.mxu0 0
        %2363 = vmatpush.bf16.msra.mxu0 0
        %2364 = vmatpush.bf16.msra.mxu0 %v2355
        %2365 = vmatmul.bf16.gmra.mxu0 %v2352
        %v2366 = vpop.f32.mrf.mxu0
        %v2367 = vadd.f32 0.0, %v2366
        %v2368 = vpop.f32.mrf.mxu0
        %2369 = vdwg.mxu0
        %v2371 = vsel %vm1653, %v2312, 0
        %v2374 = vand.u32 %v2280, %v1660
        %2376 = vmatpush.bf16.msra.mxu0 0
        %2377 = vmatpush.bf16.msra.mxu0 0
        %2378 = vmatpush.bf16.msra.mxu0 0
        %2379 = vmatpush.bf16.msra.mxu0 0
        %2380 = vmatpush.bf16.msra.mxu0 0
        %2381 = vmatpush.bf16.msra.mxu0 0
        %2382 = vmatpush.bf16.msra.mxu0 0
        %2383 = vmatpush.bf16.msra.mxu0 %v2374
        %2384 = vmatmul.bf16.gmra.mxu0 %v2371
        %v2385 = vpop.f32.mrf.mxu0
        %v2386 = vadd.f32 %v2367, %v2385
        %v2387 = vpop.f32.mrf.mxu0
        %2388 = vdwg.mxu0
        %v2389 = vsel %vm1698, %v2170, 0.0
        %v2390 = vpack.c.bf16 %v2389, %v2389
        %v2391 = vsel %vm1698, %v2221, 0.0
        %v2392 = vpack.c.bf16 %v2391, %v2391
        %v2393 = vsel %vm1698, %v2272, 0.0
        %v2394 = vpack.c.bf16 %v2393, %v2393
        %v2396 = vsel %vm1455, %v2390, 0
        %v2399 = vsel %vm1455, %v2392, 0
        %2401 = vmatpush.bf16.xpose.msra.mxu0 0
        %2402 = vmatpush.bf16.xpose.msra.mxu0 0
        %2403 = vmatpush.bf16.xpose.msra.mxu0 0
        %2404 = vmatpush.bf16.xpose.msra.mxu0 0
        %2405 = vmatpush.bf16.xpose.msra.mxu0 0
        %2406 = vmatpush.bf16.xpose.msra.mxu0 0
        %2407 = vmatpush.bf16.xpose.msra.mxu0 0
        %2408 = vmatpush.bf16.xpose.msra.mxu0 %v2399
        %2409 = vmatmul.bf16.gmra.mxu0 %v2396
        %v2410 = vpop.f32.mrf.mxu0
        %v2411 = vadd.f32 0.0, %v2410
        %v2412 = vpop.f32.mrf.mxu0
        %2413 = vdwg.mxu0
        %v2414 = vmul.f32 %v2411, 0.25
        %v2415 = vsel %vm1599, %v2414, -inf
        %2416 = vmax.xlane.f32.xlu0 %v2415
        %v2417 = vpop.xlane.xlu0 %2416
        %v2418 = vsub.f32 %v2414, %v2417
        %v2419 = vmul.f32 %v2418, 1.442695
        %v2420 = vpow.pop %v2419
        %v2421 = vsel %vm1599, %v2420, 0.0
        %2422 = vadd.xlane.f32.xlu0 %v2421
        %v2423 = vpop.xlane.xlu0 %2422
        %v2424 = vrcp.pop %v2423
        %v2425 = vmul.f32 %v2420, %v2424
        %v2426 = vpack.c.bf16 %v2425, %v2425
        %v2428 = vsel %vm1653, %v2426, 0
        %v2431 = vand.u32 %v2394, %v1660
        %2433 = vmatpush.bf16.msra.mxu0 0
        %2434 = vmatpush.bf16.msra.mxu0 0
        %2435 = vmatpush.bf16.msra.mxu0 0
        %2436 = vmatpush.bf16.msra.mxu0 0
        %2437 = vmatpush.bf16.msra.mxu0 0
        %2438 = vmatpush.bf16.msra.mxu0 0
        %2439 = vmatpush.bf16.msra.mxu0 0
        %2440 = vmatpush.bf16.msra.mxu0 %v2431
        %2441 = vmatmul.bf16.gmra.mxu0 %v2428
        %v2442 = vpop.f32.mrf.mxu0
        %v2443 = vadd.f32 0.0, %v2442
        %v2444 = vpop.f32.mrf.mxu0
        %2445 = vdwg.mxu0
        %v2446 = vadd.f32 %v2386, %v2443
        %v2447 = vsel %vm1759, %v2170, 0.0
        %v2448 = vpack.c.bf16 %v2447, %v2447
        %v2449 = vsel %vm1759, %v2221, 0.0
        %v2450 = vpack.c.bf16 %v2449, %v2449
        %v2451 = vsel %vm1759, %v2272, 0.0
        %v2452 = vpack.c.bf16 %v2451, %v2451
        %v2454 = vsel %vm1455, %v2448, 0
        %v2457 = vsel %vm1455, %v2450, 0
        %2459 = vmatpush.bf16.xpose.msra.mxu0 0
        %2460 = vmatpush.bf16.xpose.msra.mxu0 0
        %2461 = vmatpush.bf16.xpose.msra.mxu0 0
        %2462 = vmatpush.bf16.xpose.msra.mxu0 0
        %2463 = vmatpush.bf16.xpose.msra.mxu0 0
        %2464 = vmatpush.bf16.xpose.msra.mxu0 0
        %2465 = vmatpush.bf16.xpose.msra.mxu0 0
        %2466 = vmatpush.bf16.xpose.msra.mxu0 %v2457
        %2467 = vmatmul.bf16.gmra.mxu0 %v2454
        %v2468 = vpop.f32.mrf.mxu0
        %v2469 = vadd.f32 0.0, %v2468
        %v2470 = vpop.f32.mrf.mxu0
        %2471 = vdwg.mxu0
        %v2472 = vmul.f32 %v2469, 0.25
        %v2473 = vsel %vm1599, %v2472, -inf
        %2474 = vmax.xlane.f32.xlu0 %v2473
        %v2475 = vpop.xlane.xlu0 %2474
        %v2476 = vsub.f32 %v2472, %v2475
        %v2477 = vmul.f32 %v2476, 1.442695
        %v2478 = vpow.pop %v2477
        %v2479 = vsel %vm1599, %v2478, 0.0
        %2480 = vadd.xlane.f32.xlu0 %v2479
        %v2481 = vpop.xlane.xlu0 %2480
        %v2482 = vrcp.pop %v2481
        %v2483 = vmul.f32 %v2478, %v2482
        %v2484 = vpack.c.bf16 %v2483, %v2483
        %v2486 = vsel %vm1653, %v2484, 0
        %v2489 = vand.u32 %v2452, %v1660
        %2491 = vmatpush.bf16.msra.mxu0 0
        %2492 = vmatpush.bf16.msra.mxu0 0
        %2493 = vmatpush.bf16.msra.mxu0 0
        %2494 = vmatpush.bf16.msra.mxu0 0
        %2495 = vmatpush.bf16.msra.mxu0 0
        %2496 = vmatpush.bf16.msra.mxu0 0
        %2497 = vmatpush.bf16.msra.mxu0 0
        %2498 = vmatpush.bf16.msra.mxu0 %v2489
        %2499 = vmatmul.bf16.gmra.mxu0 %v2486
        %v2500 = vpop.f32.mrf.mxu0
        %v2501 = vadd.f32 0.0, %v2500
        %v2502 = vpop.f32.mrf.mxu0
        %2503 = vdwg.mxu0
        %v2504 = vadd.f32 %v2446, %v2501
        %v2505 = vpack.c.bf16 %v2504, %v2504
        %s2506 = scalar_lea.vmem %s23, 32
        %v2507 = vld [vmem:[%s2506] sm:$0xf]
        %v2508 = vld [vmem:[%s2506 + $0x4] sm:$0xf]
        %v2509 = vld [vmem:[%s2506 + $0x8] sm:$0xf]
        %v2510 = vld [vmem:[%s2506 + $0xc] sm:$0xf]
        %v2511 = vld [vmem:[%s2506 + $0x10] sm:$0xf]
        %v2512 = vld [vmem:[%s2506 + $0x14] sm:$0xf]
        %v2513 = vld [vmem:[%s2506 + $0x18] sm:$0xf]
        %v2514 = vld [vmem:[%s2506 + $0x1c] sm:$0xf]
        %s2515 = scalar_lea.vmem %s25, 1
        %v2516 = vld [vmem:[%s2515] sm:$0x1]
        %v2518 = vperm.slane %v2516, 0
        %v2528 = vunpack.c.l.b16 %v2507
        %v2529 = vunpack.c.l.b16 %v2508
        %v2530 = vunpack.c.l.b16 %v2509
        %v2531 = vunpack.c.l.b16 %v2510
        %v2532 = vunpack.c.l.b16 %v2511
        %v2533 = vunpack.c.l.b16 %v2512
        %v2534 = vunpack.c.l.b16 %v2513
        %v2535 = vunpack.c.l.b16 %v2514
        %v2536 = vpack.c.b16 %v2529, %v2528
        %v2537 = vpack.c.b16 %v2531, %v2530
        %v2538 = vpack.c.b16 %v2533, %v2532
        %v2539 = vpack.c.b16 %v2535, %v2534
        %v2545 = vsel %vm1455, %v2505, 0
        %2547 = vmatpush.bf16.msra.mxu0 0
        %2548 = vmatpush.bf16.msra.mxu0 0
        %2549 = vmatpush.bf16.msra.mxu0 0
        %2550 = vmatpush.bf16.msra.mxu0 0
        %2551 = vmatpush.bf16.msra.mxu0 %v2539
        %2552 = vmatpush.bf16.msra.mxu0 %v2538
        %2553 = vmatpush.bf16.msra.mxu0 %v2537
        %2554 = vmatpush.bf16.msra.mxu0 %v2536
        %2555 = vmatmul.bf16.gmra.mxu0 %v2545
        %v2556 = vpop.f32.mrf.mxu0
        %v2557 = vadd.f32 %v2518, %v2556
        %v2558 = vpop.f32.mrf.mxu0
        %2559 = vdwg.mxu0
        %v2560 = vadd.f32 %v2083, %v2557
        %s2561 = scalar_lea.vmem %s27, 1
        %v2562 = vld [vmem:[%s2561] sm:$0x1]
        %s2563 = scalar_lea.vmem %s29, 1
        %v2564 = vld [vmem:[%s2563] sm:$0x1]
        %v2565 = vsel %vm1380, %v2560, 0.0
        %2566 = vadd.xlane.f32.xlu0 %v2565
        %v2567 = vpop.xlane.xlu0 %2566
        %v2568 = vmul.f32 %v2567, %v1390
        %v2569 = vsub.f32 %v2560, %v2568
        %v2570 = vmul.f32 %v2569, %v2569
        %v2571 = vsel %vm1380, %v2570, 0.0
        %2572 = vadd.xlane.f32.xlu0 %v2571
        %v2573 = vpop.xlane.xlu0 %2572
        %v2574 = vmul.f32 %v2573, %v1390
        %v2575 = vadd.f32 %v2574, 1e-06
        %v2576 = vrsqrt.pop %v2575
        %v2577 = vmul.f32 %v2576, %v2575
        %v2578 = vmul.f32 %v2577, %v2576
        %v2579 = vmul.f32 0.5, %v2578
        %v2580 = vsub.f32 1.5, %v2579
        %v2581 = vmul.f32 %v2576, %v2580
        %vm2582 = vweird.f32 %v2575
        %vm2583 = vweird.f32 %v2576
        %vm2584 = vmor %vm2582, %vm2583
        %v2585 = vsel %vm2584, %v2576, %v2581
        %v2586 = vmul.f32 %v2569, %v2585
        %v2588 = vperm.slane %v2562, 0
        %v2590 = vmul.f32 %v2586, %v2588
        %v2592 = vperm.slane %v2564, 0
        %v2594 = vadd.f32 %v2590, %v2592
        %v2595 = vpack.c.bf16 %v2594, %v2594
        %s2596 = scalar_lea.vmem %s31, 32
        %v2597 = vld [vmem:[%s2596] sm:$0xf]
        %v2598 = vld [vmem:[%s2596 + $0x4] sm:$0xf]
        %v2599 = vld [vmem:[%s2596 + $0x8] sm:$0xf]
        %v2600 = vld [vmem:[%s2596 + $0xc] sm:$0xf]
        %v2601 = vld [vmem:[%s2596 + $0x10] sm:$0xf]
        %v2602 = vld [vmem:[%s2596 + $0x14] sm:$0xf]
        %v2603 = vld [vmem:[%s2596 + $0x18] sm:$0xf]
        %v2604 = vld [vmem:[%s2596 + $0x1c] sm:$0xf]
        %s2605 = scalar_lea.vmem %s33, 1
        %v2606 = vld [vmem:[%s2605] sm:$0x1]
        %v2608 = vperm.slane %v2606, 0
        %v2618 = vunpack.c.l.b16 %v2597
        %v2619 = vunpack.c.l.b16 %v2598
        %v2620 = vunpack.c.l.b16 %v2599
        %v2621 = vunpack.c.l.b16 %v2600
        %v2622 = vunpack.c.l.b16 %v2601
        %v2623 = vunpack.c.l.b16 %v2602
        %v2624 = vunpack.c.l.b16 %v2603
        %v2625 = vunpack.c.l.b16 %v2604
        %v2626 = vpack.c.b16 %v2619, %v2618
        %v2627 = vpack.c.b16 %v2621, %v2620
        %v2628 = vpack.c.b16 %v2623, %v2622
        %v2629 = vpack.c.b16 %v2625, %v2624
        %v2635 = vsel %vm1455, %v2595, 0
        %2637 = vmatpush.bf16.msra.mxu0 0
        %2638 = vmatpush.bf16.msra.mxu0 0
        %2639 = vmatpush.bf16.msra.mxu0 0
        %2640 = vmatpush.bf16.msra.mxu0 0
        %2641 = vmatpush.bf16.msra.mxu0 %v2629
        %2642 = vmatpush.bf16.msra.mxu0 %v2628
        %2643 = vmatpush.bf16.msra.mxu0 %v2627
        %2644 = vmatpush.bf16.msra.mxu0 %v2626
        %2645 = vmatmul.bf16.gmra.mxu0 %v2635
        %v2646 = vpop.f32.mrf.mxu0
        %v2647 = vadd.f32 %v2608, %v2646
        %v2648 = vpop.f32.mrf.mxu0
        %2649 = vdwg.mxu0
        %v2650 = vmul.f32 %v2647, 0.5
        %v2651 = vmul.f32 %v2647, 0.70710677
        %v2652 = vmul.f32 %v2651, %v2651
        %v2653 = vmin.f32 16.0, %v2652
        %v2654 = vmul.f32 %v2653, 2.1237322e-06
        %v2655 = vadd.f32 %v2654, 0.00028619796
        %v2656 = vmul.f32 %v2653, %v2655
        %v2657 = vadd.f32 %v2656, 0.0036580483
        %v2658 = vmul.f32 %v2653, %v2657
        %v2659 = vadd.f32 %v2658, 0.05243302
        %v2660 = vmul.f32 %v2653, %v2659
        %v2661 = vadd.f32 %v2660, 0.18741608
        %v2662 = vmul.f32 %v2653, %v2661
        %v2663 = vadd.f32 %v2662, 1.1283791
        %v2664 = vmul.f32 %v2651, %v2663
        %v2665 = vmul.f32 %v2653, 3.8918573e-05
        %v2666 = vadd.f32 %v2665, 0.001143296
        %v2667 = vmul.f32 %v2653, %v2666
        %v2668 = vadd.f32 %v2667, 0.014752088
        %v2669 = vmul.f32 %v2653, %v2668
        %v2670 = vadd.f32 %v2669, 0.112945676
        %v2671 = vmul.f32 %v2653, %v2670
        %v2672 = vadd.f32 %v2671, 0.4994258
        %v2673 = vmul.f32 %v2653, %v2672
        %v2674 = vadd.f32 %v2673, 1.0
        %v2675 = vrcp.pop %v2674
        %v2676 = vmul.f32 %v2674, %v2675
        %v2677 = vsub.f32 1.0, %v2676
        %v2678 = vmul.f32 %v2675, %v2677
        %v2679 = vadd.f32 %v2675, %v2678
        %vm2680 = vweird.f32 %v2674
        %vm2681 = vweird.f32 %v2675
        %vm2682 = vmor %vm2680, %vm2681
        %v2683 = vsel %vm2682, %v2675, %v2679
        %v2684 = vand.u32 2147483647, %v2674
        %vm2685 = vcmp.eq.f32.partialorder %v2684, 8.507059e+37
        %v2686 = vand.u32 %v2674, 2147483648
        %v2687 = vor.u32 1.1754944e-38, %v2686
        %v2688 = vsel %vm2685, %v2687, %v2683
        %v2689 = vmul.f32 %v2664, %v2688
        %v2690 = vmin.f32 %v2689, 1.0
        %v2691 = vmax.f32 %v2690, -1.0
        %v2692 = vadd.f32 %v2691, 1.0
        %v2693 = vmul.f32 %v2650, %v2692
        %v2694 = vpack.c.bf16 %v2693, %v2693
        %s2695 = scalar_lea.vmem %s35, 64
        %v2696 = vld [vmem:[%s2695] sm:$0xf]
        %v2697 = vld [vmem:[%s2695 + $0x4] sm:$0xf]
        %v2698 = vld [vmem:[%s2695 + $0x8] sm:$0xf]
        %v2699 = vld [vmem:[%s2695 + $0xc] sm:$0xf]
        %v2700 = vld [vmem:[%s2695 + $0x10] sm:$0xf]
        %v2701 = vld [vmem:[%s2695 + $0x14] sm:$0xf]
        %v2702 = vld [vmem:[%s2695 + $0x18] sm:$0xf]
        %v2703 = vld [vmem:[%s2695 + $0x1c] sm:$0xf]
        %v2704 = vld [vmem:[%s2695 + $0x20] sm:$0xf]
        %v2705 = vld [vmem:[%s2695 + $0x24] sm:$0xf]
        %v2706 = vld [vmem:[%s2695 + $0x28] sm:$0xf]
        %v2707 = vld [vmem:[%s2695 + $0x2c] sm:$0xf]
        %v2708 = vld [vmem:[%s2695 + $0x30] sm:$0xf]
        %v2709 = vld [vmem:[%s2695 + $0x34] sm:$0xf]
        %v2710 = vld [vmem:[%s2695 + $0x38] sm:$0xf]
        %v2711 = vld [vmem:[%s2695 + $0x3c] sm:$0xf]
        %s2712 = scalar_lea.vmem %s37, 1
        %v2713 = vld [vmem:[%s2712] sm:$0x1]
        %v2715 = vperm.slane %v2713, 0
        %v2733 = vunpack.c.l.b16 %v2696
        %v2734 = vunpack.c.l.b16 %v2697
        %v2735 = vunpack.c.l.b16 %v2698
        %v2736 = vunpack.c.l.b16 %v2699
        %v2737 = vunpack.c.l.b16 %v2700
        %v2738 = vunpack.c.l.b16 %v2701
        %v2739 = vunpack.c.l.b16 %v2702
        %v2740 = vunpack.c.l.b16 %v2703
        %v2741 = vunpack.c.l.b16 %v2704
        %v2742 = vunpack.c.l.b16 %v2705
        %v2743 = vunpack.c.l.b16 %v2706
        %v2744 = vunpack.c.l.b16 %v2707
        %v2745 = vunpack.c.l.b16 %v2708
        %v2746 = vunpack.c.l.b16 %v2709
        %v2747 = vunpack.c.l.b16 %v2710
        %v2748 = vunpack.c.l.b16 %v2711
        %v2749 = vpack.c.b16 %v2734, %v2733
        %v2750 = vpack.c.b16 %v2736, %v2735
        %v2751 = vpack.c.b16 %v2738, %v2737
        %v2752 = vpack.c.b16 %v2740, %v2739
        %v2753 = vpack.c.b16 %v2742, %v2741
        %v2754 = vpack.c.b16 %v2744, %v2743
        %v2755 = vpack.c.b16 %v2746, %v2745
        %v2756 = vpack.c.b16 %v2748, %v2747
        %2765 = vmatpush.bf16.msra.mxu0 %v2756
        %2766 = vmatpush.bf16.msra.mxu0 %v2755
        %2767 = vmatpush.bf16.msra.mxu0 %v2754
        %2768 = vmatpush.bf16.msra.mxu0 %v2753
        %2769 = vmatpush.bf16.msra.mxu0 %v2752
        %2770 = vmatpush.bf16.msra.mxu0 %v2751
        %2771 = vmatpush.bf16.msra.mxu0 %v2750
        %2772 = vmatpush.bf16.msra.mxu0 %v2749
        %2773 = vmatmul.bf16.gmra.mxu0 %v2694
        %v2774 = vpop.f32.mrf.mxu0
        %v2775 = vadd.f32 %v2715, %v2774
        %v2776 = vpop.f32.mrf.mxu0
        %2777 = vdwg.mxu0
        %v2778 = vadd.f32 %v2560, %v2775
        %v2779 = vld [vmem:[%s39] sm:$0x1]
        %v2780 = vld [vmem:[%s41] sm:$0x1]
        %v2781 = vsel %vm1380, %v2778, 0.0
        %2782 = vadd.xlane.f32.xlu0 %v2781
        %v2783 = vpop.xlane.xlu0 %2782
        %v2784 = vmul.f32 %v2783, %v1390
        %v2785 = vsub.f32 %v2778, %v2784
        %v2786 = vmul.f32 %v2785, %v2785
        %v2787 = vsel %vm1380, %v2786, 0.0
        %2788 = vadd.xlane.f32.xlu0 %v2787
        %v2789 = vpop.xlane.xlu0 %2788
        %v2790 = vmul.f32 %v2789, %v1390
        %v2791 = vadd.f32 %v2790, 1e-06
        %v2792 = vrsqrt.pop %v2791
        %v2793 = vmul.f32 %v2792, %v2791
        %v2794 = vmul.f32 %v2793, %v2792
        %v2795 = vmul.f32 0.5, %v2794
        %v2796 = vsub.f32 1.5, %v2795
        %v2797 = vmul.f32 %v2792, %v2796
        %vm2798 = vweird.f32 %v2791
        %vm2799 = vweird.f32 %v2792
        %vm2800 = vmor %vm2798, %vm2799
        %v2801 = vsel %vm2800, %v2792, %v2797
        %v2802 = vmul.f32 %v2785, %v2801
        %v2804 = vperm.slane %v2779, 0
        %v2806 = vmul.f32 %v2802, %v2804
        %v2808 = vperm.slane %v2780, 0
        %v2810 = vadd.f32 %v2806, %v2808
        %v2811 = vld [vmem:[%s43] sm:$0x1]
        %v2812 = vld [vmem:[%s45] sm:$0x1]
        %vm2813 = vcmask 516096
        %v2814 = vsel %vm2813, %v2810, 0.0
        %2815 = vadd.xlane.f32.xlu0 %v2814
        %v2816 = vpop.xlane.xlu0 %2815
        %v2817 = vmul.f32 %v2816, %v1390
        %v2818 = vsub.f32 %v2810, %v2817
        %v2819 = vmul.f32 %v2818, %v2818
        %v2820 = vsel %vm2813, %v2819, 0.0
        %2821 = vadd.xlane.f32.xlu0 %v2820
        %v2822 = vpop.xlane.xlu0 %2821
        %v2823 = vmul.f32 %v2822, %v1390
        %v2824 = vadd.f32 %v2823, 1e-05
        %v2825 = vrsqrt.pop %v2824
        %v2826 = vmul.f32 %v2825, %v2824
        %v2827 = vmul.f32 %v2826, %v2825
        %v2828 = vmul.f32 0.5, %v2827
        %v2829 = vsub.f32 1.5, %v2828
        %v2830 = vmul.f32 %v2825, %v2829
        %vm2831 = vweird.f32 %v2824
        %vm2832 = vweird.f32 %v2825
        %vm2833 = vmor %vm2831, %vm2832
        %v2834 = vsel %vm2833, %v2825, %v2830
        %v2835 = vmul.f32 %v2818, %v2834
        %v2836 = vmul.f32 %v2835, %v2811
        %v2837 = vadd.f32 %v2836, %v2812
        %v2838 = vpack.c.bf16 %v2837, %v2837
        %v2839 = vld [vmem:[%s47] sm:$0xf]
        %v2840 = vld [vmem:[%s47 + $0x4] sm:$0xf]
        %v2841 = vld [vmem:[%s47 + $0x8] sm:$0xf]
        %v2842 = vld [vmem:[%s47 + $0xc] sm:$0xf]
        %v2843 = vld [vmem:[%s47 + $0x10] sm:$0xf]
        %v2844 = vld [vmem:[%s47 + $0x14] sm:$0xf]
        %v2845 = vld [vmem:[%s47 + $0x18] sm:$0xf]
        %v2846 = vld [vmem:[%s47 + $0x1c] sm:$0xf]
        %v2847 = vld [vmem:[%s49] sm:$0x1]
        %v2856 = vunpack.c.l.b16 %v2839
        %v2857 = vunpack.c.l.b16 %v2840
        %v2858 = vunpack.c.l.b16 %v2841
        %v2859 = vunpack.c.l.b16 %v2842
        %v2860 = vunpack.c.l.b16 %v2843
        %v2861 = vunpack.c.l.b16 %v2844
        %v2862 = vunpack.c.l.b16 %v2845
        %v2863 = vunpack.c.l.b16 %v2846
        %v2864 = vpack.c.b16 %v2857, %v2856
        %v2865 = vpack.c.b16 %v2859, %v2858
        %v2866 = vpack.c.b16 %v2861, %v2860
        %v2867 = vpack.c.b16 %v2863, %v2862
        %v2873 = vsel %vm1455, %v2838, 0
        %2875 = vmatpush.bf16.msra.mxu0 0
        %2876 = vmatpush.bf16.msra.mxu0 0
        %2877 = vmatpush.bf16.msra.mxu0 0
        %2878 = vmatpush.bf16.msra.mxu0 0
        %2879 = vmatpush.bf16.msra.mxu0 %v2867
        %2880 = vmatpush.bf16.msra.mxu0 %v2866
        %2881 = vmatpush.bf16.msra.mxu0 %v2865
        %2882 = vmatpush.bf16.msra.mxu0 %v2864
        %2883 = vmatmul.bf16.gmra.mxu0 %v2873
        %v2884 = vpop.f32.mrf.mxu0
        %v2885 = vadd.f32 %v2847, %v2884
        %v2886 = vpop.f32.mrf.mxu0
        %2887 = vdwg.mxu0
        %v2888 = vmul.f32 %v2885, 0.5
        %v2889 = vmul.f32 %v2885, 0.70710677
        %v2890 = vmul.f32 %v2889, %v2889
        %v2891 = vmin.f32 16.0, %v2890
        %v2892 = vmul.f32 %v2891, 2.1237322e-06
        %v2893 = vadd.f32 %v2892, 0.00028619796
        %v2894 = vmul.f32 %v2891, %v2893
        %v2895 = vadd.f32 %v2894, 0.0036580483
        %v2896 = vmul.f32 %v2891, %v2895
        %v2897 = vadd.f32 %v2896, 0.05243302
        %v2898 = vmul.f32 %v2891, %v2897
        %v2899 = vadd.f32 %v2898, 0.18741608
        %v2900 = vmul.f32 %v2891, %v2899
        %v2901 = vadd.f32 %v2900, 1.1283791
        %v2902 = vmul.f32 %v2889, %v2901
        %v2903 = vmul.f32 %v2891, 3.8918573e-05
        %v2904 = vadd.f32 %v2903, 0.001143296
        %v2905 = vmul.f32 %v2891, %v2904
        %v2906 = vadd.f32 %v2905, 0.014752088
        %v2907 = vmul.f32 %v2891, %v2906
        %v2908 = vadd.f32 %v2907, 0.112945676
        %v2909 = vmul.f32 %v2891, %v2908
        %v2910 = vadd.f32 %v2909, 0.4994258
        %v2911 = vmul.f32 %v2891, %v2910
        %v2912 = vadd.f32 %v2911, 1.0
        %v2913 = vrcp.pop %v2912
        %v2914 = vmul.f32 %v2912, %v2913
        %v2915 = vsub.f32 1.0, %v2914
        %v2916 = vmul.f32 %v2913, %v2915
        %v2917 = vadd.f32 %v2913, %v2916
        %vm2918 = vweird.f32 %v2912
        %vm2919 = vweird.f32 %v2913
        %vm2920 = vmor %vm2918, %vm2919
        %v2921 = vsel %vm2920, %v2913, %v2917
        %v2922 = vand.u32 2147483647, %v2912
        %vm2923 = vcmp.eq.f32.partialorder %v2922, 8.507059e+37
        %v2924 = vand.u32 %v2912, 2147483648
        %v2925 = vor.u32 1.1754944e-38, %v2924
        %v2926 = vsel %vm2923, %v2925, %v2921
        %v2927 = vmul.f32 %v2902, %v2926
        %v2928 = vmin.f32 %v2927, 1.0
        %v2929 = vmax.f32 %v2928, -1.0
        %v2930 = vadd.f32 %v2929, 1.0
        %v2931 = vmul.f32 %v2888, %v2930
        %v2932 = vld [vmem:[%s51] sm:$0x1]
        %v2933 = vld [vmem:[%s53] sm:$0x1]
        %vm2934 = vcmask 1040384
        %v2935 = vsel %vm2934, %v2931, 0.0
        %2936 = vadd.xlane.f32.xlu0 %v2935
        %v2937 = vpop.xlane.xlu0 %2936
        %v2938 = vrcp.pop 128.0
        %v2939 = vmul.f32 128.0, %v2938
        %v2940 = vsub.f32 1.0, %v2939
        %v2941 = vmul.f32 %v2938, %v2940
        %v2942 = vadd.f32 %v2938, %v2941
        %vm2943 = vweird.f32 %v2938
        %v2944 = vsel %vm2943, %v2938, %v2942
        %v2945 = vmul.f32 %v2937, %v2944
        %v2946 = vsub.f32 %v2931, %v2945
        %v2947 = vmul.f32 %v2946, %v2946
        %v2948 = vsel %vm2934, %v2947, 0.0
        %2949 = vadd.xlane.f32.xlu0 %v2948
        %v2950 = vpop.xlane.xlu0 %2949
        %v2951 = vmul.f32 %v2950, %v2944
        %v2952 = vadd.f32 %v2951, 1e-05
        %v2953 = vrsqrt.pop %v2952
        %v2954 = vmul.f32 %v2953, %v2952
        %v2955 = vmul.f32 %v2954, %v2953
        %v2956 = vmul.f32 0.5, %v2955
        %v2957 = vsub.f32 1.5, %v2956
        %v2958 = vmul.f32 %v2953, %v2957
        %vm2959 = vweird.f32 %v2952
        %vm2960 = vweird.f32 %v2953
        %vm2961 = vmor %vm2959, %vm2960
        %v2962 = vsel %vm2961, %v2953, %v2958
        %v2963 = vmul.f32 %v2946, %v2962
        %v2964 = vmul.f32 %v2963, %v2932
        %v2965 = vadd.f32 %v2964, %v2933
        %v2966 = vpack.c.bf16 %v2965, %v2965
        %v2967 = vld [vmem:[%s55] sm:$0xf]
        %v2968 = vld [vmem:[%s55 + $0x4] sm:$0xf]
        %v2969 = vld [vmem:[%s55 + $0x8] sm:$0xf]
        %v2970 = vld [vmem:[%s55 + $0xc] sm:$0xf]
        %v2971 = vld [vmem:[%s55 + $0x10] sm:$0xf]
        %v2972 = vld [vmem:[%s55 + $0x14] sm:$0xf]
        %v2973 = vld [vmem:[%s55 + $0x18] sm:$0xf]
        %v2974 = vld [vmem:[%s55 + $0x1c] sm:$0xf]
        %v2975 = vld [vmem:[%s55 + $0x20] sm:$0xf]
        %v2976 = vld [vmem:[%s55 + $0x24] sm:$0xf]
        %v2977 = vld [vmem:[%s55 + $0x28] sm:$0xf]
        %v2978 = vld [vmem:[%s55 + $0x2c] sm:$0xf]
        %v2979 = vld [vmem:[%s55 + $0x30] sm:$0xf]
        %v2980 = vld [vmem:[%s55 + $0x34] sm:$0xf]
        %v2981 = vld [vmem:[%s55 + $0x38] sm:$0xf]
        %v2982 = vld [vmem:[%s55 + $0x3c] sm:$0xf]
        %v2983 = vld [vmem:[%s57] sm:$0x1]
        %v3000 = vunpack.c.l.b16 %v2967
        %v3001 = vunpack.c.l.b16 %v2968
        %v3002 = vunpack.c.l.b16 %v2969
        %v3003 = vunpack.c.l.b16 %v2970
        %v3004 = vunpack.c.l.b16 %v2971
        %v3005 = vunpack.c.l.b16 %v2972
        %v3006 = vunpack.c.l.b16 %v2973
        %v3007 = vunpack.c.l.b16 %v2974
        %v3008 = vunpack.c.l.b16 %v2975
        %v3009 = vunpack.c.l.b16 %v2976
        %v3010 = vunpack.c.l.b16 %v2977
        %v3011 = vunpack.c.l.b16 %v2978
        %v3012 = vunpack.c.l.b16 %v2979
        %v3013 = vunpack.c.l.b16 %v2980
        %v3014 = vunpack.c.l.b16 %v2981
        %v3015 = vunpack.c.l.b16 %v2982
        %v3016 = vpack.c.b16 %v3001, %v3000
        %v3017 = vpack.c.b16 %v3003, %v3002
        %v3018 = vpack.c.b16 %v3005, %v3004
        %v3019 = vpack.c.b16 %v3007, %v3006
        %v3020 = vpack.c.b16 %v3009, %v3008
        %v3021 = vpack.c.b16 %v3011, %v3010
        %v3022 = vpack.c.b16 %v3013, %v3012
        %v3023 = vpack.c.b16 %v3015, %v3014
        %3032 = vmatpush.bf16.msra.mxu0 %v3023
        %3033 = vmatpush.bf16.msra.mxu0 %v3022
        %3034 = vmatpush.bf16.msra.mxu0 %v3021
        %3035 = vmatpush.bf16.msra.mxu0 %v3020
        %3036 = vmatpush.bf16.msra.mxu0 %v3019
        %3037 = vmatpush.bf16.msra.mxu0 %v3018
        %3038 = vmatpush.bf16.msra.mxu0 %v3017
        %3039 = vmatpush.bf16.msra.mxu0 %v3016
        %3040 = vmatmul.bf16.gmra.mxu0 %v2966
        %v3041 = vpop.f32.mrf.mxu0
        %v3042 = vadd.f32 %v2983, %v3041
        %v3043 = vpop.f32.mrf.mxu0
        %3044 = vdwg.mxu0
        %3045 = vst [vmem:[%s894] sm:$0x1] %v3042
        %s3046 = sand.u32 %s695, 1
        %s3047 = scalar_lea.sflag [#allocation3], %s3046
        %s3048 = sand.u32 %s695, 1
        %s3049 = scalar_lea.vmem [#allocation2], %s3048
        // Predicated region
        $region137: #{model_forward.1} parent=135 // pred_check
          %p3050 = pneg %p705
        $region138: #{model_forward.1} parent=135 // pred_check_branch
          %3052 = sbr.rel (%p3050) target = $region140
        $region139: #{model_forward.1} parent=135 // pred_region
          %3054 = vsyncadd %s3047, 0
          %s3055 = scalar_lea.hbm %s59, %s73
          %s3057 = sshll.u32 %s3049, 4
          %s3058 = int_to_ptr.vmem [resolvable:$true] %s3057
          %s3059 = sshll.u32 %s3055, 4
          %s3060 = int_to_ptr.hbm [resolvable:$true] %s3059
          %3062 = dma.vmem_to_hbm [thread:$0]  %s3058, 16, %s3060, %s3047
        $region140: #{model_forward.1} parent=135 // pred_fallthru
          _
      $region136: #{model_forward.1} parent=5 // pred_fallthru
        _
      %p3063 = scmp.le.s32.totalorder 2, %s68
      // Predicated region
      $region141: #{model_forward.1} parent=5 // pred_check
        %p3064 = pneg %p3063
      $region142: #{model_forward.1} parent=5 // pred_check_branch
        %3066 = sbr.rel (%p3064) target = $region144
      $region143: #{model_forward.1} parent=5 // pred_region
        %s3067 = ssub.s32 %s68, 2
        // Predicated region
        $region145: #{model_forward.1} parent=143 // pred_check
          %p3068 = pneg %p711
        $region146: #{model_forward.1} parent=143 // pred_check_branch
          %3070 = sbr.rel (%p3068) target = $region148
        $region147: #{model_forward.1} parent=143 // pred_region
          %s3071 = sand.u32 %s696, 1
          %s3072 = scalar_lea.sflag [#allocation3], %s3071
          %s3073 = sand.u32 %s696, 1
          %s3074 = scalar_lea.vmem [#allocation2], %s3073
          %3076 = dma.done %s3072, 16
        $region148: #{model_forward.1} parent=143 // pred_fallthru
          _
      $region144: #{model_forward.1} parent=5 // pred_fallthru
        _
    $region6: #{model_forward.1} parent=1 // loop_footer
      %s72 = sadd.s32 1, %s68
    $region7: #{model_forward.1} parent=1 // loop_footer_branch
      %67 = sbr.rel target = $region3
    $region8: #{model_forward.1} parent=1 // loop_exit
      _
    %3077 = vsyncpa [#allocation3], 1
    %s3078 = scalar_lea.sflag [#allocation3], 1
    %3079 = vsyncpa %s3078, 1

</llo_original>
